<compile_context>
chip_gen: v7x
topology: tpu7x:2x2x1
jax: 0.10.0
libtpu: 0.0.40
codegen_flags: <defaults>
</compile_context>

<pallas_src>
import functools

import jax
import jax.numpy as jnp
from jax import lax
from jax.experimental import pallas as pl
from jax.experimental.pallas import tpu as pltpu


def _round_up(v, m):
    return (v + m - 1) // m * m


def _down_kernel(x_ref, w1_ref, w2_ref, g1_ref, b1_ref, g2_ref, b2_ref,
                 o_ref,
                 p1_ref, p2_ref, y1_ref, y2_ref,
                 s1_ref, ss1_ref, s2_ref, ss2_ref,
                 *, eps, hh, wh, nb):
    phase = pl.program_id(0)
    bi = pl.program_id(1)
    m = float(nb * hh * wh)          # BN sample count = N * H * W (per channel)

    @pl.when((phase == 0) & (bi == 0))
    def _init():
        # Zero the padded scratch tiles once: their borders provide the conv
        # "SAME" zero padding and are never written again.
        p1_ref[...] = jnp.zeros_like(p1_ref)
        p2_ref[...] = jnp.zeros_like(p2_ref)
        s1_ref[...] = jnp.zeros_like(s1_ref)
        ss1_ref[...] = jnp.zeros_like(ss1_ref)
        s2_ref[...] = jnp.zeros_like(s2_ref)
        ss2_ref[...] = jnp.zeros_like(ss2_ref)

    def im2col(src_ref):
        # 9 shifted windows of the zero-bordered scratch, concatenated along the
        # channel (lane) axis -> a single fat K = 9*C contraction for the MXU.
        taps = [src_ref[:, ky:ky + hh, kx:kx + wh, :]
                for ky in range(3) for kx in range(3)]
        pat = jnp.concatenate(taps, axis=-1)              # (1, hh, wh, 9*C) f32
        return pat.reshape(hh * wh, pat.shape[-1]).astype(jnp.bfloat16)

    def bn_scale_shift(s_ref, ss_ref, g_ref, bias_ref):
        # Fused BN: var = E[x^2] - mu^2, fold mean into the bias so the
        # normalize is a single FMA over the activations.
        mu = s_ref[...] * (1.0 / m)
        var = ss_ref[...] * (1.0 / m) - mu * mu
        scale = g_ref[...] * lax.rsqrt(var + eps)
        shift = bias_ref[...] - scale * mu
        return scale, shift

    @pl.when(phase == 0)
    def _pool_conv1():
        # 2x2 max-pool via strided reads of the streamed NHWC block.
        t00 = x_ref[:, pl.ds(0, hh, stride=2), pl.ds(0, wh, stride=2), :]
        t01 = x_ref[:, pl.ds(0, hh, stride=2), pl.ds(1, wh, stride=2), :]
        t10 = x_ref[:, pl.ds(1, hh, stride=2), pl.ds(0, wh, stride=2), :]
        t11 = x_ref[:, pl.ds(1, hh, stride=2), pl.ds(1, wh, stride=2), :]
        pooled = jnp.maximum(jnp.maximum(t00, t01), jnp.maximum(t10, t11))
        p1_ref[:, 1:hh + 1, 1:wh + 1, :] = pooled         # interior of padded tile

        acc1 = jnp.dot(im2col(p1_ref), w1_ref[...],
                       preferred_element_type=jnp.float32)    # (hh*wh, Cm) f32
        y1_ref[bi] = acc1
        s1_ref[...] += jnp.sum(acc1, axis=0, keepdims=True)
        ss1_ref[...] += jnp.sum(acc1 * acc1, axis=0, keepdims=True)

    @pl.when(phase == 1)
    def _bn1_relu_conv2():
        scale, shift = bn_scale_shift(s1_ref, ss1_ref, g1_ref, b1_ref)
        h1 = jnp.maximum(y1_ref[bi] * scale + shift, 0.0)     # (hh*wh, Cm) f32
        p2_ref[:, 1:hh + 1, 1:wh + 1, :] = h1.reshape(1, hh, wh, h1.shape[-1])

        acc2 = jnp.dot(im2col(p2_ref), w2_ref[...],
                       preferred_element_type=jnp.float32)    # (hh*wh, Co) f32
        y2_ref[bi] = acc2
        s2_ref[...] += jnp.sum(acc2, axis=0, keepdims=True)
        ss2_ref[...] += jnp.sum(acc2 * acc2, axis=0, keepdims=True)

    @pl.when(phase == 2)
    def _bn2_relu_out():
        scale, shift = bn_scale_shift(s2_ref, ss2_ref, g2_ref, b2_ref)
        out = jnp.maximum(y2_ref[bi] * scale + shift, 0.0)    # (hh*wh, Co) f32
        o_ref[...] = out.reshape(1, hh, wh, out.shape[-1])


def down_forward(x_nchw, w1, w2, g1, b1, g2, b2, eps=1e-5):
    """Forward of `Down(in_channels, out_channels)` for an NCHW input."""
    B, Cin, H, W = x_nchw.shape
    Hh, Wh = H // 2, W // 2
    Cmid = w1.shape[-1]
    Cout = w2.shape[-1]

    # Lane-dense channel padding (zeros).  Padded channels stay exactly zero
    # through pool / conv / BN (gamma & beta padded with 0), so real channels
    # are unchanged; the wrapper slices them back out at the end.
    Cp = _round_up(Cin, 128)
    Cm = _round_up(Cmid, 128)
    Co = _round_up(Cout, 128)

    x = jnp.transpose(x_nchw, (0, 2, 3, 1)).astype(jnp.float32)     # NHWC
    x = jnp.pad(x, ((0, 0), (0, 0), (0, 0), (0, Cp - Cin)))

    def prep_w(w, ci, cip, co, cop):
        w = jnp.pad(w.astype(jnp.float32),
                    ((0, 0), (0, 0), (0, cip - ci), (0, cop - co)))
        # (3, 3, cip, cop) -> (9*cip, cop); row order matches the in-kernel
        # im2col tap order (ky-major, then kx, then channel).  bf16 for the MXU.
        return w.reshape(9 * cip, cop).astype(jnp.bfloat16)

    def prep_p(p, c, cp):
        return jnp.pad(p.astype(jnp.float32), ((0, 0), (0, cp - c)))

    w1p = prep_w(w1, Cin, Cp, Cmid, Cm)
    w2p = prep_w(w2, Cmid, Cm, Cout, Co)
    g1p, b1p = prep_p(g1, Cmid, Cm), prep_p(b1, Cmid, Cm)
    g2p, b2p = prep_p(g2, Cout, Co), prep_p(b2, Cout, Co)

    kernel = functools.partial(_down_kernel, eps=float(eps), hh=Hh, wh=Wh, nb=B)

    out = pl.pallas_call(
        kernel,
        out_shape=jax.ShapeDtypeStruct((B, Hh, Wh, Co), jnp.float32),
        # (phase, batch): phase-major so all conv1 tiles (and hence the global
        # BN1 statistics) are finished before any BN1 consumer runs, etc.
        grid=(3, B),
        in_specs=[
            # x is only needed in phase 0; park the block afterwards so it is
            # not re-fetched every step of later phases.
            pl.BlockSpec((1, H, W, Cp),
                         lambda p, b: (jnp.where(p == 0, b, 0), 0, 0, 0)),
            pl.BlockSpec((9 * Cp, Cm), lambda p, b: (0, 0)),
            pl.BlockSpec((9 * Cm, Co), lambda p, b: (0, 0)),
            pl.BlockSpec((1, Cm), lambda p, b: (0, 0)),
            pl.BlockSpec((1, Cm), lambda p, b: (0, 0)),
            pl.BlockSpec((1, Co), lambda p, b: (0, 0)),
            pl.BlockSpec((1, Co), lambda p, b: (0, 0)),
        ],
        # Output blocks advance only during phase 2: each lane-dense block is
        # written once and written back exactly once.
        out_specs=pl.BlockSpec((1, Hh, Wh, Co),
                               lambda p, b: (jnp.where(p == 2, b, 0), 0, 0, 0)),
        scratch_shapes=[
            pltpu.VMEM((1, Hh + 2, Wh + 2, Cp), jnp.float32),  # zero-bordered pooled tile
            pltpu.VMEM((1, Hh + 2, Wh + 2, Cm), jnp.float32),  # zero-bordered h1 tile
            pltpu.VMEM((B, Hh * Wh, Cm), jnp.float32),         # conv1 raw outputs
            pltpu.VMEM((B, Hh * Wh, Co), jnp.float32),         # conv2 raw outputs
            pltpu.VMEM((1, Cm), jnp.float32),                  # BN1 sum
            pltpu.VMEM((1, Cm), jnp.float32),                  # BN1 sum of squares
            pltpu.VMEM((1, Co), jnp.float32),                  # BN2 sum
            pltpu.VMEM((1, Co), jnp.float32),                  # BN2 sum of squares
        ],
        compiler_params=pltpu.CompilerParams(
            # Both grid axes carry sequential dependencies (phase ordering and
            # cross-sample BN-stat accumulation in scratch) -> "arbitrary".
            # A megacore-parallel split would have to go over output channels
            # (BN-safe) rather than batch/rows.
            dimension_semantics=("arbitrary", "arbitrary"),
            vmem_limit_bytes=32 * 1024 * 1024),
    )(x, w1p, w2p, g1p, b1p, g2p, b2p)

    # NHWC -> NCHW, drop channel padding.
    return jnp.transpose(out[..., :Cout], (0, 3, 1, 2))


def _reference(x_nchw, w1, w2, g1, b1, g2, b2, eps=1e-5,
               match_kernel_precision=True):
    """Pure-JAX reference.  With match_kernel_precision=True the conv operands
    are bf16-rounded (f32 accumulation), exactly mirroring the kernel's
    mixed-precision policy; with False it is the exact f32 module forward."""
    def q(v):
        v = v.astype(jnp.float32)
        if match_kernel_precision:
            v = v.astype(jnp.bfloat16).astype(jnp.float32)
        return v

    x = jnp.transpose(x_nchw, (0, 2, 3, 1)).astype(jnp.float32)
    B, H, W, C = x.shape
    pooled = jnp.max(x.reshape(B, H // 2, 2, W // 2, 2, C), axis=(2, 4))

    def conv(h, w):
        return lax.conv_general_dilated(
            q(h), q(w), (1, 1), "SAME",
            dimension_numbers=("NHWC", "HWIO", "NHWC"))

    def bn_relu(h, g, b):
        mu = jnp.mean(h, axis=(0, 1, 2), keepdims=True)
        var = jnp.mean((h - mu) ** 2, axis=(0, 1, 2), keepdims=True)
        return jnp.maximum((h - mu) * g.reshape(1, 1, 1, -1) * lax.rsqrt(var + eps)
                           + b.reshape(1, 1, 1, -1), 0.0)

    h1 = bn_relu(conv(pooled, w1), g1, b1)
    h2 = bn_relu(conv(h1, w2), g2, b2)
    return jnp.transpose(h2, (0, 3, 1, 2))


if __name__ == "__main__":
    key = jax.random.PRNGKey(0)
    ks = jax.random.split(key, 7)

    B, Cin, H, W = 2, 4, 16, 16
    Cout = 8
    Cmid = Cout  # DoubleConv: mid_channels defaults to out_channels

    x = jax.random.normal(ks[0], (B, Cin, H, W), jnp.float32)
    # Deterministic synthetic parameters (shapes from the module __init__).
    w1 = jax.random.normal(ks[1], (3, 3, Cin, Cmid), jnp.float32) * 0.2
    w2 = jax.random.normal(ks[2], (3, 3, Cmid, Cout), jnp.float32) * 0.2
    g1 = 1.0 + 0.1 * jax.random.normal(ks[3], (1, Cmid), jnp.float32)
    b1 = 0.1 * jax.random.normal(ks[4], (1, Cmid), jnp.float32)
    g2 = 1.0 + 0.1 * jax.random.normal(ks[5], (1, Cout), jnp.float32)
    b2 = 0.1 * jax.random.normal(ks[6], (1, Cout), jnp.float32)

    out = jax.block_until_ready(down_forward(x, w1, w2, g1, b1, g2, b2))
    assert out.shape == (B, Cout, H // 2, W // 2), out.shape

    # Tight check against the reference that mirrors the kernel's mixed
    # precision (bf16 conv operands, f32 accumulation / BatchNorm).
    ref_mixed = jax.block_until_ready(
        _reference(x, w1, w2, g1, b1, g2, b2, match_kernel_precision=True))
    assert jnp.allclose(out, ref_mixed, atol=2e-3, rtol=2e-3), \
        f"max abs err vs mixed-precision ref {jnp.max(jnp.abs(out - ref_mixed))}"

    # Loose sanity check against the exact f32 module forward (difference is
    # only the bf16 rounding of conv operands).
    ref_f32 = jax.block_until_ready(
        _reference(x, w1, w2, g1, b1, g2, b2, match_kernel_precision=False))
    assert jnp.allclose(out, ref_f32, atol=1e-1, rtol=1e-1), \
        f"max abs err vs f32 ref {jnp.max(jnp.abs(out - ref_f32))}"

    # TODO(synk): BatchNorm running-stat buffer updates (training-time side
    # effects) are not modeled; only the forward output is reproduced.
    print("KERNEL_OK")
</pallas_src>

<mosaic_0001>
module attributes {stable_mosaic.version = 11 : i64} {
  func.func @_down_kernel(%arg0: i32, %arg1: i32, %arg2: memref<1x16x16x128xf32, #tpu.memory_space<vmem>>, %arg3: memref<1152x128xbf16, #tpu.memory_space<vmem>>, %arg4: memref<1152x128xbf16, #tpu.memory_space<vmem>>, %arg5: memref<1x128xf32, #tpu.memory_space<vmem>>, %arg6: memref<1x128xf32, #tpu.memory_space<vmem>>, %arg7: memref<1x128xf32, #tpu.memory_space<vmem>>, %arg8: memref<1x128xf32, #tpu.memory_space<vmem>>, %arg9: memref<1x8x8x128xf32, #tpu.memory_space<vmem>>, %arg10: memref<1x10x10x128xf32, #tpu.memory_space<vmem>>, %arg11: memref<1x10x10x128xf32, #tpu.memory_space<vmem>>, %arg12: memref<2x64x128xf32, #tpu.memory_space<vmem>>, %arg13: memref<2x64x128xf32, #tpu.memory_space<vmem>>, %arg14: memref<1x128xf32, #tpu.memory_space<vmem>>, %arg15: memref<1x128xf32, #tpu.memory_space<vmem>>, %arg16: memref<1x128xf32, #tpu.memory_space<vmem>>, %arg17: memref<1x128xf32, #tpu.memory_space<vmem>>) attributes {dimension_semantics = [#tpu.dimension_semantics<arbitrary>, #tpu.dimension_semantics<arbitrary>], iteration_bounds = array<i64: 3, 2>, scalar_prefetch = 0 : i64, scratch_operands = 8 : i64, tpu.core_type = #tpu.core_type<tc>, window_params = [{transform_indices = @transform_0, window_bounds = array<i64: 1, 16, 16, 128>}, {pipeline_mode = #tpu.pipeline_mode<synchronous>, transform_indices = @transform_1, window_bounds = array<i64: 1152, 128>}, {pipeline_mode = #tpu.pipeline_mode<synchronous>, transform_indices = @transform_2, window_bounds = array<i64: 1152, 128>}, {pipeline_mode = #tpu.pipeline_mode<synchronous>, transform_indices = @transform_3, window_bounds = array<i64: 1, 128>}, {pipeline_mode = #tpu.pipeline_mode<synchronous>, transform_indices = @transform_4, window_bounds = array<i64: 1, 128>}, {pipeline_mode = #tpu.pipeline_mode<synchronous>, transform_indices = @transform_5, window_bounds = array<i64: 1, 128>}, {pipeline_mode = #tpu.pipeline_mode<synchronous>, transform_indices = @transform_6, window_bounds = array<i64: 1, 128>}, {transform_indices = @transform_7, window_bounds = array<i64: 1, 8, 8, 128>}]} {
    %c0_i32 = arith.constant 0 : i32
    %0 = arith.cmpi eq, %arg0, %c0_i32 : i32
    %c0_i32_0 = arith.constant 0 : i32
    %1 = arith.cmpi eq, %arg1, %c0_i32_0 : i32
    %2 = arith.andi %0, %1 : i1
    %3 = arith.extui %2 : i1 to i32
    %c0_i32_1 = arith.constant 0 : i32
    %4 = arith.cmpi ne, %3, %c0_i32_1 : i32
    scf.if %4 {
      %cst = arith.constant 0.000000e+00 : f32
      %14 = vector.broadcast %cst : f32 to vector<1x10x10x128xf32>
      %c0 = arith.constant 0 : index
      %c0_6 = arith.constant 0 : index
      %c0_7 = arith.constant 0 : index
      %c0_8 = arith.constant 0 : index
      %15 = vector.load %arg10[%c0, %c0_6, %c0_7, %c0_8] : memref<1x10x10x128xf32, #tpu.memory_space<vmem>>, vector<1x10x10x128xf32>
      tpu.vector_store %arg10[%c0, %c0_6, %c0_7, %c0_8], %14 {strides = array<i32>} : memref<1x10x10x128xf32, #tpu.memory_space<vmem>>, vector<1x10x10x128xf32>,
      %cst_9 = arith.constant 0.000000e+00 : f32
      %16 = vector.broadcast %cst_9 : f32 to vector<1x10x10x128xf32>
      %c0_10 = arith.constant 0 : index
      %c0_11 = arith.constant 0 : index
      %c0_12 = arith.constant 0 : index
      %c0_13 = arith.constant 0 : index
      %17 = vector.load %arg11[%c0_10, %c0_11, %c0_12, %c0_13] : memref<1x10x10x128xf32, #tpu.memory_space<vmem>>, vector<1x10x10x128xf32>
      tpu.vector_store %arg11[%c0_10, %c0_11, %c0_12, %c0_13], %16 {strides = array<i32>} : memref<1x10x10x128xf32, #tpu.memory_space<vmem>>, vector<1x10x10x128xf32>,
      %cst_14 = arith.constant 0.000000e+00 : f32
      %18 = vector.broadcast %cst_14 : f32 to vector<1x128xf32>
      %c0_15 = arith.constant 0 : index
      %c0_16 = arith.constant 0 : index
      %19 = vector.load %arg14[%c0_15, %c0_16] : memref<1x128xf32, #tpu.memory_space<vmem>>, vector<1x128xf32>
      tpu.vector_store %arg14[%c0_15, %c0_16], %18 {strides = array<i32>} : memref<1x128xf32, #tpu.memory_space<vmem>>, vector<1x128xf32>,
      %cst_17 = arith.constant 0.000000e+00 : f32
      %20 = vector.broadcast %cst_17 : f32 to vector<1x128xf32>
      %c0_18 = arith.constant 0 : index
      %c0_19 = arith.constant 0 : index
      %21 = vector.load %arg15[%c0_18, %c0_19] : memref<1x128xf32, #tpu.memory_space<vmem>>, vector<1x128xf32>
      tpu.vector_store %arg15[%c0_18, %c0_19], %20 {strides = array<i32>} : memref<1x128xf32, #tpu.memory_space<vmem>>, vector<1x128xf32>,
      %cst_20 = arith.constant 0.000000e+00 : f32
      %22 = vector.broadcast %cst_20 : f32 to vector<1x128xf32>
      %c0_21 = arith.constant 0 : index
      %c0_22 = arith.constant 0 : index
      %23 = vector.load %arg16[%c0_21, %c0_22] : memref<1x128xf32, #tpu.memory_space<vmem>>, vector<1x128xf32>
      tpu.vector_store %arg16[%c0_21, %c0_22], %22 {strides = array<i32>} : memref<1x128xf32, #tpu.memory_space<vmem>>, vector<1x128xf32>,
      %cst_23 = arith.constant 0.000000e+00 : f32
      %24 = vector.broadcast %cst_23 : f32 to vector<1x128xf32>
      %c0_24 = arith.constant 0 : index
      %c0_25 = arith.constant 0 : index
      %25 = vector.load %arg17[%c0_24, %c0_25] : memref<1x128xf32, #tpu.memory_space<vmem>>, vector<1x128xf32>
      tpu.vector_store %arg17[%c0_24, %c0_25], %24 {strides = array<i32>} : memref<1x128xf32, #tpu.memory_space<vmem>>, vector<1x128xf32>,
    } else {
    }
    %c0_i32_2 = arith.constant 0 : i32
    %5 = arith.cmpi eq, %arg0, %c0_i32_2 : i32
    %6 = arith.extui %5 : i1 to i32
    %c0_i32_3 = arith.constant 0 : i32
    %7 = arith.cmpi ne, %6, %c0_i32_3 : i32
    scf.if %7 {
      %c0 = arith.constant 0 : index
      %c0_6 = arith.constant 0 : index
      %c0_7 = arith.constant 0 : index
      %c0_8 = arith.constant 0 : index
      %14 = tpu.strided_load %arg2[%c0, %c0_6, %c0_7, %c0_8] {strides = array<i32: 1, 2, 2, 1>} : memref<1x16x16x128xf32, #tpu.memory_space<vmem>>, vector<1x8x8x128xf32>
      %c0_9 = arith.constant 0 : index
      %c0_10 = arith.constant 0 : index
      %c1 = arith.constant 1 : index
      %c0_11 = arith.constant 0 : index
      %15 = tpu.strided_load %arg2[%c0_9, %c0_10, %c1, %c0_11] {strides = array<i32: 1, 2, 2, 1>} : memref<1x16x16x128xf32, #tpu.memory_space<vmem>>, vector<1x8x8x128xf32>
      %c0_12 = arith.constant 0 : index
      %c1_13 = arith.constant 1 : index
      %c0_14 = arith.constant 0 : index
      %c0_15 = arith.constant 0 : index
      %16 = tpu.strided_load %arg2[%c0_12, %c1_13, %c0_14, %c0_15] {strides = array<i32: 1, 2, 2, 1>} : memref<1x16x16x128xf32, #tpu.memory_space<vmem>>, vector<1x8x8x128xf32>
      %c0_16 = arith.constant 0 : index
      %c1_17 = arith.constant 1 : index
      %c1_18 = arith.constant 1 : index
      %c0_19 = arith.constant 0 : index
      %17 = tpu.strided_load %arg2[%c0_16, %c1_17, %c1_18, %c0_19] {strides = array<i32: 1, 2, 2, 1>} : memref<1x16x16x128xf32, #tpu.memory_space<vmem>>, vector<1x8x8x128xf32>
      %18 = arith.maximumf %14, %15 : vector<1x8x8x128xf32>
      %19 = arith.maximumf %16, %17 : vector<1x8x8x128xf32>
      %20 = arith.maximumf %18, %19 : vector<1x8x8x128xf32>
      %c0_20 = arith.constant 0 : index
      %c1_21 = arith.constant 1 : index
      %c1_22 = arith.constant 1 : index
      %c0_23 = arith.constant 0 : index
      %21 = vector.load %arg10[%c0_20, %c1_21, %c1_22, %c0_23] : memref<1x10x10x128xf32, #tpu.memory_space<vmem>>, vector<1x8x8x128xf32>
      tpu.vector_store %arg10[%c0_20, %c1_21, %c1_22, %c0_23], %20 {strides = array<i32>} : memref<1x10x10x128xf32, #tpu.memory_space<vmem>>, vector<1x8x8x128xf32>,
      %c0_24 = arith.constant 0 : index
      %c0_25 = arith.constant 0 : index
      %c0_26 = arith.constant 0 : index
      %c0_27 = arith.constant 0 : index
      %22 = vector.load %arg10[%c0_24, %c0_25, %c0_26, %c0_27] : memref<1x10x10x128xf32, #tpu.memory_space<vmem>>, vector<1x8x8x128xf32>
      %c0_28 = arith.constant 0 : index
      %c0_29 = arith.constant 0 : index
      %c1_30 = arith.constant 1 : index
      %c0_31 = arith.constant 0 : index
      %23 = vector.load %arg10[%c0_28, %c0_29, %c1_30, %c0_31] : memref<1x10x10x128xf32, #tpu.memory_space<vmem>>, vector<1x8x8x128xf32>
      %c0_32 = arith.constant 0 : index
      %c0_33 = arith.constant 0 : index
      %c2 = arith.constant 2 : index
      %c0_34 = arith.constant 0 : index
      %24 = vector.load %arg10[%c0_32, %c0_33, %c2, %c0_34] : memref<1x10x10x128xf32, #tpu.memory_space<vmem>>, vector<1x8x8x128xf32>
      %c0_35 = arith.constant 0 : index
      %c1_36 = arith.constant 1 : index
      %c0_37 = arith.constant 0 : index
      %c0_38 = arith.constant 0 : index
      %25 = vector.load %arg10[%c0_35, %c1_36, %c0_37, %c0_38] : memref<1x10x10x128xf32, #tpu.memory_space<vmem>>, vector<1x8x8x128xf32>
      %c0_39 = arith.constant 0 : index
      %c1_40 = arith.constant 1 : index
      %c1_41 = arith.constant 1 : index
      %c0_42 = arith.constant 0 : index
      %26 = vector.load %arg10[%c0_39, %c1_40, %c1_41, %c0_42] : memref<1x10x10x128xf32, #tpu.memory_space<vmem>>, vector<1x8x8x128xf32>
      %c0_43 = arith.constant 0 : index
      %c1_44 = arith.constant 1 : index
      %c2_45 = arith.constant 2 : index
      %c0_46 = arith.constant 0 : index
      %27 = vector.load %arg10[%c0_43, %c1_44, %c2_45, %c0_46] : memref<1x10x10x128xf32, #tpu.memory_space<vmem>>, vector<1x8x8x128xf32>
      %c0_47 = arith.constant 0 : index
      %c2_48 = arith.constant 2 : index
      %c0_49 = arith.constant 0 : index
      %c0_50 = arith.constant 0 : index
      %28 = vector.load %arg10[%c0_47, %c2_48, %c0_49, %c0_50] : memref<1x10x10x128xf32, #tpu.memory_space<vmem>>, vector<1x8x8x128xf32>
      %c0_51 = arith.constant 0 : index
      %c2_52 = arith.constant 2 : index
      %c1_53 = arith.constant 1 : index
      %c0_54 = arith.constant 0 : index
      %29 = vector.load %arg10[%c0_51, %c2_52, %c1_53, %c0_54] : memref<1x10x10x128xf32, #tpu.memory_space<vmem>>, vector<1x8x8x128xf32>
      %c0_55 = arith.constant 0 : index
      %c2_56 = arith.constant 2 : index
      %c2_57 = arith.constant 2 : index
      %c0_58 = arith.constant 0 : index
      %30 = vector.load %arg10[%c0_55, %c2_56, %c2_57, %c0_58] : memref<1x10x10x128xf32, #tpu.memory_space<vmem>>, vector<1x8x8x128xf32>
      %31 = tpu.concatenate %22, %23, %24, %25, %26, %27, %28, %29, %30 in 3 : vector<1x8x8x128xf32>, vector<1x8x8x128xf32>, vector<1x8x8x128xf32>, vector<1x8x8x128xf32>, vector<1x8x8x128xf32>, vector<1x8x8x128xf32>, vector<1x8x8x128xf32>, vector<1x8x8x128xf32>, vector<1x8x8x128xf32> -> vector<1x8x8x1152xf32>
      %32 = vector.shape_cast %31 : vector<1x8x8x1152xf32> to vector<64x1152xf32>
      %33 = arith.truncf %32 : vector<64x1152xf32> to vector<64x1152xbf16>
      %c0_59 = arith.constant 0 : index
      %c0_60 = arith.constant 0 : index
      %34 = vector.load %arg3[%c0_59, %c0_60] : memref<1152x128xbf16, #tpu.memory_space<vmem>>, vector<1152x128xbf16>
      %cst = arith.constant dense<0.000000e+00> : vector<64x128xf32>
      %35 = tpu.matmul %33, %34, %cst {dimension_numbers = #tpu.dot_dimension_numbers<[1], [0], [0], [1], [0, 0, 1, 1], [], []>} : vector<64x1152xbf16>, vector<1152x128xbf16>, vector<64x128xf32> -> vector<64x128xf32>
      %36 = arith.index_cast %arg1 : i32 to index
      %c0_61 = arith.constant 0 : index
      %c0_62 = arith.constant 0 : index
      %37 = vector.load %arg12[%36, %c0_61, %c0_62] : memref<2x64x128xf32, #tpu.memory_space<vmem>>, vector<1x64x128xf32>
      %38 = vector.shape_cast %37 : vector<1x64x128xf32> to vector<64x128xf32>
      %39 = vector.shape_cast %35 : vector<64x128xf32> to vector<1x64x128xf32>
      tpu.vector_store %arg12[%36, %c0_61, %c0_62], %39 {strides = array<i32>} : memref<2x64x128xf32, #tpu.memory_space<vmem>>, vector<1x64x128xf32>,
      %c0_63 = arith.constant 0 : index
      %c0_64 = arith.constant 0 : index
      %40 = vector.load %arg14[%c0_63, %c0_64] : memref<1x128xf32, #tpu.memory_space<vmem>>, vector<1x128xf32>
      %cst_65 = arith.constant dense<0.000000e+00> : vector<128xf32>
      %41 = vector.multi_reduction <add>, %35, %cst_65 [0] : vector<64x128xf32> to vector<128xf32>
      %42 = vector.shape_cast %41 : vector<128xf32> to vector<1x128xf32>
      %43 = arith.addf %40, %42 : vector<1x128xf32>
      %c0_66 = arith.constant 0 : index
      %c0_67 = arith.constant 0 : index
      %44 = vector.load %arg14[%c0_66, %c0_67] : memref<1x128xf32, #tpu.memory_space<vmem>>, vector<1x128xf32>
      tpu.vector_store %arg14[%c0_66, %c0_67], %43 {strides = array<i32>} : memref<1x128xf32, #tpu.memory_space<vmem>>, vector<1x128xf32>,
      %c0_68 = arith.constant 0 : index
      %c0_69 = arith.constant 0 : index
      %45 = vector.load %arg15[%c0_68, %c0_69] : memref<1x128xf32, #tpu.memory_space<vmem>>, vector<1x128xf32>
      %46 = arith.mulf %35, %35 : vector<64x128xf32>
      %cst_70 = arith.constant dense<0.000000e+00> : vector<128xf32>
      %47 = vector.multi_reduction <add>, %46, %cst_70 [0] : vector<64x128xf32> to vector<128xf32>
      %48 = vector.shape_cast %47 : vector<128xf32> to vector<1x128xf32>
      %49 = arith.addf %45, %48 : vector<1x128xf32>
      %c0_71 = arith.constant 0 : index
      %c0_72 = arith.constant 0 : index
      %50 = vector.load %arg15[%c0_71, %c0_72] : memref<1x128xf32, #tpu.memory_space<vmem>>, vector<1x128xf32>
      tpu.vector_store %arg15[%c0_71, %c0_72], %49 {strides = array<i32>} : memref<1x128xf32, #tpu.memory_space<vmem>>, vector<1x128xf32>,
    } else {
    }
    %c1_i32 = arith.constant 1 : i32
    %8 = arith.cmpi eq, %arg0, %c1_i32 : i32
    %9 = arith.extui %8 : i1 to i32
    %c0_i32_4 = arith.constant 0 : i32
    %10 = arith.cmpi ne, %9, %c0_i32_4 : i32
    scf.if %10 {
      %c0 = arith.constant 0 : index
      %c0_6 = arith.constant 0 : index
      %14 = vector.load %arg14[%c0, %c0_6] : memref<1x128xf32, #tpu.memory_space<vmem>>, vector<1x128xf32>
      %cst = arith.constant 7.812500e-03 : f32
      %15 = vector.broadcast %cst : f32 to vector<1x128xf32>
      %16 = arith.mulf %14, %15 : vector<1x128xf32>
      %c0_7 = arith.constant 0 : index
      %c0_8 = arith.constant 0 : index
      %17 = vector.load %arg15[%c0_7, %c0_8] : memref<1x128xf32, #tpu.memory_space<vmem>>, vector<1x128xf32>
      %cst_9 = arith.constant 7.812500e-03 : f32
      %18 = vector.broadcast %cst_9 : f32 to vector<1x128xf32>
      %19 = arith.mulf %17, %18 : vector<1x128xf32>
      %20 = arith.mulf %16, %16 : vector<1x128xf32>
      %21 = arith.subf %19, %20 : vector<1x128xf32>
      %c0_10 = arith.constant 0 : index
      %c0_11 = arith.constant 0 : index
      %22 = vector.load %arg5[%c0_10, %c0_11] : memref<1x128xf32, #tpu.memory_space<vmem>>, vector<1x128xf32>
      %cst_12 = arith.constant 9.99999974E-6 : f32
      %23 = vector.broadcast %cst_12 : f32 to vector<1x128xf32>
      %24 = arith.addf %21, %23 : vector<1x128xf32>
      %25 = math.rsqrt %24 : vector<1x128xf32>
      %26 = arith.mulf %22, %25 : vector<1x128xf32>
      %c0_13 = arith.constant 0 : index
      %c0_14 = arith.constant 0 : index
      %27 = vector.load %arg6[%c0_13, %c0_14] : memref<1x128xf32, #tpu.memory_space<vmem>>, vector<1x128xf32>
      %28 = arith.mulf %26, %16 : vector<1x128xf32>
      %29 = arith.subf %27, %28 : vector<1x128xf32>
      %30 = arith.index_cast %arg1 : i32 to index
      %c0_15 = arith.constant 0 : index
      %c0_16 = arith.constant 0 : index
      %31 = vector.load %arg12[%30, %c0_15, %c0_16] : memref<2x64x128xf32, #tpu.memory_space<vmem>>, vector<1x64x128xf32>
      %32 = vector.shape_cast %31 : vector<1x64x128xf32> to vector<64x128xf32>
      %33 = vector.broadcast %26 : vector<1x128xf32> to vector<64x128xf32>
      %34 = arith.mulf %32, %33 : vector<64x128xf32>
      %35 = vector.broadcast %29 : vector<1x128xf32> to vector<64x128xf32>
      %36 = arith.addf %34, %35 : vector<64x128xf32>
      %cst_17 = arith.constant 0.000000e+00 : f32
      %37 = vector.broadcast %cst_17 : f32 to vector<64x128xf32>
      %38 = arith.maximumf %36, %37 : vector<64x128xf32>
      %39 = vector.shape_cast %38 : vector<64x128xf32> to vector<1x8x8x128xf32>
      %c0_18 = arith.constant 0 : index
      %c1 = arith.constant 1 : index
      %c1_19 = arith.constant 1 : index
      %c0_20 = arith.constant 0 : index
      %40 = vector.load %arg11[%c0_18, %c1, %c1_19, %c0_20] : memref<1x10x10x128xf32, #tpu.memory_space<vmem>>, vector<1x8x8x128xf32>
      tpu.vector_store %arg11[%c0_18, %c1, %c1_19, %c0_20], %39 {strides = array<i32>} : memref<1x10x10x128xf32, #tpu.memory_space<vmem>>, vector<1x8x8x128xf32>,
      %c0_21 = arith.constant 0 : index
      %c0_22 = arith.constant 0 : index
      %c0_23 = arith.constant 0 : index
      %c0_24 = arith.constant 0 : index
      %41 = vector.load %arg11[%c0_21, %c0_22, %c0_23, %c0_24] : memref<1x10x10x128xf32, #tpu.memory_space<vmem>>, vector<1x8x8x128xf32>
      %c0_25 = arith.constant 0 : index
      %c0_26 = arith.constant 0 : index
      %c1_27 = arith.constant 1 : index
      %c0_28 = arith.constant 0 : index
      %42 = vector.load %arg11[%c0_25, %c0_26, %c1_27, %c0_28] : memref<1x10x10x128xf32, #tpu.memory_space<vmem>>, vector<1x8x8x128xf32>
      %c0_29 = arith.constant 0 : index
      %c0_30 = arith.constant 0 : index
      %c2 = arith.constant 2 : index
      %c0_31 = arith.constant 0 : index
      %43 = vector.load %arg11[%c0_29, %c0_30, %c2, %c0_31] : memref<1x10x10x128xf32, #tpu.memory_space<vmem>>, vector<1x8x8x128xf32>
      %c0_32 = arith.constant 0 : index
      %c1_33 = arith.constant 1 : index
      %c0_34 = arith.constant 0 : index
      %c0_35 = arith.constant 0 : index
      %44 = vector.load %arg11[%c0_32, %c1_33, %c0_34, %c0_35] : memref<1x10x10x128xf32, #tpu.memory_space<vmem>>, vector<1x8x8x128xf32>
      %c0_36 = arith.constant 0 : index
      %c1_37 = arith.constant 1 : index
      %c1_38 = arith.constant 1 : index
      %c0_39 = arith.constant 0 : index
      %45 = vector.load %arg11[%c0_36, %c1_37, %c1_38, %c0_39] : memref<1x10x10x128xf32, #tpu.memory_space<vmem>>, vector<1x8x8x128xf32>
      %c0_40 = arith.constant 0 : index
      %c1_41 = arith.constant 1 : index
      %c2_42 = arith.constant 2 : index
      %c0_43 = arith.constant 0 : index
      %46 = vector.load %arg11[%c0_40, %c1_41, %c2_42, %c0_43] : memref<1x10x10x128xf32, #tpu.memory_space<vmem>>, vector<1x8x8x128xf32>
      %c0_44 = arith.constant 0 : index
      %c2_45 = arith.constant 2 : index
      %c0_46 = arith.constant 0 : index
      %c0_47 = arith.constant 0 : index
      %47 = vector.load %arg11[%c0_44, %c2_45, %c0_46, %c0_47] : memref<1x10x10x128xf32, #tpu.memory_space<vmem>>, vector<1x8x8x128xf32>
      %c0_48 = arith.constant 0 : index
      %c2_49 = arith.constant 2 : index
      %c1_50 = arith.constant 1 : index
      %c0_51 = arith.constant 0 : index
      %48 = vector.load %arg11[%c0_48, %c2_49, %c1_50, %c0_51] : memref<1x10x10x128xf32, #tpu.memory_space<vmem>>, vector<1x8x8x128xf32>
      %c0_52 = arith.constant 0 : index
      %c2_53 = arith.constant 2 : index
      %c2_54 = arith.constant 2 : index
      %c0_55 = arith.constant 0 : index
      %49 = vector.load %arg11[%c0_52, %c2_53, %c2_54, %c0_55] : memref<1x10x10x128xf32, #tpu.memory_space<vmem>>, vector<1x8x8x128xf32>
      %50 = tpu.concatenate %41, %42, %43, %44, %45, %46, %47, %48, %49 in 3 : vector<1x8x8x128xf32>, vector<1x8x8x128xf32>, vector<1x8x8x128xf32>, vector<1x8x8x128xf32>, vector<1x8x8x128xf32>, vector<1x8x8x128xf32>, vector<1x8x8x128xf32>, vector<1x8x8x128xf32>, vector<1x8x8x128xf32> -> vector<1x8x8x1152xf32>
      %51 = vector.shape_cast %50 : vector<1x8x8x1152xf32> to vector<64x1152xf32>
      %52 = arith.truncf %51 : vector<64x1152xf32> to vector<64x1152xbf16>
      %c0_56 = arith.constant 0 : index
      %c0_57 = arith.constant 0 : index
      %53 = vector.load %arg4[%c0_56, %c0_57] : memref<1152x128xbf16, #tpu.memory_space<vmem>>, vector<1152x128xbf16>
      %cst_58 = arith.constant dense<0.000000e+00> : vector<64x128xf32>
      %54 = tpu.matmul %52, %53, %cst_58 {dimension_numbers = #tpu.dot_dimension_numbers<[1], [0], [0], [1], [0, 0, 1, 1], [], []>} : vector<64x1152xbf16>, vector<1152x128xbf16>, vector<64x128xf32> -> vector<64x128xf32>
      %55 = arith.index_cast %arg1 : i32 to index
      %c0_59 = arith.constant 0 : index
      %c0_60 = arith.constant 0 : index
      %56 = vector.load %arg13[%55, %c0_59, %c0_60] : memref<2x64x128xf32, #tpu.memory_space<vmem>>, vector<1x64x128xf32>
      %57 = vector.shape_cast %56 : vector<1x64x128xf32> to vector<64x128xf32>
      %58 = vector.shape_cast %54 : vector<64x128xf32> to vector<1x64x128xf32>
      tpu.vector_store %arg13[%55, %c0_59, %c0_60], %58 {strides = array<i32>} : memref<2x64x128xf32, #tpu.memory_space<vmem>>, vector<1x64x128xf32>,
      %c0_61 = arith.constant 0 : index
      %c0_62 = arith.constant 0 : index
      %59 = vector.load %arg16[%c0_61, %c0_62] : memref<1x128xf32, #tpu.memory_space<vmem>>, vector<1x128xf32>
      %cst_63 = arith.constant dense<0.000000e+00> : vector<128xf32>
      %60 = vector.multi_reduction <add>, %54, %cst_63 [0] : vector<64x128xf32> to vector<128xf32>
      %61 = vector.shape_cast %60 : vector<128xf32> to vector<1x128xf32>
      %62 = arith.addf %59, %61 : vector<1x128xf32>
      %c0_64 = arith.constant 0 : index
      %c0_65 = arith.constant 0 : index
      %63 = vector.load %arg16[%c0_64, %c0_65] : memref<1x128xf32, #tpu.memory_space<vmem>>, vector<1x128xf32>
      tpu.vector_store %arg16[%c0_64, %c0_65], %62 {strides = array<i32>} : memref<1x128xf32, #tpu.memory_space<vmem>>, vector<1x128xf32>,
      %c0_66 = arith.constant 0 : index
      %c0_67 = arith.constant 0 : index
      %64 = vector.load %arg17[%c0_66, %c0_67] : memref<1x128xf32, #tpu.memory_space<vmem>>, vector<1x128xf32>
      %65 = arith.mulf %54, %54 : vector<64x128xf32>
      %cst_68 = arith.constant dense<0.000000e+00> : vector<128xf32>
      %66 = vector.multi_reduction <add>, %65, %cst_68 [0] : vector<64x128xf32> to vector<128xf32>
      %67 = vector.shape_cast %66 : vector<128xf32> to vector<1x128xf32>
      %68 = arith.addf %64, %67 : vector<1x128xf32>
      %c0_69 = arith.constant 0 : index
      %c0_70 = arith.constant 0 : index
      %69 = vector.load %arg17[%c0_69, %c0_70] : memref<1x128xf32, #tpu.memory_space<vmem>>, vector<1x128xf32>
      tpu.vector_store %arg17[%c0_69, %c0_70], %68 {strides = array<i32>} : memref<1x128xf32, #tpu.memory_space<vmem>>, vector<1x128xf32>,
    } else {
    }
    %c2_i32 = arith.constant 2 : i32
    %11 = arith.cmpi eq, %arg0, %c2_i32 : i32
    %12 = arith.extui %11 : i1 to i32
    %c0_i32_5 = arith.constant 0 : i32
    %13 = arith.cmpi ne, %12, %c0_i32_5 : i32
    scf.if %13 {
      %c0 = arith.constant 0 : index
      %c0_6 = arith.constant 0 : index
      %14 = vector.load %arg16[%c0, %c0_6] : memref<1x128xf32, #tpu.memory_space<vmem>>, vector<1x128xf32>
      %cst = arith.constant 7.812500e-03 : f32
      %15 = vector.broadcast %cst : f32 to vector<1x128xf32>
      %16 = arith.mulf %14, %15 : vector<1x128xf32>
      %c0_7 = arith.constant 0 : index
      %c0_8 = arith.constant 0 : index
      %17 = vector.load %arg17[%c0_7, %c0_8] : memref<1x128xf32, #tpu.memory_space<vmem>>, vector<1x128xf32>
      %cst_9 = arith.constant 7.812500e-03 : f32
      %18 = vector.broadcast %cst_9 : f32 to vector<1x128xf32>
      %19 = arith.mulf %17, %18 : vector<1x128xf32>
      %20 = arith.mulf %16, %16 : vector<1x128xf32>
      %21 = arith.subf %19, %20 : vector<1x128xf32>
      %c0_10 = arith.constant 0 : index
      %c0_11 = arith.constant 0 : index
      %22 = vector.load %arg7[%c0_10, %c0_11] : memref<1x128xf32, #tpu.memory_space<vmem>>, vector<1x128xf32>
      %cst_12 = arith.constant 9.99999974E-6 : f32
      %23 = vector.broadcast %cst_12 : f32 to vector<1x128xf32>
      %24 = arith.addf %21, %23 : vector<1x128xf32>
      %25 = math.rsqrt %24 : vector<1x128xf32>
      %26 = arith.mulf %22, %25 : vector<1x128xf32>
      %c0_13 = arith.constant 0 : index
      %c0_14 = arith.constant 0 : index
      %27 = vector.load %arg8[%c0_13, %c0_14] : memref<1x128xf32, #tpu.memory_space<vmem>>, vector<1x128xf32>
      %28 = arith.mulf %26, %16 : vector<1x128xf32>
      %29 = arith.subf %27, %28 : vector<1x128xf32>
      %30 = arith.index_cast %arg1 : i32 to index
      %c0_15 = arith.constant 0 : index
      %c0_16 = arith.constant 0 : index
      %31 = vector.load %arg13[%30, %c0_15, %c0_16] : memref<2x64x128xf32, #tpu.memory_space<vmem>>, vector<1x64x128xf32>
      %32 = vector.shape_cast %31 : vector<1x64x128xf32> to vector<64x128xf32>
      %33 = vector.broadcast %26 : vector<1x128xf32> to vector<64x128xf32>
      %34 = arith.mulf %32, %33 : vector<64x128xf32>
      %35 = vector.broadcast %29 : vector<1x128xf32> to vector<64x128xf32>
      %36 = arith.addf %34, %35 : vector<64x128xf32>
      %cst_17 = arith.constant 0.000000e+00 : f32
      %37 = vector.broadcast %cst_17 : f32 to vector<64x128xf32>
      %38 = arith.maximumf %36, %37 : vector<64x128xf32>
      %39 = vector.shape_cast %38 : vector<64x128xf32> to vector<1x8x8x128xf32>
      %c0_18 = arith.constant 0 : index
      %c0_19 = arith.constant 0 : index
      %c0_20 = arith.constant 0 : index
      %c0_21 = arith.constant 0 : index
      %40 = vector.load %arg9[%c0_18, %c0_19, %c0_20, %c0_21] : memref<1x8x8x128xf32, #tpu.memory_space<vmem>>, vector<1x8x8x128xf32>
      tpu.vector_store %arg9[%c0_18, %c0_19, %c0_20, %c0_21], %39 {strides = array<i32>} : memref<1x8x8x128xf32, #tpu.memory_space<vmem>>, vector<1x8x8x128xf32>,
    } else {
    }
    return
  }
  func.func @transform_0(%arg0: i32, %arg1: i32) -> (i32, i32, i32, i32) {
    %c0_i32 = arith.constant 0 : i32
    %0 = arith.cmpi eq, %arg0, %c0_i32 : i32
    %c0_i32_0 = arith.constant 0 : i32
    %1 = arith.select %0, %arg1, %c0_i32_0 : i32
    %c0_i32_1 = arith.constant 0 : i32
    %c0_i32_2 = arith.constant 0 : i32
    %c0_i32_3 = arith.constant 0 : i32
    %c0_i32_4 = arith.constant 0 : i32
    return %1, %c0_i32_1, %c0_i32_2, %c0_i32_3 : i32, i32, i32, i32
  }
  func.func @transform_1(%arg0: i32, %arg1: i32) -> (i32, i32) {
    %c0_i32 = arith.constant 0 : i32
    %c0_i32_0 = arith.constant 0 : i32
    %c0_i32_1 = arith.constant 0 : i32
    return %c0_i32, %c0_i32_0 : i32, i32
  }
  func.func @transform_2(%arg0: i32, %arg1: i32) -> (i32, i32) {
    %c0_i32 = arith.constant 0 : i32
    %c0_i32_0 = arith.constant 0 : i32
    %c0_i32_1 = arith.constant 0 : i32
    return %c0_i32, %c0_i32_0 : i32, i32
  }
  func.func @transform_3(%arg0: i32, %arg1: i32) -> (i32, i32) {
    %c0_i32 = arith.constant 0 : i32
    %c0_i32_0 = arith.constant 0 : i32
    %c0_i32_1 = arith.constant 0 : i32
    return %c0_i32, %c0_i32_0 : i32, i32
  }
  func.func @transform_4(%arg0: i32, %arg1: i32) -> (i32, i32) {
    %c0_i32 = arith.constant 0 : i32
    %c0_i32_0 = arith.constant 0 : i32
    %c0_i32_1 = arith.constant 0 : i32
    return %c0_i32, %c0_i32_0 : i32, i32
  }
  func.func @transform_5(%arg0: i32, %arg1: i32) -> (i32, i32) {
    %c0_i32 = arith.constant 0 : i32
    %c0_i32_0 = arith.constant 0 : i32
    %c0_i32_1 = arith.constant 0 : i32
    return %c0_i32, %c0_i32_0 : i32, i32
  }
  func.func @transform_6(%arg0: i32, %arg1: i32) -> (i32, i32) {
    %c0_i32 = arith.constant 0 : i32
    %c0_i32_0 = arith.constant 0 : i32
    %c0_i32_1 = arith.constant 0 : i32
    return %c0_i32, %c0_i32_0 : i32, i32
  }
  func.func @transform_7(%arg0: i32, %arg1: i32) -> (i32, i32, i32, i32) {
    %c2_i32 = arith.constant 2 : i32
    %0 = arith.cmpi eq, %arg0, %c2_i32 : i32
    %c0_i32 = arith.constant 0 : i32
    %1 = arith.select %0, %arg1, %c0_i32 : i32
    %c0_i32_0 = arith.constant 0 : i32
    %c0_i32_1 = arith.constant 0 : i32
    %c0_i32_2 = arith.constant 0 : i32
    %c0_i32_3 = arith.constant 0 : i32
    return %1, %c0_i32_0, %c0_i32_1, %c0_i32_2 : i32, i32, i32, i32
  }
}

</mosaic_0001>

<llo_original>
// kernel: tpu_custom_call.1
$region0: #{tpu_custom_call.1}
  #allocation0 [shape = 'u32[]', space=smem, size = 0x4, offset = 0x4, fixed_abs, tag = 'smem constant byte address 0x4 - core index']
  #allocation1 [shape = 'u32[144,128]{1,0:T(1,128)}', space=vmem, size = 0x12000, scoped, tag = 'internal scratch']
  #allocation2 [shape = 'f32[1,10,10,128]{3,2,1,0:T(8,128)}', space=vmem, size = 0x14000, scoped, tag = 'scratch operand']
  #allocation3 [shape = 'f32[1,10,10,128]{3,2,1,0:T(8,128)}', space=vmem, size = 0x14000, scoped, tag = 'scratch operand']
  #allocation4 [shape = 'f32[2,64,128]{2,1,0:T(8,128)}', space=vmem, size = 0x10000, scoped, tag = 'scratch operand']
  #allocation5 [shape = 'f32[2,64,128]{2,1,0:T(8,128)}', space=vmem, size = 0x10000, scoped, tag = 'scratch operand']
  #allocation6 [shape = 'f32[1,128]{1,0:T(1,128)}', space=vmem, size = 0x200, scoped, tag = 'scratch operand']
  #allocation7 [shape = 'f32[1,128]{1,0:T(1,128)}', space=vmem, size = 0x200, scoped, tag = 'scratch operand']
  #allocation8 [shape = 'f32[1,128]{1,0:T(1,128)}', space=vmem, size = 0x200, scoped, tag = 'scratch operand']
  #allocation9 [shape = 'f32[1,128]{1,0:T(1,128)}', space=vmem, size = 0x200, scoped, tag = 'scratch operand']
  %s0 = inlined_call_operand.hbm [shape: f32[2,16,16,128], index: 0, kind: input, shape index: {}]
  %s1 = inlined_call_operand.hbm [shape: bf16[1152,128], index: 1, kind: input, shape index: {}]
  %s2 = inlined_call_operand.hbm [shape: bf16[1152,128], index: 2, kind: input, shape index: {}]
  %s3 = inlined_call_operand.vmem [shape: f32[1,128], index: 3, kind: input, shape index: {}]
  %s4 = inlined_call_operand.vmem [shape: f32[1,128], index: 4, kind: input, shape index: {}]
  %s5 = inlined_call_operand.vmem [shape: f32[1,128], index: 5, kind: input, shape index: {}]
  %s6 = inlined_call_operand.vmem [shape: f32[1,128], index: 6, kind: input, shape index: {}]
  %s7 = inlined_call_operand.hbm [shape: f32[2,8,8,128], index: 7, kind: output, shape index: {}]
  %s8 = sld [smem:[#allocation0]]
  $region89: #{tpu_custom_call.1} parent=0
    _
  %s10 = ssub.s32 1, %s8
  %s11 = scalar_select 0, %s10, %s8
  $region1: #{tpu_custom_call.1} parent=0
    #allocation10 [shape = 'u8[262144]{0}', space=vmem, size = 0x40000, scoped, tag = 'input window, operand 0']
    #allocation11 [shape = 's32[2]{0}', space=sflag, size = 0x8, scoped, tag = 'scoped memory for tpu_custom_call.1']
    #allocation12 [shape = 's32[2]{0}', space=sflag, size = 0x8, scoped, tag = 'scoped memory for tpu_custom_call.1']
    #allocation13 [shape = 'u8[294912]{0}', space=vmem, size = 0x48000, scoped, tag = 'input window, operand 1, single buffered']
    #allocation14 [shape = 's32[1]{0}', space=sflag, size = 0x4, scoped, tag = 'scoped memory for tpu_custom_call.1']
    #allocation15 [shape = 'u8[294912]{0}', space=vmem, size = 0x48000, scoped, tag = 'input window, operand 2, single buffered']
    #allocation16 [shape = 'u8[65536]{0}', space=vmem, size = 0x10000, scoped, tag = 'output window, operand 0']
    %12 = vsyncpa [#allocation11], 0
    %s13 = scalar_lea.sflag [#allocation11], 1
    %14 = vsyncpa %s13, 0
    %15 = vsyncpa [#allocation14], 0
    %16 = vsyncpa [#allocation12], 0
    %s17 = scalar_lea.sflag [#allocation12], 1
    %18 = vsyncpa %s17, 0
    loop: start=0, step=1, limit=8
    $region2: #{tpu_custom_call.1} parent=1 // loop_pre_header
      _
    $region3: #{tpu_custom_call.1} parent=1 // loop_header
      %s20 = sphi 0, %s24
      %p21 = scmp.ge.s32.totalorder %s20, 8
      %s27 = sphi 0, %s39
      %s28 = sphi 0, %s35
      %s29 = sphi 0, %s27
      %s30 = sphi 0, %s28
      %s31 = sphi 0, %s29
      %s32 = sphi 0, %s30
      %s46 = sphi 0, %s48
      %s49 = sphi 0, %s46
      %s50 = sphi 0, %s49
      %s66 = sphi 0, %s50
      %s70 = sphi 0, %s70
      %s72 = sphi 0, %s70
      %s73 = sphi 0, %s72
      %s87 = sphi 0, %s73
      %s91 = sphi 0, %s91
      %s93 = sphi 0, %s91
      %s94 = sphi 0, %s93
      %s108 = sphi 0, %s94
      %s112 = sphi 0, %s112
      %s114 = sphi 0, %s112
      %s115 = sphi 0, %s114
      %s129 = sphi 0, %s115
      %s133 = sphi 0, %s133
      %s135 = sphi 0, %s133
      %s136 = sphi 0, %s135
      %s150 = sphi 0, %s136
      %s154 = sphi 0, %s154
      %s156 = sphi 0, %s154
      %s157 = sphi 0, %s156
      %s171 = sphi 0, %s157
      %s175 = sphi 0, %s175
      %s177 = sphi 0, %s175
      %s178 = sphi 0, %s177
      %s192 = sphi 0, %s178
      %s202 = sphi 0, %s204
      %s205 = sphi 0, %s202
      %s206 = sphi 0, %s205
      %s222 = sphi 0, %s206
    $region4: #{tpu_custom_call.1} parent=1 // loop_header_branch
      %23 = sbr.rel (%p21) target = $region8
    $region5: #{tpu_custom_call.1} parent=1 // loop_body
      %s25 = ssub.s32 %s20, 1
      %s26 = ssub.s32 %s20, 2
      %s33 = sadd.s32 1, %s28
      %p34 = scmp.ge.s32.totalorder %s33, 2
      %s35 = scalar_select %p34, 0, %s33
      %s36 = sadd.s32 1, %s27
      %s37 = scalar_select %p34, %s36, %s27
      %p38 = scmp.ge.s32.totalorder %s37, 3
      %s39 = scalar_select %p38, 0, %s37
      %p40 = scmp.eq.s32.totalorder %s27, 0
      %s41 = scalar_select %p40, %s28, 0
      %p42 = scmp.eq.s32.totalorder %s39, 0
      %s43 = scalar_select %p42, %s35, 0
      %s44 = ssub.s32 %s41, %s43
      %p45 = scmp.eq.s32.totalorder %s44, 0
      %s47 = sadd.s32 %s46, 1
      %s48 = scalar_select %p45, %s46, %s47
      %p51 = pneg %p45
      %p52 = scmp.eq.s32.totalorder %s20, 5
      %p53 = por %p51, %p52
      %p54 = scmp.ne.s32.totalorder %s46, %s49
      %p55 = scmp.eq.s32.totalorder %s20, 0
      %p56 = por %p54, %p55
      %p57 = scmp.ne.s32.totalorder %s46, %s49
      %p58 = scmp.eq.s32.totalorder %s25, 5
      %p59 = por %p57, %p58
      %p60 = scmp.ne.s32.totalorder %s49, %s50
      %p61 = scmp.eq.s32.totalorder %s25, 0
      %p62 = por %p60, %p61
      %p63 = scmp.ne.s32.totalorder %s49, %s50
      %p64 = scmp.eq.s32.totalorder %s26, 5
      %p65 = por %p63, %p64
      %p67 = scmp.ne.s32.totalorder %s50, %s66
      %p68 = scmp.eq.s32.totalorder %s26, 0
      %p69 = por %p67, %p68
      %s71 = sadd.s32 %s70, 1
      %p74 = scmp.eq.s32.totalorder %s20, 5
      %p75 = scmp.ne.s32.totalorder %s70, %s72
      %p76 = scmp.eq.s32.totalorder %s20, 0
      %p77 = por %p75, %p76
      %p78 = scmp.ne.s32.totalorder %s70, %s72
      %p79 = scmp.eq.s32.totalorder %s25, 5
      %p80 = por %p78, %p79
      %p81 = scmp.ne.s32.totalorder %s72, %s73
      %p82 = scmp.eq.s32.totalorder %s25, 0
      %p83 = por %p81, %p82
      %p84 = scmp.ne.s32.totalorder %s72, %s73
      %p85 = scmp.eq.s32.totalorder %s26, 5
      %p86 = por %p84, %p85
      %p88 = scmp.ne.s32.totalorder %s73, %s87
      %p89 = scmp.eq.s32.totalorder %s26, 0
      %p90 = por %p88, %p89
      %s92 = sadd.s32 %s91, 1
      %p95 = scmp.eq.s32.totalorder %s20, 5
      %p96 = scmp.ne.s32.totalorder %s91, %s93
      %p97 = scmp.eq.s32.totalorder %s20, 0
      %p98 = por %p96, %p97
      %p99 = scmp.ne.s32.totalorder %s91, %s93
      %p100 = scmp.eq.s32.totalorder %s25, 5
      %p101 = por %p99, %p100
      %p102 = scmp.ne.s32.totalorder %s93, %s94
      %p103 = scmp.eq.s32.totalorder %s25, 0
      %p104 = por %p102, %p103
      %p105 = scmp.ne.s32.totalorder %s93, %s94
      %p106 = scmp.eq.s32.totalorder %s26, 5
      %p107 = por %p105, %p106
      %p109 = scmp.ne.s32.totalorder %s94, %s108
      %p110 = scmp.eq.s32.totalorder %s26, 0
      %p111 = por %p109, %p110
      %s113 = sadd.s32 %s112, 1
      %p116 = scmp.eq.s32.totalorder %s20, 5
      %p117 = scmp.ne.s32.totalorder %s112, %s114
      %p118 = scmp.eq.s32.totalorder %s20, 0
      %p119 = por %p117, %p118
      %p120 = scmp.ne.s32.totalorder %s112, %s114
      %p121 = scmp.eq.s32.totalorder %s25, 5
      %p122 = por %p120, %p121
      %p123 = scmp.ne.s32.totalorder %s114, %s115
      %p124 = scmp.eq.s32.totalorder %s25, 0
      %p125 = por %p123, %p124
      %p126 = scmp.ne.s32.totalorder %s114, %s115
      %p127 = scmp.eq.s32.totalorder %s26, 5
      %p128 = por %p126, %p127
      %p130 = scmp.ne.s32.totalorder %s115, %s129
      %p131 = scmp.eq.s32.totalorder %s26, 0
      %p132 = por %p130, %p131
      %s134 = sadd.s32 %s133, 1
      %p137 = scmp.eq.s32.totalorder %s20, 5
      %p138 = scmp.ne.s32.totalorder %s133, %s135
      %p139 = scmp.eq.s32.totalorder %s20, 0
      %p140 = por %p138, %p139
      %p141 = scmp.ne.s32.totalorder %s133, %s135
      %p142 = scmp.eq.s32.totalorder %s25, 5
      %p143 = por %p141, %p142
      %p144 = scmp.ne.s32.totalorder %s135, %s136
      %p145 = scmp.eq.s32.totalorder %s25, 0
      %p146 = por %p144, %p145
      %p147 = scmp.ne.s32.totalorder %s135, %s136
      %p148 = scmp.eq.s32.totalorder %s26, 5
      %p149 = por %p147, %p148
      %p151 = scmp.ne.s32.totalorder %s136, %s150
      %p152 = scmp.eq.s32.totalorder %s26, 0
      %p153 = por %p151, %p152
      %s155 = sadd.s32 %s154, 1
      %p158 = scmp.eq.s32.totalorder %s20, 5
      %p159 = scmp.ne.s32.totalorder %s154, %s156
      %p160 = scmp.eq.s32.totalorder %s20, 0
      %p161 = por %p159, %p160
      %p162 = scmp.ne.s32.totalorder %s154, %s156
      %p163 = scmp.eq.s32.totalorder %s25, 5
      %p164 = por %p162, %p163
      %p165 = scmp.ne.s32.totalorder %s156, %s157
      %p166 = scmp.eq.s32.totalorder %s25, 0
      %p167 = por %p165, %p166
      %p168 = scmp.ne.s32.totalorder %s156, %s157
      %p169 = scmp.eq.s32.totalorder %s26, 5
      %p170 = por %p168, %p169
      %p172 = scmp.ne.s32.totalorder %s157, %s171
      %p173 = scmp.eq.s32.totalorder %s26, 0
      %p174 = por %p172, %p173
      %s176 = sadd.s32 %s175, 1
      %p179 = scmp.eq.s32.totalorder %s20, 5
      %p180 = scmp.ne.s32.totalorder %s175, %s177
      %p181 = scmp.eq.s32.totalorder %s20, 0
      %p182 = por %p180, %p181
      %p183 = scmp.ne.s32.totalorder %s175, %s177
      %p184 = scmp.eq.s32.totalorder %s25, 5
      %p185 = por %p183, %p184
      %p186 = scmp.ne.s32.totalorder %s177, %s178
      %p187 = scmp.eq.s32.totalorder %s25, 0
      %p188 = por %p186, %p187
      %p189 = scmp.ne.s32.totalorder %s177, %s178
      %p190 = scmp.eq.s32.totalorder %s26, 5
      %p191 = por %p189, %p190
      %p193 = scmp.ne.s32.totalorder %s178, %s192
      %p194 = scmp.eq.s32.totalorder %s26, 0
      %p195 = por %p193, %p194
      %p196 = scmp.eq.s32.totalorder %s27, 2
      %s197 = scalar_select %p196, %s28, 0
      %p198 = scmp.eq.s32.totalorder %s39, 2
      %s199 = scalar_select %p198, %s35, 0
      %s200 = ssub.s32 %s197, %s199
      %p201 = scmp.eq.s32.totalorder %s200, 0
      %s203 = sadd.s32 %s202, 1
      %s204 = scalar_select %p201, %s202, %s203
      %p207 = pneg %p201
      %p208 = scmp.eq.s32.totalorder %s20, 5
      %p209 = por %p207, %p208
      %p210 = scmp.ne.s32.totalorder %s202, %s205
      %p211 = scmp.eq.s32.totalorder %s20, 0
      %p212 = por %p210, %p211
      %p213 = scmp.ne.s32.totalorder %s202, %s205
      %p214 = scmp.eq.s32.totalorder %s25, 5
      %p215 = por %p213, %p214
      %p216 = scmp.ne.s32.totalorder %s205, %s206
      %p217 = scmp.eq.s32.totalorder %s25, 0
      %p218 = por %p216, %p217
      %p219 = scmp.ne.s32.totalorder %s205, %s206
      %p220 = scmp.eq.s32.totalorder %s26, 5
      %p221 = por %p219, %p220
      %p223 = scmp.ne.s32.totalorder %s206, %s222
      %p224 = scmp.eq.s32.totalorder %s26, 0
      %p225 = por %p223, %p224
      %p226 = scmp.le.s32.totalorder 1, %s20
      %p227 = scmp.lt.s32.totalorder %s20, 7
      %p228 = pnand %p226, %p227
      %p229 = pneg %p228
      // Predicated region
      $region9: #{tpu_custom_call.1} parent=5 // pred_check
        _
      $region10: #{tpu_custom_call.1} parent=5 // pred_check_branch
        %231 = sbr.rel (%p228) target = $region12
      $region11: #{tpu_custom_call.1} parent=5 // pred_region
        %s232 = ssub.s32 %s20, 1
        // Predicated region
        $region13: #{tpu_custom_call.1} parent=11 // pred_check
          %p233 = pneg %p83
        $region14: #{tpu_custom_call.1} parent=11 // pred_check_branch
          %235 = sbr.rel (%p233) target = $region16
        $region15: #{tpu_custom_call.1} parent=11 // pred_region
          %s237 = ssub.s32 9216, 9216
          %238 = vsyncadd [#allocation14], %s237
          %s239 = sshll.u32 [#allocation13], 4
          %s240 = int_to_ptr.vmem [resolvable:$true] %s239
          %245 = dma.hbm_to_vmem [thread:$0]  %s1, 9216, %s240, [#allocation14], 64, 64, 4
        $region16: #{tpu_custom_call.1} parent=11 // pred_fallthru
          _
        // Predicated region
        $region17: #{tpu_custom_call.1} parent=11 // pred_check
          %p246 = pneg %p104
        $region18: #{tpu_custom_call.1} parent=11 // pred_check_branch
          %248 = sbr.rel (%p246) target = $region20
        $region19: #{tpu_custom_call.1} parent=11 // pred_region
          %s250 = ssub.s32 9216, 9216
          %251 = vsyncadd [#allocation14], %s250
          %s252 = sshll.u32 [#allocation15], 4
          %s253 = int_to_ptr.vmem [resolvable:$true] %s252
          %258 = dma.hbm_to_vmem [thread:$0]  %s2, 9216, %s253, [#allocation14], 64, 64, 4
        $region20: #{tpu_custom_call.1} parent=11 // pred_fallthru
          _
        // Predicated region
        $region21: #{tpu_custom_call.1} parent=11 // pred_check
          %p259 = pneg %p125
        $region22: #{tpu_custom_call.1} parent=11 // pred_check_branch
          %261 = sbr.rel (%p259) target = $region24
        $region23: #{tpu_custom_call.1} parent=11 // pred_region
          _
        $region24: #{tpu_custom_call.1} parent=11 // pred_fallthru
          _
        // Predicated region
        $region25: #{tpu_custom_call.1} parent=11 // pred_check
          %p262 = pneg %p146
        $region26: #{tpu_custom_call.1} parent=11 // pred_check_branch
          %264 = sbr.rel (%p262) target = $region28
        $region27: #{tpu_custom_call.1} parent=11 // pred_region
          _
        $region28: #{tpu_custom_call.1} parent=11 // pred_fallthru
          _
        // Predicated region
        $region29: #{tpu_custom_call.1} parent=11 // pred_check
          %p265 = pneg %p167
        $region30: #{tpu_custom_call.1} parent=11 // pred_check_branch
          %267 = sbr.rel (%p265) target = $region32
        $region31: #{tpu_custom_call.1} parent=11 // pred_region
          _
        $region32: #{tpu_custom_call.1} parent=11 // pred_fallthru
          _
        // Predicated region
        $region33: #{tpu_custom_call.1} parent=11 // pred_check
          %p268 = pneg %p188
        $region34: #{tpu_custom_call.1} parent=11 // pred_check_branch
          %270 = sbr.rel (%p268) target = $region36
        $region35: #{tpu_custom_call.1} parent=11 // pred_region
          _
        $region36: #{tpu_custom_call.1} parent=11 // pred_fallthru
          _
      $region12: #{tpu_custom_call.1} parent=5 // pred_fallthru
        _
      %p271 = scmp.lt.s32.totalorder %s20, 6
      // Predicated region
      $region37: #{tpu_custom_call.1} parent=5 // pred_check
        %p272 = pneg %p271
      $region38: #{tpu_custom_call.1} parent=5 // pred_check_branch
        %274 = sbr.rel (%p272) target = $region40
      $region39: #{tpu_custom_call.1} parent=5 // pred_region
        // Predicated region
        $region41: #{tpu_custom_call.1} parent=39 // pred_check
          %p275 = pneg %p56
        $region42: #{tpu_custom_call.1} parent=39 // pred_check_branch
          %277 = sbr.rel (%p275) target = $region44
        $region43: #{tpu_custom_call.1} parent=39 // pred_region
          %s278 = sand.u32 %s46, 1
          %s279 = scalar_lea.sflag [#allocation11], %s278
          %s280 = sand.u32 %s46, 1
          %s281 = smul.addr %s280, 256
          %s282 = scalar_lea.vmem [#allocation10], %s281
          %p283 = scmp.eq.s32.totalorder %s27, 0
          %s284 = scalar_select %p283, %s28, 0
          %s286 = ssub.s32 4096, 4096
          %287 = vsyncadd %s279, %s286
          %s288 = smul.addr %s284, 32
          %s289 = smul.addr %s288, 128
          %s290 = scalar_lea.hbm %s0, %s289
          %s291 = sshll.u32 %s282, 4
          %s292 = int_to_ptr.vmem [resolvable:$true] %s291
          %297 = dma.hbm_to_vmem [thread:$0]  %s290, 4096, %s292, %s279, 128, 128, 8
        $region44: #{tpu_custom_call.1} parent=39 // pred_fallthru
          _
      $region40: #{tpu_custom_call.1} parent=5 // pred_fallthru
        _
      %p298 = scmp.le.s32.totalorder 1, %s20
      %p299 = scmp.lt.s32.totalorder %s20, 7
      %p300 = pnand %p298, %p299
      %p301 = pneg %p300
      // Predicated region
      $region45: #{tpu_custom_call.1} parent=5 // pred_check
        _
      $region46: #{tpu_custom_call.1} parent=5 // pred_check_branch
        %303 = sbr.rel (%p300) target = $region48
      $region47: #{tpu_custom_call.1} parent=5 // pred_region
        %s304 = ssub.s32 %s20, 1
        %s305 = sand.u32 %s49, 1
        %s306 = scalar_lea.sflag [#allocation11], %s305
        %s307 = sand.u32 %s49, 1
        %s308 = smul.addr %s307, 256
        %s309 = scalar_lea.vmem [#allocation10], %s308
        // Predicated region
        $region49: #{tpu_custom_call.1} parent=47 // pred_check
          %p310 = pneg %p62
        $region50: #{tpu_custom_call.1} parent=47 // pred_check_branch
          %312 = sbr.rel (%p310) target = $region52
        $region51: #{tpu_custom_call.1} parent=47 // pred_region
          %313 = dma.done %s306, 4096
        $region52: #{tpu_custom_call.1} parent=47 // pred_fallthru
          _
        // Predicated region
        $region53: #{tpu_custom_call.1} parent=47 // pred_check
          %p314 = pneg %p83
        $region54: #{tpu_custom_call.1} parent=47 // pred_check_branch
          %316 = sbr.rel (%p314) target = $region56
        $region55: #{tpu_custom_call.1} parent=47 // pred_region
          %317 = dma.done [#allocation14], 9216
        $region56: #{tpu_custom_call.1} parent=47 // pred_fallthru
          _
        // Predicated region
        $region57: #{tpu_custom_call.1} parent=47 // pred_check
          %p318 = pneg %p104
        $region58: #{tpu_custom_call.1} parent=47 // pred_check_branch
          %320 = sbr.rel (%p318) target = $region60
        $region59: #{tpu_custom_call.1} parent=47 // pred_region
          %321 = dma.done [#allocation14], 9216
        $region60: #{tpu_custom_call.1} parent=47 // pred_fallthru
          _
        %s322 = sand.u32 %s49, 1
        %s323 = scalar_lea.sflag [#allocation11], %s322
        %s324 = sand.u32 %s49, 1
        %s325 = smul.addr %s324, 256
        %s326 = scalar_lea.vmem [#allocation10], %s325
        %p327 = pneg %p62
        %p328 = pneg %p59
        %p329 = pneg %p83
        %p330 = pneg %p80
        %p331 = pneg %p104
        %p332 = pneg %p101
        %p333 = pneg %p125
        %p334 = pneg %p122
        %p335 = pneg %p146
        %p336 = pneg %p143
        %p337 = pneg %p167
        %p338 = pneg %p164
        %p339 = pneg %p188
        %p340 = pneg %p185
        %p341 = pneg %p218
        %p342 = pneg %p215
        %s343 = sand.u32 %s205, 1
        %s344 = scalar_lea.sflag [#allocation12], %s343
        %s345 = sand.u32 %s205, 1
        %s346 = smul.addr %s345, 64
        %s347 = scalar_lea.vmem [#allocation16], %s346
        %p348 = scmp.eq.s32.totalorder %s29, 0
        %s349 = scalar_select %p348, %s30, 0
        %p350 = scmp.eq.s32.totalorder %s29, 2
        %s351 = scalar_select %p350, %s30, 0
        %p353 = scmp.eq.s32.totalorder %s29, 0
        %p354 = scmp.eq.s32.totalorder %s30, 0
        %p355 = pnand %p353, %p354
        %p356 = pneg %p355
        // Predicated region
        $region61: #{tpu_custom_call.1} parent=47 // pred_check
          _
        $region62: #{tpu_custom_call.1} parent=47 // pred_check_branch
          %358 = sbr.rel (%p355) target = $region64
        $region63: #{tpu_custom_call.1} parent=47 // pred_region
          %359 = vst [vmem:[#allocation2] sm:$0xff] 0.0
          %360 = vst [vmem:[#allocation2 + $0x8] sm:$0x3] 0.0
          %361 = vst [vmem:[#allocation2 + $0x10] sm:$0xff] 0.0
          %362 = vst [vmem:[#allocation2 + $0x18] sm:$0x3] 0.0
          %363 = vst [vmem:[#allocation2 + $0x20] sm:$0xff] 0.0
          %364 = vst [vmem:[#allocation2 + $0x28] sm:$0x3] 0.0
          %365 = vst [vmem:[#allocation2 + $0x30] sm:$0xff] 0.0
          %366 = vst [vmem:[#allocation2 + $0x38] sm:$0x3] 0.0
          %367 = vst [vmem:[#allocation2 + $0x40] sm:$0xff] 0.0
          %368 = vst [vmem:[#allocation2 + $0x48] sm:$0x3] 0.0
          %369 = vst [vmem:[#allocation2 + $0x50] sm:$0xff] 0.0
          %370 = vst [vmem:[#allocation2 + $0x58] sm:$0x3] 0.0
          %371 = vst [vmem:[#allocation2 + $0x60] sm:$0xff] 0.0
          %372 = vst [vmem:[#allocation2 + $0x68] sm:$0x3] 0.0
          %373 = vst [vmem:[#allocation2 + $0x70] sm:$0xff] 0.0
          %374 = vst [vmem:[#allocation2 + $0x78] sm:$0x3] 0.0
          %375 = vst [vmem:[#allocation2 + $0x80] sm:$0xff] 0.0
          %376 = vst [vmem:[#allocation2 + $0x88] sm:$0x3] 0.0
          %377 = vst [vmem:[#allocation2 + $0x90] sm:$0xff] 0.0
          %378 = vst [vmem:[#allocation2 + $0x98] sm:$0x3] 0.0
          %379 = vst [vmem:[#allocation3] sm:$0xff] 0.0
          %380 = vst [vmem:[#allocation3 + $0x8] sm:$0x3] 0.0
          %381 = vst [vmem:[#allocation3 + $0x10] sm:$0xff] 0.0
          %382 = vst [vmem:[#allocation3 + $0x18] sm:$0x3] 0.0
          %383 = vst [vmem:[#allocation3 + $0x20] sm:$0xff] 0.0
          %384 = vst [vmem:[#allocation3 + $0x28] sm:$0x3] 0.0
          %385 = vst [vmem:[#allocation3 + $0x30] sm:$0xff] 0.0
          %386 = vst [vmem:[#allocation3 + $0x38] sm:$0x3] 0.0
          %387 = vst [vmem:[#allocation3 + $0x40] sm:$0xff] 0.0
          %388 = vst [vmem:[#allocation3 + $0x48] sm:$0x3] 0.0
          %389 = vst [vmem:[#allocation3 + $0x50] sm:$0xff] 0.0
          %390 = vst [vmem:[#allocation3 + $0x58] sm:$0x3] 0.0
          %391 = vst [vmem:[#allocation3 + $0x60] sm:$0xff] 0.0
          %392 = vst [vmem:[#allocation3 + $0x68] sm:$0x3] 0.0
          %393 = vst [vmem:[#allocation3 + $0x70] sm:$0xff] 0.0
          %394 = vst [vmem:[#allocation3 + $0x78] sm:$0x3] 0.0
          %395 = vst [vmem:[#allocation3 + $0x80] sm:$0xff] 0.0
          %396 = vst [vmem:[#allocation3 + $0x88] sm:$0x3] 0.0
          %397 = vst [vmem:[#allocation3 + $0x90] sm:$0xff] 0.0
          %398 = vst [vmem:[#allocation3 + $0x98] sm:$0x3] 0.0
          %399 = vst [vmem:[#allocation6] sm:$0x1] 0.0
          %400 = vst [vmem:[#allocation7] sm:$0x1] 0.0
          %401 = vst [vmem:[#allocation8] sm:$0x1] 0.0
          %402 = vst [vmem:[#allocation9] sm:$0x1] 0.0
        $region64: #{tpu_custom_call.1} parent=47 // pred_fallthru
          _
        // Predicated region
        $region65: #{tpu_custom_call.1} parent=47 // pred_check
          %p403 = pneg %p353
        $region66: #{tpu_custom_call.1} parent=47 // pred_check_branch
          %405 = sbr.rel (%p403) target = $region68
        $region67: #{tpu_custom_call.1} parent=47 // pred_region
          %v406 = vld [vmem:[%s309] ss:$2 sm:$0xff]
          %s407 = scalar_lea.vmem %s309, 32 [#allocation10]
          %v408 = vld [vmem:[%s407] ss:$2 sm:$0xff]
          %s409 = scalar_lea.vmem %s309, 64 [#allocation10]
          %v410 = vld [vmem:[%s409] ss:$2 sm:$0xff]
          %s411 = scalar_lea.vmem %s309, 96 [#allocation10]
          %v412 = vld [vmem:[%s411] ss:$2 sm:$0xff]
          %s413 = scalar_lea.vmem %s309, 128 [#allocation10]
          %v414 = vld [vmem:[%s413] ss:$2 sm:$0xff]
          %s415 = scalar_lea.vmem %s309, 160 [#allocation10]
          %v416 = vld [vmem:[%s415] ss:$2 sm:$0xff]
          %s417 = scalar_lea.vmem %s309, 192 [#allocation10]
          %v418 = vld [vmem:[%s417] ss:$2 sm:$0xff]
          %s419 = scalar_lea.vmem %s309, 224 [#allocation10]
          %v420 = vld [vmem:[%s419] ss:$2 sm:$0xff]
          %s421 = scalar_lea.vmem %s309, 1 [#allocation10]
          %v422 = vld [vmem:[%s421] ss:$2 sm:$0xff]
          %s423 = scalar_lea.vmem %s309, 33 [#allocation10]
          %v424 = vld [vmem:[%s423] ss:$2 sm:$0xff]
          %s425 = scalar_lea.vmem %s309, 65 [#allocation10]
          %v426 = vld [vmem:[%s425] ss:$2 sm:$0xff]
          %s427 = scalar_lea.vmem %s309, 97 [#allocation10]
          %v428 = vld [vmem:[%s427] ss:$2 sm:$0xff]
          %s429 = scalar_lea.vmem %s309, 129 [#allocation10]
          %v430 = vld [vmem:[%s429] ss:$2 sm:$0xff]
          %s431 = scalar_lea.vmem %s309, 161 [#allocation10]
          %v432 = vld [vmem:[%s431] ss:$2 sm:$0xff]
          %s433 = scalar_lea.vmem %s309, 193 [#allocation10]
          %v434 = vld [vmem:[%s433] ss:$2 sm:$0xff]
          %s435 = scalar_lea.vmem %s309, 225 [#allocation10]
          %v436 = vld [vmem:[%s435] ss:$2 sm:$0xff]
          %s437 = scalar_lea.vmem %s309, 16 [#allocation10]
          %v438 = vld [vmem:[%s437] ss:$2 sm:$0xff]
          %s439 = scalar_lea.vmem %s437, 32 [#allocation10]
          %v440 = vld [vmem:[%s439] ss:$2 sm:$0xff]
          %s441 = scalar_lea.vmem %s437, 64 [#allocation10]
          %v442 = vld [vmem:[%s441] ss:$2 sm:$0xff]
          %s443 = scalar_lea.vmem %s437, 96 [#allocation10]
          %v444 = vld [vmem:[%s443] ss:$2 sm:$0xff]
          %s445 = scalar_lea.vmem %s437, 128 [#allocation10]
          %v446 = vld [vmem:[%s445] ss:$2 sm:$0xff]
          %s447 = scalar_lea.vmem %s437, 160 [#allocation10]
          %v448 = vld [vmem:[%s447] ss:$2 sm:$0xff]
          %s449 = scalar_lea.vmem %s437, 192 [#allocation10]
          %v450 = vld [vmem:[%s449] ss:$2 sm:$0xff]
          %s451 = scalar_lea.vmem %s437, 224 [#allocation10]
          %v452 = vld [vmem:[%s451] ss:$2 sm:$0xff]
          %s453 = scalar_lea.vmem %s437, 1 [#allocation10]
          %v454 = vld [vmem:[%s453] ss:$2 sm:$0xff]
          %s455 = scalar_lea.vmem %s437, 33 [#allocation10]
          %v456 = vld [vmem:[%s455] ss:$2 sm:$0xff]
          %s457 = scalar_lea.vmem %s437, 65 [#allocation10]
          %v458 = vld [vmem:[%s457] ss:$2 sm:$0xff]
          %s459 = scalar_lea.vmem %s437, 97 [#allocation10]
          %v460 = vld [vmem:[%s459] ss:$2 sm:$0xff]
          %s461 = scalar_lea.vmem %s437, 129 [#allocation10]
          %v462 = vld [vmem:[%s461] ss:$2 sm:$0xff]
          %s463 = scalar_lea.vmem %s437, 161 [#allocation10]
          %v464 = vld [vmem:[%s463] ss:$2 sm:$0xff]
          %s465 = scalar_lea.vmem %s437, 193 [#allocation10]
          %v466 = vld [vmem:[%s465] ss:$2 sm:$0xff]
          %s467 = scalar_lea.vmem %s437, 225 [#allocation10]
          %v468 = vld [vmem:[%s467] ss:$2 sm:$0xff]
          %v469 = vmax.f32 %v406, %v422
          %v470 = vmax.f32 %v408, %v424
          %v471 = vmax.f32 %v410, %v426
          %v472 = vmax.f32 %v412, %v428
          %v473 = vmax.f32 %v414, %v430
          %v474 = vmax.f32 %v416, %v432
          %v475 = vmax.f32 %v418, %v434
          %v476 = vmax.f32 %v420, %v436
          %v477 = vmax.f32 %v438, %v454
          %v478 = vmax.f32 %v440, %v456
          %v479 = vmax.f32 %v442, %v458
          %v480 = vmax.f32 %v444, %v460
          %v481 = vmax.f32 %v446, %v462
          %v482 = vmax.f32 %v448, %v464
          %v483 = vmax.f32 %v450, %v466
          %v484 = vmax.f32 %v452, %v468
          %v485 = vmax.f32 %v469, %v477
          %v486 = vmax.f32 %v470, %v478
          %v487 = vmax.f32 %v471, %v479
          %v488 = vmax.f32 %v472, %v480
          %v489 = vmax.f32 %v473, %v481
          %v490 = vmax.f32 %v474, %v482
          %v491 = vmax.f32 %v475, %v483
          %v492 = vmax.f32 %v476, %v484
          %s493 = scalar_lea.vmem [#allocation2], 16
          %494 = vst [vmem:[%s493 + $0x1] sm:$0xff] %v485
          %495 = vst [vmem:[%s493 + $0x11] sm:$0xff] %v486
          %496 = vst [vmem:[%s493 + $0x21] sm:$0xff] %v487
          %497 = vst [vmem:[%s493 + $0x31] sm:$0xff] %v488
          %498 = vst [vmem:[%s493 + $0x41] sm:$0xff] %v489
          %499 = vst [vmem:[%s493 + $0x51] sm:$0xff] %v490
          %500 = vst [vmem:[%s493 + $0x61] sm:$0xff] %v491
          %501 = vst [vmem:[%s493 + $0x71] sm:$0xff] %v492
          %v502 = vld [vmem:[#allocation2] sm:$0xff]
          %v503 = vld [vmem:[#allocation2 + $0x10] sm:$0xff]
          %v504 = vld [vmem:[#allocation2 + $0x20] sm:$0xff]
          %v505 = vld [vmem:[#allocation2 + $0x30] sm:$0xff]
          %v506 = vld [vmem:[#allocation2 + $0x40] sm:$0xff]
          %v507 = vld [vmem:[#allocation2 + $0x50] sm:$0xff]
          %v508 = vld [vmem:[#allocation2 + $0x60] sm:$0xff]
          %v509 = vld [vmem:[#allocation2 + $0x70] sm:$0xff]
          %v510 = vld [vmem:[#allocation2 + $0x1] sm:$0xff]
          %v511 = vld [vmem:[#allocation2 + $0x11] sm:$0xff]
          %v512 = vld [vmem:[#allocation2 + $0x21] sm:$0xff]
          %v513 = vld [vmem:[#allocation2 + $0x31] sm:$0xff]
          %v514 = vld [vmem:[#allocation2 + $0x41] sm:$0xff]
          %v515 = vld [vmem:[#allocation2 + $0x51] sm:$0xff]
          %v516 = vld [vmem:[#allocation2 + $0x61] sm:$0xff]
          %v517 = vld [vmem:[#allocation2 + $0x71] sm:$0xff]
          %v518 = vld [vmem:[#allocation2 + $0x2] sm:$0xff]
          %v519 = vld [vmem:[#allocation2 + $0x12] sm:$0xff]
          %v520 = vld [vmem:[#allocation2 + $0x22] sm:$0xff]
          %v521 = vld [vmem:[#allocation2 + $0x32] sm:$0xff]
          %v522 = vld [vmem:[#allocation2 + $0x42] sm:$0xff]
          %v523 = vld [vmem:[#allocation2 + $0x52] sm:$0xff]
          %v524 = vld [vmem:[#allocation2 + $0x62] sm:$0xff]
          %v525 = vld [vmem:[#allocation2 + $0x72] sm:$0xff]
          %v526 = vld [vmem:[%s493] sm:$0xff]
          %v527 = vld [vmem:[%s493 + $0x10] sm:$0xff]
          %v528 = vld [vmem:[%s493 + $0x20] sm:$0xff]
          %v529 = vld [vmem:[%s493 + $0x30] sm:$0xff]
          %v530 = vld [vmem:[%s493 + $0x40] sm:$0xff]
          %v531 = vld [vmem:[%s493 + $0x50] sm:$0xff]
          %v532 = vld [vmem:[%s493 + $0x60] sm:$0xff]
          %v533 = vld [vmem:[%s493 + $0x70] sm:$0xff]
          %v534 = vld [vmem:[%s493 + $0x1] sm:$0xff]
          %v535 = vld [vmem:[%s493 + $0x11] sm:$0xff]
          %v536 = vld [vmem:[%s493 + $0x21] sm:$0xff]
          %v537 = vld [vmem:[%s493 + $0x31] sm:$0xff]
          %v538 = vld [vmem:[%s493 + $0x41] sm:$0xff]
          %v539 = vld [vmem:[%s493 + $0x51] sm:$0xff]
          %v540 = vld [vmem:[%s493 + $0x61] sm:$0xff]
          %v541 = vld [vmem:[%s493 + $0x71] sm:$0xff]
          %v542 = vld [vmem:[%s493 + $0x2] sm:$0xff]
          %v543 = vld [vmem:[%s493 + $0x12] sm:$0xff]
          %v544 = vld [vmem:[%s493 + $0x22] sm:$0xff]
          %v545 = vld [vmem:[%s493 + $0x32] sm:$0xff]
          %v546 = vld [vmem:[%s493 + $0x42] sm:$0xff]
          %v547 = vld [vmem:[%s493 + $0x52] sm:$0xff]
          %v548 = vld [vmem:[%s493 + $0x62] sm:$0xff]
          %v549 = vld [vmem:[%s493 + $0x72] sm:$0xff]
          %s550 = scalar_lea.vmem [#allocation2], 32
          %v551 = vld [vmem:[%s550] sm:$0xff]
          %v552 = vld [vmem:[%s550 + $0x10] sm:$0xff]
          %v553 = vld [vmem:[%s550 + $0x20] sm:$0xff]
          %v554 = vld [vmem:[%s550 + $0x30] sm:$0xff]
          %v555 = vld [vmem:[%s550 + $0x40] sm:$0xff]
          %v556 = vld [vmem:[%s550 + $0x50] sm:$0xff]
          %v557 = vld [vmem:[%s550 + $0x60] sm:$0xff]
          %v558 = vld [vmem:[%s550 + $0x70] sm:$0xff]
          %v559 = vld [vmem:[%s550 + $0x1] sm:$0xff]
          %v560 = vld [vmem:[%s550 + $0x11] sm:$0xff]
          %v561 = vld [vmem:[%s550 + $0x21] sm:$0xff]
          %v562 = vld [vmem:[%s550 + $0x31] sm:$0xff]
          %v563 = vld [vmem:[%s550 + $0x41] sm:$0xff]
          %v564 = vld [vmem:[%s550 + $0x51] sm:$0xff]
          %v565 = vld [vmem:[%s550 + $0x61] sm:$0xff]
          %v566 = vld [vmem:[%s550 + $0x71] sm:$0xff]
          %v567 = vld [vmem:[%s550 + $0x2] sm:$0xff]
          %v568 = vld [vmem:[%s550 + $0x12] sm:$0xff]
          %v569 = vld [vmem:[%s550 + $0x22] sm:$0xff]
          %v570 = vld [vmem:[%s550 + $0x32] sm:$0xff]
          %v571 = vld [vmem:[%s550 + $0x42] sm:$0xff]
          %v572 = vld [vmem:[%s550 + $0x52] sm:$0xff]
          %v573 = vld [vmem:[%s550 + $0x62] sm:$0xff]
          %v574 = vld [vmem:[%s550 + $0x72] sm:$0xff]
          %v575 = vpack.c.bf16 %v503, %v502
          %v576 = vpack.c.bf16 %v511, %v510
          %v577 = vpack.c.bf16 %v519, %v518
          %v578 = vpack.c.bf16 %v527, %v526
          %v579 = vpack.c.bf16 %v535, %v534
          %v580 = vpack.c.bf16 %v543, %v542
          %v581 = vpack.c.bf16 %v552, %v551
          %v582 = vpack.c.bf16 %v560, %v559
          %v583 = vpack.c.bf16 %v568, %v567
          %v584 = vpack.c.bf16 %v505, %v504
          %v585 = vpack.c.bf16 %v513, %v512
          %v586 = vpack.c.bf16 %v521, %v520
          %v587 = vpack.c.bf16 %v529, %v528
          %v588 = vpack.c.bf16 %v537, %v536
          %v589 = vpack.c.bf16 %v545, %v544
          %v590 = vpack.c.bf16 %v554, %v553
          %v591 = vpack.c.bf16 %v562, %v561
          %v592 = vpack.c.bf16 %v570, %v569
          %v593 = vpack.c.bf16 %v507, %v506
          %v594 = vpack.c.bf16 %v515, %v514
          %v595 = vpack.c.bf16 %v523, %v522
          %v596 = vpack.c.bf16 %v531, %v530
          %v597 = vpack.c.bf16 %v539, %v538
          %v598 = vpack.c.bf16 %v547, %v546
          %v599 = vpack.c.bf16 %v556, %v555
          %v600 = vpack.c.bf16 %v564, %v563
          %v601 = vpack.c.bf16 %v572, %v571
          %v602 = vpack.c.bf16 %v509, %v508
          %v603 = vpack.c.bf16 %v517, %v516
          %v604 = vpack.c.bf16 %v525, %v524
          %v605 = vpack.c.bf16 %v533, %v532
          %v606 = vpack.c.bf16 %v541, %v540
          %v607 = vpack.c.bf16 %v549, %v548
          %v608 = vpack.c.bf16 %v558, %v557
          %v609 = vpack.c.bf16 %v566, %v565
          %v610 = vpack.c.bf16 %v574, %v573
          %v611 = vld [vmem:[#allocation13] sm:$0xf]
          %v612 = vld [vmem:[#allocation13 + $0x4] sm:$0xf]
          %v613 = vld [vmem:[#allocation13 + $0x8] sm:$0xf]
          %v614 = vld [vmem:[#allocation13 + $0xc] sm:$0xf]
          %v615 = vld [vmem:[#allocation13 + $0x10] sm:$0xf]
          %v616 = vld [vmem:[#allocation13 + $0x14] sm:$0xf]
          %v617 = vld [vmem:[#allocation13 + $0x18] sm:$0xf]
          %v618 = vld [vmem:[#allocation13 + $0x1c] sm:$0xf]
          %v619 = vld [vmem:[#allocation13 + $0x20] sm:$0xf]
          %v620 = vld [vmem:[#allocation13 + $0x24] sm:$0xf]
          %v621 = vld [vmem:[#allocation13 + $0x28] sm:$0xf]
          %v622 = vld [vmem:[#allocation13 + $0x2c] sm:$0xf]
          %v623 = vld [vmem:[#allocation13 + $0x30] sm:$0xf]
          %v624 = vld [vmem:[#allocation13 + $0x34] sm:$0xf]
          %v625 = vld [vmem:[#allocation13 + $0x38] sm:$0xf]
          %v626 = vld [vmem:[#allocation13 + $0x3c] sm:$0xf]
          %v627 = vld [vmem:[#allocation13 + $0x40] sm:$0xf]
          %v628 = vld [vmem:[#allocation13 + $0x44] sm:$0xf]
          %v629 = vld [vmem:[#allocation13 + $0x48] sm:$0xf]
          %v630 = vld [vmem:[#allocation13 + $0x4c] sm:$0xf]
          %v631 = vld [vmem:[#allocation13 + $0x50] sm:$0xf]
          %v632 = vld [vmem:[#allocation13 + $0x54] sm:$0xf]
          %v633 = vld [vmem:[#allocation13 + $0x58] sm:$0xf]
          %v634 = vld [vmem:[#allocation13 + $0x5c] sm:$0xf]
          %v635 = vld [vmem:[#allocation13 + $0x60] sm:$0xf]
          %v636 = vld [vmem:[#allocation13 + $0x64] sm:$0xf]
          %v637 = vld [vmem:[#allocation13 + $0x68] sm:$0xf]
          %v638 = vld [vmem:[#allocation13 + $0x6c] sm:$0xf]
          %v639 = vld [vmem:[#allocation13 + $0x70] sm:$0xf]
          %v640 = vld [vmem:[#allocation13 + $0x74] sm:$0xf]
          %v641 = vld [vmem:[#allocation13 + $0x78] sm:$0xf]
          %v642 = vld [vmem:[#allocation13 + $0x7c] sm:$0xf]
          %v643 = vld [vmem:[#allocation13 + $0x80] sm:$0xf]
          %v644 = vld [vmem:[#allocation13 + $0x84] sm:$0xf]
          %v645 = vld [vmem:[#allocation13 + $0x88] sm:$0xf]
          %v646 = vld [vmem:[#allocation13 + $0x8c] sm:$0xf]
          %v647 = vld [vmem:[#allocation13 + $0x90] sm:$0xf]
          %v648 = vld [vmem:[#allocation13 + $0x94] sm:$0xf]
          %v649 = vld [vmem:[#allocation13 + $0x98] sm:$0xf]
          %v650 = vld [vmem:[#allocation13 + $0x9c] sm:$0xf]
          %v651 = vld [vmem:[#allocation13 + $0xa0] sm:$0xf]
          %v652 = vld [vmem:[#allocation13 + $0xa4] sm:$0xf]
          %v653 = vld [vmem:[#allocation13 + $0xa8] sm:$0xf]
          %v654 = vld [vmem:[#allocation13 + $0xac] sm:$0xf]
          %v655 = vld [vmem:[#allocation13 + $0xb0] sm:$0xf]
          %v656 = vld [vmem:[#allocation13 + $0xb4] sm:$0xf]
          %v657 = vld [vmem:[#allocation13 + $0xb8] sm:$0xf]
          %v658 = vld [vmem:[#allocation13 + $0xbc] sm:$0xf]
          %v659 = vld [vmem:[#allocation13 + $0xc0] sm:$0xf]
          %v660 = vld [vmem:[#allocation13 + $0xc4] sm:$0xf]
          %v661 = vld [vmem:[#allocation13 + $0xc8] sm:$0xf]
          %v662 = vld [vmem:[#allocation13 + $0xcc] sm:$0xf]
          %v663 = vld [vmem:[#allocation13 + $0xd0] sm:$0xf]
          %v664 = vld [vmem:[#allocation13 + $0xd4] sm:$0xf]
          %v665 = vld [vmem:[#allocation13 + $0xd8] sm:$0xf]
          %v666 = vld [vmem:[#allocation13 + $0xdc] sm:$0xf]
          %v667 = vld [vmem:[#allocation13 + $0xe0] sm:$0xf]
          %v668 = vld [vmem:[#allocation13 + $0xe4] sm:$0xf]
          %v669 = vld [vmem:[#allocation13 + $0xe8] sm:$0xf]
          %v670 = vld [vmem:[#allocation13 + $0xec] sm:$0xf]
          %v671 = vld [vmem:[#allocation13 + $0xf0] sm:$0xf]
          %v672 = vld [vmem:[#allocation13 + $0xf4] sm:$0xf]
          %v673 = vld [vmem:[#allocation13 + $0xf8] sm:$0xf]
          %v674 = vld [vmem:[#allocation13 + $0xfc] sm:$0xf]
          %v675 = vld [vmem:[#allocation13 + $0x100] sm:$0xf]
          %v676 = vld [vmem:[#allocation13 + $0x104] sm:$0xf]
          %v677 = vld [vmem:[#allocation13 + $0x108] sm:$0xf]
          %v678 = vld [vmem:[#allocation13 + $0x10c] sm:$0xf]
          %v679 = vld [vmem:[#allocation13 + $0x110] sm:$0xf]
          %v680 = vld [vmem:[#allocation13 + $0x114] sm:$0xf]
          %v681 = vld [vmem:[#allocation13 + $0x118] sm:$0xf]
          %v682 = vld [vmem:[#allocation13 + $0x11c] sm:$0xf]
          %v683 = vld [vmem:[#allocation13 + $0x120] sm:$0xf]
          %v684 = vld [vmem:[#allocation13 + $0x124] sm:$0xf]
          %v685 = vld [vmem:[#allocation13 + $0x128] sm:$0xf]
          %v686 = vld [vmem:[#allocation13 + $0x12c] sm:$0xf]
          %v687 = vld [vmem:[#allocation13 + $0x130] sm:$0xf]
          %v688 = vld [vmem:[#allocation13 + $0x134] sm:$0xf]
          %v689 = vld [vmem:[#allocation13 + $0x138] sm:$0xf]
          %v690 = vld [vmem:[#allocation13 + $0x13c] sm:$0xf]
          %v691 = vld [vmem:[#allocation13 + $0x140] sm:$0xf]
          %v692 = vld [vmem:[#allocation13 + $0x144] sm:$0xf]
          %v693 = vld [vmem:[#allocation13 + $0x148] sm:$0xf]
          %v694 = vld [vmem:[#allocation13 + $0x14c] sm:$0xf]
          %v695 = vld [vmem:[#allocation13 + $0x150] sm:$0xf]
          %v696 = vld [vmem:[#allocation13 + $0x154] sm:$0xf]
          %v697 = vld [vmem:[#allocation13 + $0x158] sm:$0xf]
          %v698 = vld [vmem:[#allocation13 + $0x15c] sm:$0xf]
          %v699 = vld [vmem:[#allocation13 + $0x160] sm:$0xf]
          %v700 = vld [vmem:[#allocation13 + $0x164] sm:$0xf]
          %v701 = vld [vmem:[#allocation13 + $0x168] sm:$0xf]
          %v702 = vld [vmem:[#allocation13 + $0x16c] sm:$0xf]
          %v703 = vld [vmem:[#allocation13 + $0x170] sm:$0xf]
          %v704 = vld [vmem:[#allocation13 + $0x174] sm:$0xf]
          %v705 = vld [vmem:[#allocation13 + $0x178] sm:$0xf]
          %v706 = vld [vmem:[#allocation13 + $0x17c] sm:$0xf]
          %v707 = vld [vmem:[#allocation13 + $0x180] sm:$0xf]
          %v708 = vld [vmem:[#allocation13 + $0x184] sm:$0xf]
          %v709 = vld [vmem:[#allocation13 + $0x188] sm:$0xf]
          %v710 = vld [vmem:[#allocation13 + $0x18c] sm:$0xf]
          %v711 = vld [vmem:[#allocation13 + $0x190] sm:$0xf]
          %v712 = vld [vmem:[#allocation13 + $0x194] sm:$0xf]
          %v713 = vld [vmem:[#allocation13 + $0x198] sm:$0xf]
          %v714 = vld [vmem:[#allocation13 + $0x19c] sm:$0xf]
          %v715 = vld [vmem:[#allocation13 + $0x1a0] sm:$0xf]
          %v716 = vld [vmem:[#allocation13 + $0x1a4] sm:$0xf]
          %v717 = vld [vmem:[#allocation13 + $0x1a8] sm:$0xf]
          %v718 = vld [vmem:[#allocation13 + $0x1ac] sm:$0xf]
          %v719 = vld [vmem:[#allocation13 + $0x1b0] sm:$0xf]
          %v720 = vld [vmem:[#allocation13 + $0x1b4] sm:$0xf]
          %v721 = vld [vmem:[#allocation13 + $0x1b8] sm:$0xf]
          %v722 = vld [vmem:[#allocation13 + $0x1bc] sm:$0xf]
          %v723 = vld [vmem:[#allocation13 + $0x1c0] sm:$0xf]
          %v724 = vld [vmem:[#allocation13 + $0x1c4] sm:$0xf]
          %v725 = vld [vmem:[#allocation13 + $0x1c8] sm:$0xf]
          %v726 = vld [vmem:[#allocation13 + $0x1cc] sm:$0xf]
          %v727 = vld [vmem:[#allocation13 + $0x1d0] sm:$0xf]
          %v728 = vld [vmem:[#allocation13 + $0x1d4] sm:$0xf]
          %v729 = vld [vmem:[#allocation13 + $0x1d8] sm:$0xf]
          %v730 = vld [vmem:[#allocation13 + $0x1dc] sm:$0xf]
          %v731 = vld [vmem:[#allocation13 + $0x1e0] sm:$0xf]
          %v732 = vld [vmem:[#allocation13 + $0x1e4] sm:$0xf]
          %v733 = vld [vmem:[#allocation13 + $0x1e8] sm:$0xf]
          %v734 = vld [vmem:[#allocation13 + $0x1ec] sm:$0xf]
          %v735 = vld [vmem:[#allocation13 + $0x1f0] sm:$0xf]
          %v736 = vld [vmem:[#allocation13 + $0x1f4] sm:$0xf]
          %v737 = vld [vmem:[#allocation13 + $0x1f8] sm:$0xf]
          %v738 = vld [vmem:[#allocation13 + $0x1fc] sm:$0xf]
          %v739 = vld [vmem:[#allocation13 + $0x200] sm:$0xf]
          %v740 = vld [vmem:[#allocation13 + $0x204] sm:$0xf]
          %v741 = vld [vmem:[#allocation13 + $0x208] sm:$0xf]
          %v742 = vld [vmem:[#allocation13 + $0x20c] sm:$0xf]
          %v743 = vld [vmem:[#allocation13 + $0x210] sm:$0xf]
          %v744 = vld [vmem:[#allocation13 + $0x214] sm:$0xf]
          %v745 = vld [vmem:[#allocation13 + $0x218] sm:$0xf]
          %v746 = vld [vmem:[#allocation13 + $0x21c] sm:$0xf]
          %v747 = vld [vmem:[#allocation13 + $0x220] sm:$0xf]
          %v748 = vld [vmem:[#allocation13 + $0x224] sm:$0xf]
          %v749 = vld [vmem:[#allocation13 + $0x228] sm:$0xf]
          %v750 = vld [vmem:[#allocation13 + $0x22c] sm:$0xf]
          %v751 = vld [vmem:[#allocation13 + $0x230] sm:$0xf]
          %v752 = vld [vmem:[#allocation13 + $0x234] sm:$0xf]
          %v753 = vld [vmem:[#allocation13 + $0x238] sm:$0xf]
          %v754 = vld [vmem:[#allocation13 + $0x23c] sm:$0xf]
          %v899 = vunpack.c.l.b16 %v611
          %v900 = vunpack.c.l.b16 %v612
          %v901 = vunpack.c.l.b16 %v613
          %v902 = vunpack.c.l.b16 %v614
          %v903 = vunpack.c.l.b16 %v615
          %v904 = vunpack.c.l.b16 %v616
          %v905 = vunpack.c.l.b16 %v617
          %v906 = vunpack.c.l.b16 %v618
          %v907 = vunpack.c.l.b16 %v619
          %v908 = vunpack.c.l.b16 %v620
          %v909 = vunpack.c.l.b16 %v621
          %v910 = vunpack.c.l.b16 %v622
          %v911 = vunpack.c.l.b16 %v623
          %v912 = vunpack.c.l.b16 %v624
          %v913 = vunpack.c.l.b16 %v625
          %v914 = vunpack.c.l.b16 %v626
          %v915 = vunpack.c.l.b16 %v627
          %v916 = vunpack.c.l.b16 %v628
          %v917 = vunpack.c.l.b16 %v629
          %v918 = vunpack.c.l.b16 %v630
          %v919 = vunpack.c.l.b16 %v631
          %v920 = vunpack.c.l.b16 %v632
          %v921 = vunpack.c.l.b16 %v633
          %v922 = vunpack.c.l.b16 %v634
          %v923 = vunpack.c.l.b16 %v635
          %v924 = vunpack.c.l.b16 %v636
          %v925 = vunpack.c.l.b16 %v637
          %v926 = vunpack.c.l.b16 %v638
          %v927 = vunpack.c.l.b16 %v639
          %v928 = vunpack.c.l.b16 %v640
          %v929 = vunpack.c.l.b16 %v641
          %v930 = vunpack.c.l.b16 %v642
          %v931 = vunpack.c.l.b16 %v643
          %v932 = vunpack.c.l.b16 %v644
          %v933 = vunpack.c.l.b16 %v645
          %v934 = vunpack.c.l.b16 %v646
          %v935 = vunpack.c.l.b16 %v647
          %v936 = vunpack.c.l.b16 %v648
          %v937 = vunpack.c.l.b16 %v649
          %v938 = vunpack.c.l.b16 %v650
          %v939 = vunpack.c.l.b16 %v651
          %v940 = vunpack.c.l.b16 %v652
          %v941 = vunpack.c.l.b16 %v653
          %v942 = vunpack.c.l.b16 %v654
          %v943 = vunpack.c.l.b16 %v655
          %v944 = vunpack.c.l.b16 %v656
          %v945 = vunpack.c.l.b16 %v657
          %v946 = vunpack.c.l.b16 %v658
          %v947 = vunpack.c.l.b16 %v659
          %v948 = vunpack.c.l.b16 %v660
          %v949 = vunpack.c.l.b16 %v661
          %v950 = vunpack.c.l.b16 %v662
          %v951 = vunpack.c.l.b16 %v663
          %v952 = vunpack.c.l.b16 %v664
          %v953 = vunpack.c.l.b16 %v665
          %v954 = vunpack.c.l.b16 %v666
          %v955 = vunpack.c.l.b16 %v667
          %v956 = vunpack.c.l.b16 %v668
          %v957 = vunpack.c.l.b16 %v669
          %v958 = vunpack.c.l.b16 %v670
          %v959 = vunpack.c.l.b16 %v671
          %v960 = vunpack.c.l.b16 %v672
          %v961 = vunpack.c.l.b16 %v673
          %v962 = vunpack.c.l.b16 %v674
          %v963 = vunpack.c.l.b16 %v675
          %v964 = vunpack.c.l.b16 %v676
          %v965 = vunpack.c.l.b16 %v677
          %v966 = vunpack.c.l.b16 %v678
          %v967 = vunpack.c.l.b16 %v679
          %v968 = vunpack.c.l.b16 %v680
          %v969 = vunpack.c.l.b16 %v681
          %v970 = vunpack.c.l.b16 %v682
          %v971 = vunpack.c.l.b16 %v683
          %v972 = vunpack.c.l.b16 %v684
          %v973 = vunpack.c.l.b16 %v685
          %v974 = vunpack.c.l.b16 %v686
          %v975 = vunpack.c.l.b16 %v687
          %v976 = vunpack.c.l.b16 %v688
          %v977 = vunpack.c.l.b16 %v689
          %v978 = vunpack.c.l.b16 %v690
          %v979 = vunpack.c.l.b16 %v691
          %v980 = vunpack.c.l.b16 %v692
          %v981 = vunpack.c.l.b16 %v693
          %v982 = vunpack.c.l.b16 %v694
          %v983 = vunpack.c.l.b16 %v695
          %v984 = vunpack.c.l.b16 %v696
          %v985 = vunpack.c.l.b16 %v697
          %v986 = vunpack.c.l.b16 %v698
          %v987 = vunpack.c.l.b16 %v699
          %v988 = vunpack.c.l.b16 %v700
          %v989 = vunpack.c.l.b16 %v701
          %v990 = vunpack.c.l.b16 %v702
          %v991 = vunpack.c.l.b16 %v703
          %v992 = vunpack.c.l.b16 %v704
          %v993 = vunpack.c.l.b16 %v705
          %v994 = vunpack.c.l.b16 %v706
          %v995 = vunpack.c.l.b16 %v707
          %v996 = vunpack.c.l.b16 %v708
          %v997 = vunpack.c.l.b16 %v709
          %v998 = vunpack.c.l.b16 %v710
          %v999 = vunpack.c.l.b16 %v711
          %v1000 = vunpack.c.l.b16 %v712
          %v1001 = vunpack.c.l.b16 %v713
          %v1002 = vunpack.c.l.b16 %v714
          %v1003 = vunpack.c.l.b16 %v715
          %v1004 = vunpack.c.l.b16 %v716
          %v1005 = vunpack.c.l.b16 %v717
          %v1006 = vunpack.c.l.b16 %v718
          %v1007 = vunpack.c.l.b16 %v719
          %v1008 = vunpack.c.l.b16 %v720
          %v1009 = vunpack.c.l.b16 %v721
          %v1010 = vunpack.c.l.b16 %v722
          %v1011 = vunpack.c.l.b16 %v723
          %v1012 = vunpack.c.l.b16 %v724
          %v1013 = vunpack.c.l.b16 %v725
          %v1014 = vunpack.c.l.b16 %v726
          %v1015 = vunpack.c.l.b16 %v727
          %v1016 = vunpack.c.l.b16 %v728
          %v1017 = vunpack.c.l.b16 %v729
          %v1018 = vunpack.c.l.b16 %v730
          %v1019 = vunpack.c.l.b16 %v731
          %v1020 = vunpack.c.l.b16 %v732
          %v1021 = vunpack.c.l.b16 %v733
          %v1022 = vunpack.c.l.b16 %v734
          %v1023 = vunpack.c.l.b16 %v735
          %v1024 = vunpack.c.l.b16 %v736
          %v1025 = vunpack.c.l.b16 %v737
          %v1026 = vunpack.c.l.b16 %v738
          %v1027 = vunpack.c.l.b16 %v739
          %v1028 = vunpack.c.l.b16 %v740
          %v1029 = vunpack.c.l.b16 %v741
          %v1030 = vunpack.c.l.b16 %v742
          %v1031 = vunpack.c.l.b16 %v743
          %v1032 = vunpack.c.l.b16 %v744
          %v1033 = vunpack.c.l.b16 %v745
          %v1034 = vunpack.c.l.b16 %v746
          %v1035 = vunpack.c.l.b16 %v747
          %v1036 = vunpack.c.l.b16 %v748
          %v1037 = vunpack.c.l.b16 %v749
          %v1038 = vunpack.c.l.b16 %v750
          %v1039 = vunpack.c.l.b16 %v751
          %v1040 = vunpack.c.l.b16 %v752
          %v1041 = vunpack.c.l.b16 %v753
          %v1042 = vunpack.c.l.b16 %v754
          %v1043 = vpack.c.b16 %v900, %v899
          %v1044 = vpack.c.b16 %v902, %v901
          %v1045 = vpack.c.b16 %v904, %v903
          %v1046 = vpack.c.b16 %v906, %v905
          %v1047 = vpack.c.b16 %v908, %v907
          %v1048 = vpack.c.b16 %v910, %v909
          %v1049 = vpack.c.b16 %v912, %v911
          %v1050 = vpack.c.b16 %v914, %v913
          %v1051 = vpack.c.b16 %v916, %v915
          %v1052 = vpack.c.b16 %v918, %v917
          %v1053 = vpack.c.b16 %v920, %v919
          %v1054 = vpack.c.b16 %v922, %v921
          %v1055 = vpack.c.b16 %v924, %v923
          %v1056 = vpack.c.b16 %v926, %v925
          %v1057 = vpack.c.b16 %v928, %v927
          %v1058 = vpack.c.b16 %v930, %v929
          %v1059 = vpack.c.b16 %v932, %v931
          %v1060 = vpack.c.b16 %v934, %v933
          %v1061 = vpack.c.b16 %v936, %v935
          %v1062 = vpack.c.b16 %v938, %v937
          %v1063 = vpack.c.b16 %v940, %v939
          %v1064 = vpack.c.b16 %v942, %v941
          %v1065 = vpack.c.b16 %v944, %v943
          %v1066 = vpack.c.b16 %v946, %v945
          %v1067 = vpack.c.b16 %v948, %v947
          %v1068 = vpack.c.b16 %v950, %v949
          %v1069 = vpack.c.b16 %v952, %v951
          %v1070 = vpack.c.b16 %v954, %v953
          %v1071 = vpack.c.b16 %v956, %v955
          %v1072 = vpack.c.b16 %v958, %v957
          %v1073 = vpack.c.b16 %v960, %v959
          %v1074 = vpack.c.b16 %v962, %v961
          %v1075 = vpack.c.b16 %v964, %v963
          %v1076 = vpack.c.b16 %v966, %v965
          %v1077 = vpack.c.b16 %v968, %v967
          %v1078 = vpack.c.b16 %v970, %v969
          %v1079 = vpack.c.b16 %v972, %v971
          %v1080 = vpack.c.b16 %v974, %v973
          %v1081 = vpack.c.b16 %v976, %v975
          %v1082 = vpack.c.b16 %v978, %v977
          %v1083 = vpack.c.b16 %v980, %v979
          %v1084 = vpack.c.b16 %v982, %v981
          %v1085 = vpack.c.b16 %v984, %v983
          %v1086 = vpack.c.b16 %v986, %v985
          %v1087 = vpack.c.b16 %v988, %v987
          %v1088 = vpack.c.b16 %v990, %v989
          %v1089 = vpack.c.b16 %v992, %v991
          %v1090 = vpack.c.b16 %v994, %v993
          %v1091 = vpack.c.b16 %v996, %v995
          %v1092 = vpack.c.b16 %v998, %v997
          %v1093 = vpack.c.b16 %v1000, %v999
          %v1094 = vpack.c.b16 %v1002, %v1001
          %v1095 = vpack.c.b16 %v1004, %v1003
          %v1096 = vpack.c.b16 %v1006, %v1005
          %v1097 = vpack.c.b16 %v1008, %v1007
          %v1098 = vpack.c.b16 %v1010, %v1009
          %v1099 = vpack.c.b16 %v1012, %v1011
          %v1100 = vpack.c.b16 %v1014, %v1013
          %v1101 = vpack.c.b16 %v1016, %v1015
          %v1102 = vpack.c.b16 %v1018, %v1017
          %v1103 = vpack.c.b16 %v1020, %v1019
          %v1104 = vpack.c.b16 %v1022, %v1021
          %v1105 = vpack.c.b16 %v1024, %v1023
          %v1106 = vpack.c.b16 %v1026, %v1025
          %v1107 = vpack.c.b16 %v1028, %v1027
          %v1108 = vpack.c.b16 %v1030, %v1029
          %v1109 = vpack.c.b16 %v1032, %v1031
          %v1110 = vpack.c.b16 %v1034, %v1033
          %v1111 = vpack.c.b16 %v1036, %v1035
          %v1112 = vpack.c.b16 %v1038, %v1037
          %v1113 = vpack.c.b16 %v1040, %v1039
          %v1114 = vpack.c.b16 %v1042, %v1041
          %1187 = vmatprep.subr.bf16.mxu0 0
          %1188 = vmatpush1.bf16.msra.mxu0 %v1043
          %1189 = vmatprep.subr.bf16.mxu0 0
          %1190 = vmatpush1.bf16.msra.mxu0 %v1044
          %1191 = vmatprep.subr.bf16.mxu0 0
          %1192 = vmatpush1.bf16.msra.mxu0 %v1045
          %1193 = vmatprep.subr.bf16.mxu0 0
          %1194 = vmatpush1.bf16.msra.mxu0 %v1046
          %1195 = vmatprep.subr.bf16.mxu0 0
          %1196 = vmatpush1.bf16.msra.mxu0 %v1047
          %1197 = vmatprep.subr.bf16.mxu0 0
          %1198 = vmatpush1.bf16.msra.mxu0 %v1048
          %1199 = vmatprep.subr.bf16.mxu0 0
          %1200 = vmatpush1.bf16.msra.mxu0 %v1049
          %1201 = vmatprep.subr.bf16.mxu0 0
          %1202 = vmatpush1.bf16.msra.mxu0 %v1050
          %1203 = vmatprep.subr.bf16.mxu0 0
          %1204 = vmatpush1.bf16.msra.mxu0 %v1051
          %1205 = vmatprep.subr.bf16.mxu0 0
          %1206 = vmatpush1.bf16.msra.mxu0 %v1052
          %1207 = vmatprep.subr.bf16.mxu0 0
          %1208 = vmatpush1.bf16.msra.mxu0 %v1053
          %1209 = vmatprep.subr.bf16.mxu0 0
          %1210 = vmatpush1.bf16.msra.mxu0 %v1054
          %1211 = vmatprep.subr.bf16.mxu0 0
          %1212 = vmatpush1.bf16.msra.mxu0 %v1055
          %1213 = vmatprep.subr.bf16.mxu0 0
          %1214 = vmatpush1.bf16.msra.mxu0 %v1056
          %1215 = vmatprep.subr.bf16.mxu0 0
          %1216 = vmatpush1.bf16.msra.mxu0 %v1057
          %1217 = vmatprep.subr.bf16.mxu0 0
          %1218 = vmatpush1.bf16.msra.mxu0 %v1058
          %1219 = vmatprep.mubr.bf16.mxu0 %v576
          %1220 = vmatmul.mubr.bf16.gmra.mrb[0].mxu0 %v575
          %v1221 = vpop.f32.mrb[0].mxu0
          %v1222 = vadd.f32 0.0, %v1221
          %v1223 = vpop.f32.mrb[0].mxu0
          %v1224 = vpop.f32.mrb[0].mxu0
          %v1225 = vadd.f32 0.0, %v1224
          %v1226 = vpop.f32.mrb[0].mxu0
          %1227 = vmatprep.mubr.bf16.mxu0 %v585
          %1228 = vmatmul.mubr.bf16.gmra.mrb[0].mxu0 %v584
          %v1229 = vpop.f32.mrb[0].mxu0
          %v1230 = vadd.f32 0.0, %v1229
          %v1231 = vpop.f32.mrb[0].mxu0
          %v1232 = vpop.f32.mrb[0].mxu0
          %v1233 = vadd.f32 0.0, %v1232
          %v1234 = vpop.f32.mrb[0].mxu0
          %1235 = vmatprep.mubr.bf16.mxu0 %v594
          %1236 = vmatmul.mubr.bf16.gmra.mrb[0].mxu0 %v593
          %v1237 = vpop.f32.mrb[0].mxu0
          %v1238 = vadd.f32 0.0, %v1237
          %v1239 = vpop.f32.mrb[0].mxu0
          %v1240 = vpop.f32.mrb[0].mxu0
          %v1241 = vadd.f32 0.0, %v1240
          %v1242 = vpop.f32.mrb[0].mxu0
          %1243 = vmatprep.mubr.bf16.mxu0 %v603
          %1244 = vmatmul.mubr.bf16.gmra.mrb[0].mxu0 %v602
          %v1245 = vpop.f32.mrb[0].mxu0
          %v1246 = vadd.f32 0.0, %v1245
          %v1247 = vpop.f32.mrb[0].mxu0
          %v1248 = vpop.f32.mrb[0].mxu0
          %v1249 = vadd.f32 0.0, %v1248
          %v1250 = vpop.f32.mrb[0].mxu0
          %1251 = vdwg.mxu0
          %1252 = vmatprep.subr.bf16.mxu0 0
          %1253 = vmatpush1.bf16.msra.mxu0 %v1059
          %1254 = vmatprep.subr.bf16.mxu0 0
          %1255 = vmatpush1.bf16.msra.mxu0 %v1060
          %1256 = vmatprep.subr.bf16.mxu0 0
          %1257 = vmatpush1.bf16.msra.mxu0 %v1061
          %1258 = vmatprep.subr.bf16.mxu0 0
          %1259 = vmatpush1.bf16.msra.mxu0 %v1062
          %1260 = vmatprep.subr.bf16.mxu0 0
          %1261 = vmatpush1.bf16.msra.mxu0 %v1063
          %1262 = vmatprep.subr.bf16.mxu0 0
          %1263 = vmatpush1.bf16.msra.mxu0 %v1064
          %1264 = vmatprep.subr.bf16.mxu0 0
          %1265 = vmatpush1.bf16.msra.mxu0 %v1065
          %1266 = vmatprep.subr.bf16.mxu0 0
          %1267 = vmatpush1.bf16.msra.mxu0 %v1066
          %1268 = vmatprep.subr.bf16.mxu0 0
          %1269 = vmatpush1.bf16.msra.mxu0 %v1067
          %1270 = vmatprep.subr.bf16.mxu0 0
          %1271 = vmatpush1.bf16.msra.mxu0 %v1068
          %1272 = vmatprep.subr.bf16.mxu0 0
          %1273 = vmatpush1.bf16.msra.mxu0 %v1069
          %1274 = vmatprep.subr.bf16.mxu0 0
          %1275 = vmatpush1.bf16.msra.mxu0 %v1070
          %1276 = vmatprep.subr.bf16.mxu0 0
          %1277 = vmatpush1.bf16.msra.mxu0 %v1071
          %1278 = vmatprep.subr.bf16.mxu0 0
          %1279 = vmatpush1.bf16.msra.mxu0 %v1072
          %1280 = vmatprep.subr.bf16.mxu0 0
          %1281 = vmatpush1.bf16.msra.mxu0 %v1073
          %1282 = vmatprep.subr.bf16.mxu0 0
          %1283 = vmatpush1.bf16.msra.mxu0 %v1074
          %1284 = vmatprep.mubr.bf16.mxu0 %v578
          %1285 = vmatmul.mubr.bf16.gmra.mrb[0].mxu0 %v577
          %v1286 = vpop.f32.mrb[0].mxu0
          %v1287 = vadd.f32 %v1222, %v1286
          %v1288 = vpop.f32.mrb[0].mxu0
          %v1289 = vpop.f32.mrb[0].mxu0
          %v1290 = vadd.f32 %v1225, %v1289
          %v1291 = vpop.f32.mrb[0].mxu0
          %1292 = vmatprep.mubr.bf16.mxu0 %v587
          %1293 = vmatmul.mubr.bf16.gmra.mrb[0].mxu0 %v586
          %v1294 = vpop.f32.mrb[0].mxu0
          %v1295 = vadd.f32 %v1230, %v1294
          %v1296 = vpop.f32.mrb[0].mxu0
          %v1297 = vpop.f32.mrb[0].mxu0
          %v1298 = vadd.f32 %v1233, %v1297
          %v1299 = vpop.f32.mrb[0].mxu0
          %1300 = vmatprep.mubr.bf16.mxu0 %v596
          %1301 = vmatmul.mubr.bf16.gmra.mrb[0].mxu0 %v595
          %v1302 = vpop.f32.mrb[0].mxu0
          %v1303 = vadd.f32 %v1238, %v1302
          %v1304 = vpop.f32.mrb[0].mxu0
          %v1305 = vpop.f32.mrb[0].mxu0
          %v1306 = vadd.f32 %v1241, %v1305
          %v1307 = vpop.f32.mrb[0].mxu0
          %1308 = vmatprep.mubr.bf16.mxu0 %v605
          %1309 = vmatmul.mubr.bf16.gmra.mrb[0].mxu0 %v604
          %v1310 = vpop.f32.mrb[0].mxu0
          %v1311 = vadd.f32 %v1246, %v1310
          %v1312 = vpop.f32.mrb[0].mxu0
          %v1313 = vpop.f32.mrb[0].mxu0
          %v1314 = vadd.f32 %v1249, %v1313
          %v1315 = vpop.f32.mrb[0].mxu0
          %1316 = vdwg.mxu0
          %1317 = vmatprep.subr.bf16.mxu0 0
          %1318 = vmatpush1.bf16.msra.mxu0 %v1075
          %1319 = vmatprep.subr.bf16.mxu0 0
          %1320 = vmatpush1.bf16.msra.mxu0 %v1076
          %1321 = vmatprep.subr.bf16.mxu0 0
          %1322 = vmatpush1.bf16.msra.mxu0 %v1077
          %1323 = vmatprep.subr.bf16.mxu0 0
          %1324 = vmatpush1.bf16.msra.mxu0 %v1078
          %1325 = vmatprep.subr.bf16.mxu0 0
          %1326 = vmatpush1.bf16.msra.mxu0 %v1079
          %1327 = vmatprep.subr.bf16.mxu0 0
          %1328 = vmatpush1.bf16.msra.mxu0 %v1080
          %1329 = vmatprep.subr.bf16.mxu0 0
          %1330 = vmatpush1.bf16.msra.mxu0 %v1081
          %1331 = vmatprep.subr.bf16.mxu0 0
          %1332 = vmatpush1.bf16.msra.mxu0 %v1082
          %1333 = vmatprep.subr.bf16.mxu0 0
          %1334 = vmatpush1.bf16.msra.mxu0 %v1083
          %1335 = vmatprep.subr.bf16.mxu0 0
          %1336 = vmatpush1.bf16.msra.mxu0 %v1084
          %1337 = vmatprep.subr.bf16.mxu0 0
          %1338 = vmatpush1.bf16.msra.mxu0 %v1085
          %1339 = vmatprep.subr.bf16.mxu0 0
          %1340 = vmatpush1.bf16.msra.mxu0 %v1086
          %1341 = vmatprep.subr.bf16.mxu0 0
          %1342 = vmatpush1.bf16.msra.mxu0 %v1087
          %1343 = vmatprep.subr.bf16.mxu0 0
          %1344 = vmatpush1.bf16.msra.mxu0 %v1088
          %1345 = vmatprep.subr.bf16.mxu0 0
          %1346 = vmatpush1.bf16.msra.mxu0 %v1089
          %1347 = vmatprep.subr.bf16.mxu0 0
          %1348 = vmatpush1.bf16.msra.mxu0 %v1090
          %1349 = vmatprep.mubr.bf16.mxu0 %v580
          %1350 = vmatmul.mubr.bf16.gmra.mrb[0].mxu0 %v579
          %v1351 = vpop.f32.mrb[0].mxu0
          %v1352 = vadd.f32 %v1287, %v1351
          %v1353 = vpop.f32.mrb[0].mxu0
          %v1354 = vpop.f32.mrb[0].mxu0
          %v1355 = vadd.f32 %v1290, %v1354
          %v1356 = vpop.f32.mrb[0].mxu0
          %1357 = vmatprep.mubr.bf16.mxu0 %v589
          %1358 = vmatmul.mubr.bf16.gmra.mrb[0].mxu0 %v588
          %v1359 = vpop.f32.mrb[0].mxu0
          %v1360 = vadd.f32 %v1295, %v1359
          %v1361 = vpop.f32.mrb[0].mxu0
          %v1362 = vpop.f32.mrb[0].mxu0
          %v1363 = vadd.f32 %v1298, %v1362
          %v1364 = vpop.f32.mrb[0].mxu0
          %1365 = vmatprep.mubr.bf16.mxu0 %v598
          %1366 = vmatmul.mubr.bf16.gmra.mrb[0].mxu0 %v597
          %v1367 = vpop.f32.mrb[0].mxu0
          %v1368 = vadd.f32 %v1303, %v1367
          %v1369 = vpop.f32.mrb[0].mxu0
          %v1370 = vpop.f32.mrb[0].mxu0
          %v1371 = vadd.f32 %v1306, %v1370
          %v1372 = vpop.f32.mrb[0].mxu0
          %1373 = vmatprep.mubr.bf16.mxu0 %v607
          %1374 = vmatmul.mubr.bf16.gmra.mrb[0].mxu0 %v606
          %v1375 = vpop.f32.mrb[0].mxu0
          %v1376 = vadd.f32 %v1311, %v1375
          %v1377 = vpop.f32.mrb[0].mxu0
          %v1378 = vpop.f32.mrb[0].mxu0
          %v1379 = vadd.f32 %v1314, %v1378
          %v1380 = vpop.f32.mrb[0].mxu0
          %1381 = vdwg.mxu0
          %1382 = vmatprep.subr.bf16.mxu0 0
          %1383 = vmatpush1.bf16.msra.mxu0 %v1091
          %1384 = vmatprep.subr.bf16.mxu0 0
          %1385 = vmatpush1.bf16.msra.mxu0 %v1092
          %1386 = vmatprep.subr.bf16.mxu0 0
          %1387 = vmatpush1.bf16.msra.mxu0 %v1093
          %1388 = vmatprep.subr.bf16.mxu0 0
          %1389 = vmatpush1.bf16.msra.mxu0 %v1094
          %1390 = vmatprep.subr.bf16.mxu0 0
          %1391 = vmatpush1.bf16.msra.mxu0 %v1095
          %1392 = vmatprep.subr.bf16.mxu0 0
          %1393 = vmatpush1.bf16.msra.mxu0 %v1096
          %1394 = vmatprep.subr.bf16.mxu0 0
          %1395 = vmatpush1.bf16.msra.mxu0 %v1097
          %1396 = vmatprep.subr.bf16.mxu0 0
          %1397 = vmatpush1.bf16.msra.mxu0 %v1098
          %1398 = vmatprep.subr.bf16.mxu0 0
          %1399 = vmatpush1.bf16.msra.mxu0 %v1099
          %1400 = vmatprep.subr.bf16.mxu0 0
          %1401 = vmatpush1.bf16.msra.mxu0 %v1100
          %1402 = vmatprep.subr.bf16.mxu0 0
          %1403 = vmatpush1.bf16.msra.mxu0 %v1101
          %1404 = vmatprep.subr.bf16.mxu0 0
          %1405 = vmatpush1.bf16.msra.mxu0 %v1102
          %1406 = vmatprep.subr.bf16.mxu0 0
          %1407 = vmatpush1.bf16.msra.mxu0 %v1103
          %1408 = vmatprep.subr.bf16.mxu0 0
          %1409 = vmatpush1.bf16.msra.mxu0 %v1104
          %1410 = vmatprep.subr.bf16.mxu0 0
          %1411 = vmatpush1.bf16.msra.mxu0 %v1105
          %1412 = vmatprep.subr.bf16.mxu0 0
          %1413 = vmatpush1.bf16.msra.mxu0 %v1106
          %1414 = vmatprep.mubr.bf16.mxu0 %v582
          %1415 = vmatmul.mubr.bf16.gmra.mrb[0].mxu0 %v581
          %v1416 = vpop.f32.mrb[0].mxu0
          %v1417 = vadd.f32 %v1352, %v1416
          %v1418 = vpop.f32.mrb[0].mxu0
          %v1419 = vpop.f32.mrb[0].mxu0
          %v1420 = vadd.f32 %v1355, %v1419
          %v1421 = vpop.f32.mrb[0].mxu0
          %1422 = vmatprep.mubr.bf16.mxu0 %v591
          %1423 = vmatmul.mubr.bf16.gmra.mrb[0].mxu0 %v590
          %v1424 = vpop.f32.mrb[0].mxu0
          %v1425 = vadd.f32 %v1360, %v1424
          %v1426 = vpop.f32.mrb[0].mxu0
          %v1427 = vpop.f32.mrb[0].mxu0
          %v1428 = vadd.f32 %v1363, %v1427
          %v1429 = vpop.f32.mrb[0].mxu0
          %1430 = vmatprep.mubr.bf16.mxu0 %v600
          %1431 = vmatmul.mubr.bf16.gmra.mrb[0].mxu0 %v599
          %v1432 = vpop.f32.mrb[0].mxu0
          %v1433 = vadd.f32 %v1368, %v1432
          %v1434 = vpop.f32.mrb[0].mxu0
          %v1435 = vpop.f32.mrb[0].mxu0
          %v1436 = vadd.f32 %v1371, %v1435
          %v1437 = vpop.f32.mrb[0].mxu0
          %1438 = vmatprep.mubr.bf16.mxu0 %v609
          %1439 = vmatmul.mubr.bf16.gmra.mrb[0].mxu0 %v608
          %v1440 = vpop.f32.mrb[0].mxu0
          %v1441 = vadd.f32 %v1376, %v1440
          %v1442 = vpop.f32.mrb[0].mxu0
          %v1443 = vpop.f32.mrb[0].mxu0
          %v1444 = vadd.f32 %v1379, %v1443
          %v1445 = vpop.f32.mrb[0].mxu0
          %1446 = vdwg.mxu0
          %1447 = vmatprep.subr.bf16.mxu0 0
          %1448 = vmatpush1.bf16.msra.mxu0 %v1107
          %1449 = vmatprep.subr.bf16.mxu0 0
          %1450 = vmatpush1.bf16.msra.mxu0 %v1108
          %1451 = vmatprep.subr.bf16.mxu0 0
          %1452 = vmatpush1.bf16.msra.mxu0 %v1109
          %1453 = vmatprep.subr.bf16.mxu0 0
          %1454 = vmatpush1.bf16.msra.mxu0 %v1110
          %1455 = vmatprep.subr.bf16.mxu0 0
          %1456 = vmatpush1.bf16.msra.mxu0 %v1111
          %1457 = vmatprep.subr.bf16.mxu0 0
          %1458 = vmatpush1.bf16.msra.mxu0 %v1112
          %1459 = vmatprep.subr.bf16.mxu0 0
          %1460 = vmatpush1.bf16.msra.mxu0 %v1113
          %1461 = vmatprep.subr.bf16.mxu0 0
          %1462 = vmatpush1.bf16.msra.mxu0 %v1114
          %1463 = vmatprep.subr.bf16.mxu0 0
          %1464 = vmatpush1.bf16.msra.mxu0 0
          %1465 = vmatprep.subr.bf16.mxu0 0
          %1466 = vmatpush1.bf16.msra.mxu0 0
          %1467 = vmatprep.subr.bf16.mxu0 0
          %1468 = vmatpush1.bf16.msra.mxu0 0
          %1469 = vmatprep.subr.bf16.mxu0 0
          %1470 = vmatpush1.bf16.msra.mxu0 0
          %1471 = vmatprep.subr.bf16.mxu0 0
          %1472 = vmatpush1.bf16.msra.mxu0 0
          %1473 = vmatprep.subr.bf16.mxu0 0
          %1474 = vmatpush1.bf16.msra.mxu0 0
          %1475 = vmatprep.subr.bf16.mxu0 0
          %1476 = vmatpush1.bf16.msra.mxu0 0
          %1477 = vmatprep.subr.bf16.mxu0 0
          %1478 = vmatpush1.bf16.msra.mxu0 0
          %1479 = vmatprep.mubr.bf16.mxu0 0
          %1480 = vmatmul.mubr.bf16.gmra.mrb[0].mxu0 %v583
          %v1481 = vpop.f32.mrb[0].mxu0
          %v1482 = vadd.f32 %v1417, %v1481
          %v1483 = vpop.f32.mrb[0].mxu0
          %v1484 = vpop.f32.mrb[0].mxu0
          %v1485 = vadd.f32 %v1420, %v1484
          %v1486 = vpop.f32.mrb[0].mxu0
          %1487 = vmatprep.mubr.bf16.mxu0 0
          %1488 = vmatmul.mubr.bf16.gmra.mrb[0].mxu0 %v592
          %v1489 = vpop.f32.mrb[0].mxu0
          %v1490 = vadd.f32 %v1425, %v1489
          %v1491 = vpop.f32.mrb[0].mxu0
          %v1492 = vpop.f32.mrb[0].mxu0
          %v1493 = vadd.f32 %v1428, %v1492
          %v1494 = vpop.f32.mrb[0].mxu0
          %1495 = vmatprep.mubr.bf16.mxu0 0
          %1496 = vmatmul.mubr.bf16.gmra.mrb[0].mxu0 %v601
          %v1497 = vpop.f32.mrb[0].mxu0
          %v1498 = vadd.f32 %v1433, %v1497
          %v1499 = vpop.f32.mrb[0].mxu0
          %v1500 = vpop.f32.mrb[0].mxu0
          %v1501 = vadd.f32 %v1436, %v1500
          %v1502 = vpop.f32.mrb[0].mxu0
          %1503 = vmatprep.mubr.bf16.mxu0 0
          %1504 = vmatmul.mubr.bf16.gmra.mrb[0].mxu0 %v610
          %v1505 = vpop.f32.mrb[0].mxu0
          %v1506 = vadd.f32 %v1441, %v1505
          %v1507 = vpop.f32.mrb[0].mxu0
          %v1508 = vpop.f32.mrb[0].mxu0
          %v1509 = vadd.f32 %v1444, %v1508
          %v1510 = vpop.f32.mrb[0].mxu0
          %1511 = vdwg.mxu0
          %s1512 = smul.u32 %s30, 64
          %s1513 = scalar_lea.vmem [#allocation4], %s1512
          %1514 = vst [vmem:[%s1513] sm:$0xff] %v1482
          %1515 = vst [vmem:[%s1513 + $0x8] sm:$0xff] %v1485
          %1516 = vst [vmem:[%s1513 + $0x10] sm:$0xff] %v1490
          %1517 = vst [vmem:[%s1513 + $0x18] sm:$0xff] %v1493
          %1518 = vst [vmem:[%s1513 + $0x20] sm:$0xff] %v1498
          %1519 = vst [vmem:[%s1513 + $0x28] sm:$0xff] %v1501
          %1520 = vst [vmem:[%s1513 + $0x30] sm:$0xff] %v1506
          %1521 = vst [vmem:[%s1513 + $0x38] sm:$0xff] %v1509
          %v1522 = vld [vmem:[#allocation6] sm:$0x1]
          %v1523 = vadd.f32 %v1482, %v1485
          %v1524 = vadd.f32 %v1523, %v1490
          %v1525 = vadd.f32 %v1524, %v1493
          %v1526 = vadd.f32 %v1525, %v1498
          %v1527 = vadd.f32 %v1526, %v1501
          %v1528 = vadd.f32 %v1527, %v1506
          %v1529 = vadd.f32 %v1528, %v1509
          %v1530 = vrot.slane %v1529, 4
          %v1531 = vadd.f32 %v1529, %v1530
          %v1532 = vrot.slane %v1531, 2
          %v1533 = vadd.f32 %v1531, %v1532
          %v1534 = vrot.slane %v1533, 1
          %v1535 = vadd.f32 %v1533, %v1534
          %v1536 = vadd.f32 %v1522, %v1535
          %1537 = vst [vmem:[#allocation6] sm:$0x1] %v1536
          %v1538 = vld [vmem:[#allocation7] sm:$0x1]
          %v1539 = vmul.f32 %v1482, %v1482
          %v1540 = vmul.f32 %v1485, %v1485
          %v1541 = vmul.f32 %v1490, %v1490
          %v1542 = vmul.f32 %v1493, %v1493
          %v1543 = vmul.f32 %v1498, %v1498
          %v1544 = vmul.f32 %v1501, %v1501
          %v1545 = vmul.f32 %v1506, %v1506
          %v1546 = vmul.f32 %v1509, %v1509
          %v1547 = vadd.f32 %v1539, %v1540
          %v1548 = vadd.f32 %v1547, %v1541
          %v1549 = vadd.f32 %v1548, %v1542
          %v1550 = vadd.f32 %v1549, %v1543
          %v1551 = vadd.f32 %v1550, %v1544
          %v1552 = vadd.f32 %v1551, %v1545
          %v1553 = vadd.f32 %v1552, %v1546
          %v1554 = vrot.slane %v1553, 4
          %v1555 = vadd.f32 %v1553, %v1554
          %v1556 = vrot.slane %v1555, 2
          %v1557 = vadd.f32 %v1555, %v1556
          %v1558 = vrot.slane %v1557, 1
          %v1559 = vadd.f32 %v1557, %v1558
          %v1560 = vadd.f32 %v1538, %v1559
          %1561 = vst [vmem:[#allocation7] sm:$0x1] %v1560
        $region68: #{tpu_custom_call.1} parent=47 // pred_fallthru
          _
        %p1562 = scmp.eq.s32.totalorder %s29, 1
        // Predicated region
        $region69: #{tpu_custom_call.1} parent=47 // pred_check
          %p1563 = pneg %p1562
        $region70: #{tpu_custom_call.1} parent=47 // pred_check_branch
          %1565 = sbr.rel (%p1563) target = $region72
        $region71: #{tpu_custom_call.1} parent=47 // pred_region
          %v1566 = vld [vmem:[#allocation6] sm:$0x1]
          %v1567 = vmul.f32 %v1566, 0.0078125
          %v1568 = vld [vmem:[#allocation7] sm:$0x1]
          %v1569 = vmul.f32 %v1568, 0.0078125
          %v1570 = vmul.f32 %v1567, %v1567
          %v1571 = vsub.f32 %v1569, %v1570
          %v1572 = vld [vmem:[%s3] sm:$0x1]
          %v1573 = vadd.f32 %v1571, 1e-05
          %v1574 = vrsqrt.pop %v1573
          %v1575 = vmul.f32 %v1572, %v1574
          %v1576 = vld [vmem:[%s4] sm:$0x1]
          %v1577 = vmul.f32 %v1575, %v1567
          %v1578 = vsub.f32 %v1576, %v1577
          %s1579 = smul.u32 %s30, 64
          %s1580 = scalar_lea.vmem [#allocation4], %s1579
          %v1581 = vld [vmem:[%s1580] sm:$0xff]
          %v1582 = vld [vmem:[%s1580 + $0x8] sm:$0xff]
          %v1583 = vld [vmem:[%s1580 + $0x10] sm:$0xff]
          %v1584 = vld [vmem:[%s1580 + $0x18] sm:$0xff]
          %v1585 = vld [vmem:[%s1580 + $0x20] sm:$0xff]
          %v1586 = vld [vmem:[%s1580 + $0x28] sm:$0xff]
          %v1587 = vld [vmem:[%s1580 + $0x30] sm:$0xff]
          %v1588 = vld [vmem:[%s1580 + $0x38] sm:$0xff]
          %v1590 = vlaneseq
          %v1591 = vshrl.u32 %v1590, 7
          %v1592 = vsub.s32 0, %v1591
          %v1593 = vrot.slane %v1575, %v1592
          %v1595 = vmul.f32 %v1581, %v1593
          %v1596 = vmul.f32 %v1582, %v1593
          %v1597 = vmul.f32 %v1583, %v1593
          %v1598 = vmul.f32 %v1584, %v1593
          %v1599 = vmul.f32 %v1585, %v1593
          %v1600 = vmul.f32 %v1586, %v1593
          %v1601 = vmul.f32 %v1587, %v1593
          %v1602 = vmul.f32 %v1588, %v1593
          %v1604 = vlaneseq
          %v1605 = vshrl.u32 %v1604, 7
          %v1606 = vsub.s32 0, %v1605
          %v1607 = vrot.slane %v1578, %v1606
          %v1609 = vadd.f32 %v1595, %v1607
          %v1610 = vadd.f32 %v1596, %v1607
          %v1611 = vadd.f32 %v1597, %v1607
          %v1612 = vadd.f32 %v1598, %v1607
          %v1613 = vadd.f32 %v1599, %v1607
          %v1614 = vadd.f32 %v1600, %v1607
          %v1615 = vadd.f32 %v1601, %v1607
          %v1616 = vadd.f32 %v1602, %v1607
          %v1617 = vmax.f32 %v1609, 0.0
          %v1618 = vmax.f32 %v1610, 0.0
          %v1619 = vmax.f32 %v1611, 0.0
          %v1620 = vmax.f32 %v1612, 0.0
          %v1621 = vmax.f32 %v1613, 0.0
          %v1622 = vmax.f32 %v1614, 0.0
          %v1623 = vmax.f32 %v1615, 0.0
          %v1624 = vmax.f32 %v1616, 0.0
          %s1625 = scalar_lea.vmem [#allocation3], 16
          %1626 = vst [vmem:[%s1625 + $0x1] sm:$0xff] %v1617
          %1627 = vst [vmem:[%s1625 + $0x11] sm:$0xff] %v1618
          %1628 = vst [vmem:[%s1625 + $0x21] sm:$0xff] %v1619
          %1629 = vst [vmem:[%s1625 + $0x31] sm:$0xff] %v1620
          %1630 = vst [vmem:[%s1625 + $0x41] sm:$0xff] %v1621
          %1631 = vst [vmem:[%s1625 + $0x51] sm:$0xff] %v1622
          %1632 = vst [vmem:[%s1625 + $0x61] sm:$0xff] %v1623
          %1633 = vst [vmem:[%s1625 + $0x71] sm:$0xff] %v1624
          %v1634 = vld [vmem:[#allocation3] sm:$0xff]
          %v1635 = vld [vmem:[#allocation3 + $0x10] sm:$0xff]
          %v1636 = vld [vmem:[#allocation3 + $0x20] sm:$0xff]
          %v1637 = vld [vmem:[#allocation3 + $0x30] sm:$0xff]
          %v1638 = vld [vmem:[#allocation3 + $0x40] sm:$0xff]
          %v1639 = vld [vmem:[#allocation3 + $0x50] sm:$0xff]
          %v1640 = vld [vmem:[#allocation3 + $0x60] sm:$0xff]
          %v1641 = vld [vmem:[#allocation3 + $0x70] sm:$0xff]
          %v1642 = vld [vmem:[#allocation3 + $0x1] sm:$0xff]
          %v1643 = vld [vmem:[#allocation3 + $0x11] sm:$0xff]
          %v1644 = vld [vmem:[#allocation3 + $0x21] sm:$0xff]
          %v1645 = vld [vmem:[#allocation3 + $0x31] sm:$0xff]
          %v1646 = vld [vmem:[#allocation3 + $0x41] sm:$0xff]
          %v1647 = vld [vmem:[#allocation3 + $0x51] sm:$0xff]
          %v1648 = vld [vmem:[#allocation3 + $0x61] sm:$0xff]
          %v1649 = vld [vmem:[#allocation3 + $0x71] sm:$0xff]
          %v1650 = vld [vmem:[#allocation3 + $0x2] sm:$0xff]
          %v1651 = vld [vmem:[#allocation3 + $0x12] sm:$0xff]
          %v1652 = vld [vmem:[#allocation3 + $0x22] sm:$0xff]
          %v1653 = vld [vmem:[#allocation3 + $0x32] sm:$0xff]
          %v1654 = vld [vmem:[#allocation3 + $0x42] sm:$0xff]
          %v1655 = vld [vmem:[#allocation3 + $0x52] sm:$0xff]
          %v1656 = vld [vmem:[#allocation3 + $0x62] sm:$0xff]
          %v1657 = vld [vmem:[#allocation3 + $0x72] sm:$0xff]
          %v1658 = vld [vmem:[%s1625] sm:$0xff]
          %v1659 = vld [vmem:[%s1625 + $0x10] sm:$0xff]
          %v1660 = vld [vmem:[%s1625 + $0x20] sm:$0xff]
          %v1661 = vld [vmem:[%s1625 + $0x30] sm:$0xff]
          %v1662 = vld [vmem:[%s1625 + $0x40] sm:$0xff]
          %v1663 = vld [vmem:[%s1625 + $0x50] sm:$0xff]
          %v1664 = vld [vmem:[%s1625 + $0x60] sm:$0xff]
          %v1665 = vld [vmem:[%s1625 + $0x70] sm:$0xff]
          %v1666 = vld [vmem:[%s1625 + $0x1] sm:$0xff]
          %v1667 = vld [vmem:[%s1625 + $0x11] sm:$0xff]
          %v1668 = vld [vmem:[%s1625 + $0x21] sm:$0xff]
          %v1669 = vld [vmem:[%s1625 + $0x31] sm:$0xff]
          %v1670 = vld [vmem:[%s1625 + $0x41] sm:$0xff]
          %v1671 = vld [vmem:[%s1625 + $0x51] sm:$0xff]
          %v1672 = vld [vmem:[%s1625 + $0x61] sm:$0xff]
          %v1673 = vld [vmem:[%s1625 + $0x71] sm:$0xff]
          %v1674 = vld [vmem:[%s1625 + $0x2] sm:$0xff]
          %v1675 = vld [vmem:[%s1625 + $0x12] sm:$0xff]
          %v1676 = vld [vmem:[%s1625 + $0x22] sm:$0xff]
          %v1677 = vld [vmem:[%s1625 + $0x32] sm:$0xff]
          %v1678 = vld [vmem:[%s1625 + $0x42] sm:$0xff]
          %v1679 = vld [vmem:[%s1625 + $0x52] sm:$0xff]
          %v1680 = vld [vmem:[%s1625 + $0x62] sm:$0xff]
          %v1681 = vld [vmem:[%s1625 + $0x72] sm:$0xff]
          %s1682 = scalar_lea.vmem [#allocation3], 32
          %v1683 = vld [vmem:[%s1682] sm:$0xff]
          %v1684 = vld [vmem:[%s1682 + $0x10] sm:$0xff]
          %v1685 = vld [vmem:[%s1682 + $0x20] sm:$0xff]
          %v1686 = vld [vmem:[%s1682 + $0x30] sm:$0xff]
          %v1687 = vld [vmem:[%s1682 + $0x40] sm:$0xff]
          %v1688 = vld [vmem:[%s1682 + $0x50] sm:$0xff]
          %v1689 = vld [vmem:[%s1682 + $0x60] sm:$0xff]
          %v1690 = vld [vmem:[%s1682 + $0x70] sm:$0xff]
          %v1691 = vld [vmem:[%s1682 + $0x1] sm:$0xff]
          %v1692 = vld [vmem:[%s1682 + $0x11] sm:$0xff]
          %v1693 = vld [vmem:[%s1682 + $0x21] sm:$0xff]
          %v1694 = vld [vmem:[%s1682 + $0x31] sm:$0xff]
          %v1695 = vld [vmem:[%s1682 + $0x41] sm:$0xff]
          %v1696 = vld [vmem:[%s1682 + $0x51] sm:$0xff]
          %v1697 = vld [vmem:[%s1682 + $0x61] sm:$0xff]
          %v1698 = vld [vmem:[%s1682 + $0x71] sm:$0xff]
          %v1699 = vld [vmem:[%s1682 + $0x2] sm:$0xff]
          %v1700 = vld [vmem:[%s1682 + $0x12] sm:$0xff]
          %v1701 = vld [vmem:[%s1682 + $0x22] sm:$0xff]
          %v1702 = vld [vmem:[%s1682 + $0x32] sm:$0xff]
          %v1703 = vld [vmem:[%s1682 + $0x42] sm:$0xff]
          %v1704 = vld [vmem:[%s1682 + $0x52] sm:$0xff]
          %v1705 = vld [vmem:[%s1682 + $0x62] sm:$0xff]
          %v1706 = vld [vmem:[%s1682 + $0x72] sm:$0xff]
          %v1707 = vpack.c.bf16 %v1635, %v1634
          %v1708 = vpack.c.bf16 %v1643, %v1642
          %v1709 = vpack.c.bf16 %v1651, %v1650
          %v1710 = vpack.c.bf16 %v1659, %v1658
          %v1711 = vpack.c.bf16 %v1667, %v1666
          %v1712 = vpack.c.bf16 %v1675, %v1674
          %v1713 = vpack.c.bf16 %v1684, %v1683
          %v1714 = vpack.c.bf16 %v1692, %v1691
          %v1715 = vpack.c.bf16 %v1700, %v1699
          %v1716 = vpack.c.bf16 %v1637, %v1636
          %v1717 = vpack.c.bf16 %v1645, %v1644
          %v1718 = vpack.c.bf16 %v1653, %v1652
          %v1719 = vpack.c.bf16 %v1661, %v1660
          %v1720 = vpack.c.bf16 %v1669, %v1668
          %v1721 = vpack.c.bf16 %v1677, %v1676
          %v1722 = vpack.c.bf16 %v1686, %v1685
          %v1723 = vpack.c.bf16 %v1694, %v1693
          %v1724 = vpack.c.bf16 %v1702, %v1701
          %v1725 = vpack.c.bf16 %v1639, %v1638
          %v1726 = vpack.c.bf16 %v1647, %v1646
          %v1727 = vpack.c.bf16 %v1655, %v1654
          %v1728 = vpack.c.bf16 %v1663, %v1662
          %v1729 = vpack.c.bf16 %v1671, %v1670
          %v1730 = vpack.c.bf16 %v1679, %v1678
          %v1731 = vpack.c.bf16 %v1688, %v1687
          %v1732 = vpack.c.bf16 %v1696, %v1695
          %v1733 = vpack.c.bf16 %v1704, %v1703
          %v1734 = vpack.c.bf16 %v1641, %v1640
          %v1735 = vpack.c.bf16 %v1649, %v1648
          %v1736 = vpack.c.bf16 %v1657, %v1656
          %v1737 = vpack.c.bf16 %v1665, %v1664
          %v1738 = vpack.c.bf16 %v1673, %v1672
          %v1739 = vpack.c.bf16 %v1681, %v1680
          %v1740 = vpack.c.bf16 %v1690, %v1689
          %v1741 = vpack.c.bf16 %v1698, %v1697
          %v1742 = vpack.c.bf16 %v1706, %v1705
          %v1743 = vld [vmem:[#allocation15] sm:$0xf]
          %v1744 = vld [vmem:[#allocation15 + $0x4] sm:$0xf]
          %v1745 = vld [vmem:[#allocation15 + $0x8] sm:$0xf]
          %v1746 = vld [vmem:[#allocation15 + $0xc] sm:$0xf]
          %v1747 = vld [vmem:[#allocation15 + $0x10] sm:$0xf]
          %v1748 = vld [vmem:[#allocation15 + $0x14] sm:$0xf]
          %v1749 = vld [vmem:[#allocation15 + $0x18] sm:$0xf]
          %v1750 = vld [vmem:[#allocation15 + $0x1c] sm:$0xf]
          %v1751 = vld [vmem:[#allocation15 + $0x20] sm:$0xf]
          %v1752 = vld [vmem:[#allocation15 + $0x24] sm:$0xf]
          %v1753 = vld [vmem:[#allocation15 + $0x28] sm:$0xf]
          %v1754 = vld [vmem:[#allocation15 + $0x2c] sm:$0xf]
          %v1755 = vld [vmem:[#allocation15 + $0x30] sm:$0xf]
          %v1756 = vld [vmem:[#allocation15 + $0x34] sm:$0xf]
          %v1757 = vld [vmem:[#allocation15 + $0x38] sm:$0xf]
          %v1758 = vld [vmem:[#allocation15 + $0x3c] sm:$0xf]
          %v1759 = vld [vmem:[#allocation15 + $0x40] sm:$0xf]
          %v1760 = vld [vmem:[#allocation15 + $0x44] sm:$0xf]
          %v1761 = vld [vmem:[#allocation15 + $0x48] sm:$0xf]
          %v1762 = vld [vmem:[#allocation15 + $0x4c] sm:$0xf]
          %v1763 = vld [vmem:[#allocation15 + $0x50] sm:$0xf]
          %v1764 = vld [vmem:[#allocation15 + $0x54] sm:$0xf]
          %v1765 = vld [vmem:[#allocation15 + $0x58] sm:$0xf]
          %v1766 = vld [vmem:[#allocation15 + $0x5c] sm:$0xf]
          %v1767 = vld [vmem:[#allocation15 + $0x60] sm:$0xf]
          %v1768 = vld [vmem:[#allocation15 + $0x64] sm:$0xf]
          %v1769 = vld [vmem:[#allocation15 + $0x68] sm:$0xf]
          %v1770 = vld [vmem:[#allocation15 + $0x6c] sm:$0xf]
          %v1771 = vld [vmem:[#allocation15 + $0x70] sm:$0xf]
          %v1772 = vld [vmem:[#allocation15 + $0x74] sm:$0xf]
          %v1773 = vld [vmem:[#allocation15 + $0x78] sm:$0xf]
          %v1774 = vld [vmem:[#allocation15 + $0x7c] sm:$0xf]
          %v1775 = vld [vmem:[#allocation15 + $0x80] sm:$0xf]
          %v1776 = vld [vmem:[#allocation15 + $0x84] sm:$0xf]
          %v1777 = vld [vmem:[#allocation15 + $0x88] sm:$0xf]
          %v1778 = vld [vmem:[#allocation15 + $0x8c] sm:$0xf]
          %v1779 = vld [vmem:[#allocation15 + $0x90] sm:$0xf]
          %v1780 = vld [vmem:[#allocation15 + $0x94] sm:$0xf]
          %v1781 = vld [vmem:[#allocation15 + $0x98] sm:$0xf]
          %v1782 = vld [vmem:[#allocation15 + $0x9c] sm:$0xf]
          %v1783 = vld [vmem:[#allocation15 + $0xa0] sm:$0xf]
          %v1784 = vld [vmem:[#allocation15 + $0xa4] sm:$0xf]
          %v1785 = vld [vmem:[#allocation15 + $0xa8] sm:$0xf]
          %v1786 = vld [vmem:[#allocation15 + $0xac] sm:$0xf]
          %v1787 = vld [vmem:[#allocation15 + $0xb0] sm:$0xf]
          %v1788 = vld [vmem:[#allocation15 + $0xb4] sm:$0xf]
          %v1789 = vld [vmem:[#allocation15 + $0xb8] sm:$0xf]
          %v1790 = vld [vmem:[#allocation15 + $0xbc] sm:$0xf]
          %v1791 = vld [vmem:[#allocation15 + $0xc0] sm:$0xf]
          %v1792 = vld [vmem:[#allocation15 + $0xc4] sm:$0xf]
          %v1793 = vld [vmem:[#allocation15 + $0xc8] sm:$0xf]
          %v1794 = vld [vmem:[#allocation15 + $0xcc] sm:$0xf]
          %v1795 = vld [vmem:[#allocation15 + $0xd0] sm:$0xf]
          %v1796 = vld [vmem:[#allocation15 + $0xd4] sm:$0xf]
          %v1797 = vld [vmem:[#allocation15 + $0xd8] sm:$0xf]
          %v1798 = vld [vmem:[#allocation15 + $0xdc] sm:$0xf]
          %v1799 = vld [vmem:[#allocation15 + $0xe0] sm:$0xf]
          %v1800 = vld [vmem:[#allocation15 + $0xe4] sm:$0xf]
          %v1801 = vld [vmem:[#allocation15 + $0xe8] sm:$0xf]
          %v1802 = vld [vmem:[#allocation15 + $0xec] sm:$0xf]
          %v1803 = vld [vmem:[#allocation15 + $0xf0] sm:$0xf]
          %v1804 = vld [vmem:[#allocation15 + $0xf4] sm:$0xf]
          %v1805 = vld [vmem:[#allocation15 + $0xf8] sm:$0xf]
          %v1806 = vld [vmem:[#allocation15 + $0xfc] sm:$0xf]
          %v1807 = vld [vmem:[#allocation15 + $0x100] sm:$0xf]
          %v1808 = vld [vmem:[#allocation15 + $0x104] sm:$0xf]
          %v1809 = vld [vmem:[#allocation15 + $0x108] sm:$0xf]
          %v1810 = vld [vmem:[#allocation15 + $0x10c] sm:$0xf]
          %v1811 = vld [vmem:[#allocation15 + $0x110] sm:$0xf]
          %v1812 = vld [vmem:[#allocation15 + $0x114] sm:$0xf]
          %v1813 = vld [vmem:[#allocation15 + $0x118] sm:$0xf]
          %v1814 = vld [vmem:[#allocation15 + $0x11c] sm:$0xf]
          %v1815 = vld [vmem:[#allocation15 + $0x120] sm:$0xf]
          %v1816 = vld [vmem:[#allocation15 + $0x124] sm:$0xf]
          %v1817 = vld [vmem:[#allocation15 + $0x128] sm:$0xf]
          %v1818 = vld [vmem:[#allocation15 + $0x12c] sm:$0xf]
          %v1819 = vld [vmem:[#allocation15 + $0x130] sm:$0xf]
          %v1820 = vld [vmem:[#allocation15 + $0x134] sm:$0xf]
          %v1821 = vld [vmem:[#allocation15 + $0x138] sm:$0xf]
          %v1822 = vld [vmem:[#allocation15 + $0x13c] sm:$0xf]
          %v1823 = vld [vmem:[#allocation15 + $0x140] sm:$0xf]
          %v1824 = vld [vmem:[#allocation15 + $0x144] sm:$0xf]
          %v1825 = vld [vmem:[#allocation15 + $0x148] sm:$0xf]
          %v1826 = vld [vmem:[#allocation15 + $0x14c] sm:$0xf]
          %v1827 = vld [vmem:[#allocation15 + $0x150] sm:$0xf]
          %v1828 = vld [vmem:[#allocation15 + $0x154] sm:$0xf]
          %v1829 = vld [vmem:[#allocation15 + $0x158] sm:$0xf]
          %v1830 = vld [vmem:[#allocation15 + $0x15c] sm:$0xf]
          %v1831 = vld [vmem:[#allocation15 + $0x160] sm:$0xf]
          %v1832 = vld [vmem:[#allocation15 + $0x164] sm:$0xf]
          %v1833 = vld [vmem:[#allocation15 + $0x168] sm:$0xf]
          %v1834 = vld [vmem:[#allocation15 + $0x16c] sm:$0xf]
          %v1835 = vld [vmem:[#allocation15 + $0x170] sm:$0xf]
          %v1836 = vld [vmem:[#allocation15 + $0x174] sm:$0xf]
          %v1837 = vld [vmem:[#allocation15 + $0x178] sm:$0xf]
          %v1838 = vld [vmem:[#allocation15 + $0x17c] sm:$0xf]
          %v1839 = vld [vmem:[#allocation15 + $0x180] sm:$0xf]
          %v1840 = vld [vmem:[#allocation15 + $0x184] sm:$0xf]
          %v1841 = vld [vmem:[#allocation15 + $0x188] sm:$0xf]
          %v1842 = vld [vmem:[#allocation15 + $0x18c] sm:$0xf]
          %v1843 = vld [vmem:[#allocation15 + $0x190] sm:$0xf]
          %v1844 = vld [vmem:[#allocation15 + $0x194] sm:$0xf]
          %v1845 = vld [vmem:[#allocation15 + $0x198] sm:$0xf]
          %v1846 = vld [vmem:[#allocation15 + $0x19c] sm:$0xf]
          %v1847 = vld [vmem:[#allocation15 + $0x1a0] sm:$0xf]
          %v1848 = vld [vmem:[#allocation15 + $0x1a4] sm:$0xf]
          %v1849 = vld [vmem:[#allocation15 + $0x1a8] sm:$0xf]
          %v1850 = vld [vmem:[#allocation15 + $0x1ac] sm:$0xf]
          %v1851 = vld [vmem:[#allocation15 + $0x1b0] sm:$0xf]
          %v1852 = vld [vmem:[#allocation15 + $0x1b4] sm:$0xf]
          %v1853 = vld [vmem:[#allocation15 + $0x1b8] sm:$0xf]
          %v1854 = vld [vmem:[#allocation15 + $0x1bc] sm:$0xf]
          %v1855 = vld [vmem:[#allocation15 + $0x1c0] sm:$0xf]
          %v1856 = vld [vmem:[#allocation15 + $0x1c4] sm:$0xf]
          %v1857 = vld [vmem:[#allocation15 + $0x1c8] sm:$0xf]
          %v1858 = vld [vmem:[#allocation15 + $0x1cc] sm:$0xf]
          %v1859 = vld [vmem:[#allocation15 + $0x1d0] sm:$0xf]
          %v1860 = vld [vmem:[#allocation15 + $0x1d4] sm:$0xf]
          %v1861 = vld [vmem:[#allocation15 + $0x1d8] sm:$0xf]
          %v1862 = vld [vmem:[#allocation15 + $0x1dc] sm:$0xf]
          %v1863 = vld [vmem:[#allocation15 + $0x1e0] sm:$0xf]
          %v1864 = vld [vmem:[#allocation15 + $0x1e4] sm:$0xf]
          %v1865 = vld [vmem:[#allocation15 + $0x1e8] sm:$0xf]
          %v1866 = vld [vmem:[#allocation15 + $0x1ec] sm:$0xf]
          %v1867 = vld [vmem:[#allocation15 + $0x1f0] sm:$0xf]
          %v1868 = vld [vmem:[#allocation15 + $0x1f4] sm:$0xf]
          %v1869 = vld [vmem:[#allocation15 + $0x1f8] sm:$0xf]
          %v1870 = vld [vmem:[#allocation15 + $0x1fc] sm:$0xf]
          %v1871 = vld [vmem:[#allocation15 + $0x200] sm:$0xf]
          %v1872 = vld [vmem:[#allocation15 + $0x204] sm:$0xf]
          %v1873 = vld [vmem:[#allocation15 + $0x208] sm:$0xf]
          %v1874 = vld [vmem:[#allocation15 + $0x20c] sm:$0xf]
          %v1875 = vld [vmem:[#allocation15 + $0x210] sm:$0xf]
          %v1876 = vld [vmem:[#allocation15 + $0x214] sm:$0xf]
          %v1877 = vld [vmem:[#allocation15 + $0x218] sm:$0xf]
          %v1878 = vld [vmem:[#allocation15 + $0x21c] sm:$0xf]
          %v1879 = vld [vmem:[#allocation15 + $0x220] sm:$0xf]
          %v1880 = vld [vmem:[#allocation15 + $0x224] sm:$0xf]
          %v1881 = vld [vmem:[#allocation15 + $0x228] sm:$0xf]
          %v1882 = vld [vmem:[#allocation15 + $0x22c] sm:$0xf]
          %v1883 = vld [vmem:[#allocation15 + $0x230] sm:$0xf]
          %v1884 = vld [vmem:[#allocation15 + $0x234] sm:$0xf]
          %v1885 = vld [vmem:[#allocation15 + $0x238] sm:$0xf]
          %v1886 = vld [vmem:[#allocation15 + $0x23c] sm:$0xf]
          %v2031 = vunpack.c.l.b16 %v1743
          %v2032 = vunpack.c.l.b16 %v1744
          %v2033 = vunpack.c.l.b16 %v1745
          %v2034 = vunpack.c.l.b16 %v1746
          %v2035 = vunpack.c.l.b16 %v1747
          %v2036 = vunpack.c.l.b16 %v1748
          %v2037 = vunpack.c.l.b16 %v1749
          %v2038 = vunpack.c.l.b16 %v1750
          %v2039 = vunpack.c.l.b16 %v1751
          %v2040 = vunpack.c.l.b16 %v1752
          %v2041 = vunpack.c.l.b16 %v1753
          %v2042 = vunpack.c.l.b16 %v1754
          %v2043 = vunpack.c.l.b16 %v1755
          %v2044 = vunpack.c.l.b16 %v1756
          %v2045 = vunpack.c.l.b16 %v1757
          %v2046 = vunpack.c.l.b16 %v1758
          %v2047 = vunpack.c.l.b16 %v1759
          %v2048 = vunpack.c.l.b16 %v1760
          %v2049 = vunpack.c.l.b16 %v1761
          %v2050 = vunpack.c.l.b16 %v1762
          %v2051 = vunpack.c.l.b16 %v1763
          %v2052 = vunpack.c.l.b16 %v1764
          %v2053 = vunpack.c.l.b16 %v1765
          %v2054 = vunpack.c.l.b16 %v1766
          %v2055 = vunpack.c.l.b16 %v1767
          %v2056 = vunpack.c.l.b16 %v1768
          %v2057 = vunpack.c.l.b16 %v1769
          %v2058 = vunpack.c.l.b16 %v1770
          %v2059 = vunpack.c.l.b16 %v1771
          %v2060 = vunpack.c.l.b16 %v1772
          %v2061 = vunpack.c.l.b16 %v1773
          %v2062 = vunpack.c.l.b16 %v1774
          %v2063 = vunpack.c.l.b16 %v1775
          %v2064 = vunpack.c.l.b16 %v1776
          %v2065 = vunpack.c.l.b16 %v1777
          %v2066 = vunpack.c.l.b16 %v1778
          %v2067 = vunpack.c.l.b16 %v1779
          %v2068 = vunpack.c.l.b16 %v1780
          %v2069 = vunpack.c.l.b16 %v1781
          %v2070 = vunpack.c.l.b16 %v1782
          %v2071 = vunpack.c.l.b16 %v1783
          %v2072 = vunpack.c.l.b16 %v1784
          %v2073 = vunpack.c.l.b16 %v1785
          %v2074 = vunpack.c.l.b16 %v1786
          %v2075 = vunpack.c.l.b16 %v1787
          %v2076 = vunpack.c.l.b16 %v1788
          %v2077 = vunpack.c.l.b16 %v1789
          %v2078 = vunpack.c.l.b16 %v1790
          %v2079 = vunpack.c.l.b16 %v1791
          %v2080 = vunpack.c.l.b16 %v1792
          %v2081 = vunpack.c.l.b16 %v1793
          %v2082 = vunpack.c.l.b16 %v1794
          %v2083 = vunpack.c.l.b16 %v1795
          %v2084 = vunpack.c.l.b16 %v1796
          %v2085 = vunpack.c.l.b16 %v1797
          %v2086 = vunpack.c.l.b16 %v1798
          %v2087 = vunpack.c.l.b16 %v1799
          %v2088 = vunpack.c.l.b16 %v1800
          %v2089 = vunpack.c.l.b16 %v1801
          %v2090 = vunpack.c.l.b16 %v1802
          %v2091 = vunpack.c.l.b16 %v1803
          %v2092 = vunpack.c.l.b16 %v1804
          %v2093 = vunpack.c.l.b16 %v1805
          %v2094 = vunpack.c.l.b16 %v1806
          %v2095 = vunpack.c.l.b16 %v1807
          %v2096 = vunpack.c.l.b16 %v1808
          %v2097 = vunpack.c.l.b16 %v1809
          %v2098 = vunpack.c.l.b16 %v1810
          %v2099 = vunpack.c.l.b16 %v1811
          %v2100 = vunpack.c.l.b16 %v1812
          %v2101 = vunpack.c.l.b16 %v1813
          %v2102 = vunpack.c.l.b16 %v1814
          %v2103 = vunpack.c.l.b16 %v1815
          %v2104 = vunpack.c.l.b16 %v1816
          %v2105 = vunpack.c.l.b16 %v1817
          %v2106 = vunpack.c.l.b16 %v1818
          %v2107 = vunpack.c.l.b16 %v1819
          %v2108 = vunpack.c.l.b16 %v1820
          %v2109 = vunpack.c.l.b16 %v1821
          %v2110 = vunpack.c.l.b16 %v1822
          %v2111 = vunpack.c.l.b16 %v1823
          %v2112 = vunpack.c.l.b16 %v1824
          %v2113 = vunpack.c.l.b16 %v1825
          %v2114 = vunpack.c.l.b16 %v1826
          %v2115 = vunpack.c.l.b16 %v1827
          %v2116 = vunpack.c.l.b16 %v1828
          %v2117 = vunpack.c.l.b16 %v1829
          %v2118 = vunpack.c.l.b16 %v1830
          %v2119 = vunpack.c.l.b16 %v1831
          %v2120 = vunpack.c.l.b16 %v1832
          %v2121 = vunpack.c.l.b16 %v1833
          %v2122 = vunpack.c.l.b16 %v1834
          %v2123 = vunpack.c.l.b16 %v1835
          %v2124 = vunpack.c.l.b16 %v1836
          %v2125 = vunpack.c.l.b16 %v1837
          %v2126 = vunpack.c.l.b16 %v1838
          %v2127 = vunpack.c.l.b16 %v1839
          %v2128 = vunpack.c.l.b16 %v1840
          %v2129 = vunpack.c.l.b16 %v1841
          %v2130 = vunpack.c.l.b16 %v1842
          %v2131 = vunpack.c.l.b16 %v1843
          %v2132 = vunpack.c.l.b16 %v1844
          %v2133 = vunpack.c.l.b16 %v1845
          %v2134 = vunpack.c.l.b16 %v1846
          %v2135 = vunpack.c.l.b16 %v1847
          %v2136 = vunpack.c.l.b16 %v1848
          %v2137 = vunpack.c.l.b16 %v1849
          %v2138 = vunpack.c.l.b16 %v1850
          %v2139 = vunpack.c.l.b16 %v1851
          %v2140 = vunpack.c.l.b16 %v1852
          %v2141 = vunpack.c.l.b16 %v1853
          %v2142 = vunpack.c.l.b16 %v1854
          %v2143 = vunpack.c.l.b16 %v1855
          %v2144 = vunpack.c.l.b16 %v1856
          %v2145 = vunpack.c.l.b16 %v1857
          %v2146 = vunpack.c.l.b16 %v1858
          %v2147 = vunpack.c.l.b16 %v1859
          %v2148 = vunpack.c.l.b16 %v1860
          %v2149 = vunpack.c.l.b16 %v1861
          %v2150 = vunpack.c.l.b16 %v1862
          %v2151 = vunpack.c.l.b16 %v1863
          %v2152 = vunpack.c.l.b16 %v1864
          %v2153 = vunpack.c.l.b16 %v1865
          %v2154 = vunpack.c.l.b16 %v1866
          %v2155 = vunpack.c.l.b16 %v1867
          %v2156 = vunpack.c.l.b16 %v1868
          %v2157 = vunpack.c.l.b16 %v1869
          %v2158 = vunpack.c.l.b16 %v1870
          %v2159 = vunpack.c.l.b16 %v1871
          %v2160 = vunpack.c.l.b16 %v1872
          %v2161 = vunpack.c.l.b16 %v1873
          %v2162 = vunpack.c.l.b16 %v1874
          %v2163 = vunpack.c.l.b16 %v1875
          %v2164 = vunpack.c.l.b16 %v1876
          %v2165 = vunpack.c.l.b16 %v1877
          %v2166 = vunpack.c.l.b16 %v1878
          %v2167 = vunpack.c.l.b16 %v1879
          %v2168 = vunpack.c.l.b16 %v1880
          %v2169 = vunpack.c.l.b16 %v1881
          %v2170 = vunpack.c.l.b16 %v1882
          %v2171 = vunpack.c.l.b16 %v1883
          %v2172 = vunpack.c.l.b16 %v1884
          %v2173 = vunpack.c.l.b16 %v1885
          %v2174 = vunpack.c.l.b16 %v1886
          %v2175 = vpack.c.b16 %v2032, %v2031
          %v2176 = vpack.c.b16 %v2034, %v2033
          %v2177 = vpack.c.b16 %v2036, %v2035
          %v2178 = vpack.c.b16 %v2038, %v2037
          %v2179 = vpack.c.b16 %v2040, %v2039
          %v2180 = vpack.c.b16 %v2042, %v2041
          %v2181 = vpack.c.b16 %v2044, %v2043
          %v2182 = vpack.c.b16 %v2046, %v2045
          %v2183 = vpack.c.b16 %v2048, %v2047
          %v2184 = vpack.c.b16 %v2050, %v2049
          %v2185 = vpack.c.b16 %v2052, %v2051
          %v2186 = vpack.c.b16 %v2054, %v2053
          %v2187 = vpack.c.b16 %v2056, %v2055
          %v2188 = vpack.c.b16 %v2058, %v2057
          %v2189 = vpack.c.b16 %v2060, %v2059
          %v2190 = vpack.c.b16 %v2062, %v2061
          %v2191 = vpack.c.b16 %v2064, %v2063
          %v2192 = vpack.c.b16 %v2066, %v2065
          %v2193 = vpack.c.b16 %v2068, %v2067
          %v2194 = vpack.c.b16 %v2070, %v2069
          %v2195 = vpack.c.b16 %v2072, %v2071
          %v2196 = vpack.c.b16 %v2074, %v2073
          %v2197 = vpack.c.b16 %v2076, %v2075
          %v2198 = vpack.c.b16 %v2078, %v2077
          %v2199 = vpack.c.b16 %v2080, %v2079
          %v2200 = vpack.c.b16 %v2082, %v2081
          %v2201 = vpack.c.b16 %v2084, %v2083
          %v2202 = vpack.c.b16 %v2086, %v2085
          %v2203 = vpack.c.b16 %v2088, %v2087
          %v2204 = vpack.c.b16 %v2090, %v2089
          %v2205 = vpack.c.b16 %v2092, %v2091
          %v2206 = vpack.c.b16 %v2094, %v2093
          %v2207 = vpack.c.b16 %v2096, %v2095
          %v2208 = vpack.c.b16 %v2098, %v2097
          %v2209 = vpack.c.b16 %v2100, %v2099
          %v2210 = vpack.c.b16 %v2102, %v2101
          %v2211 = vpack.c.b16 %v2104, %v2103
          %v2212 = vpack.c.b16 %v2106, %v2105
          %v2213 = vpack.c.b16 %v2108, %v2107
          %v2214 = vpack.c.b16 %v2110, %v2109
          %v2215 = vpack.c.b16 %v2112, %v2111
          %v2216 = vpack.c.b16 %v2114, %v2113
          %v2217 = vpack.c.b16 %v2116, %v2115
          %v2218 = vpack.c.b16 %v2118, %v2117
          %v2219 = vpack.c.b16 %v2120, %v2119
          %v2220 = vpack.c.b16 %v2122, %v2121
          %v2221 = vpack.c.b16 %v2124, %v2123
          %v2222 = vpack.c.b16 %v2126, %v2125
          %v2223 = vpack.c.b16 %v2128, %v2127
          %v2224 = vpack.c.b16 %v2130, %v2129
          %v2225 = vpack.c.b16 %v2132, %v2131
          %v2226 = vpack.c.b16 %v2134, %v2133
          %v2227 = vpack.c.b16 %v2136, %v2135
          %v2228 = vpack.c.b16 %v2138, %v2137
          %v2229 = vpack.c.b16 %v2140, %v2139
          %v2230 = vpack.c.b16 %v2142, %v2141
          %v2231 = vpack.c.b16 %v2144, %v2143
          %v2232 = vpack.c.b16 %v2146, %v2145
          %v2233 = vpack.c.b16 %v2148, %v2147
          %v2234 = vpack.c.b16 %v2150, %v2149
          %v2235 = vpack.c.b16 %v2152, %v2151
          %v2236 = vpack.c.b16 %v2154, %v2153
          %v2237 = vpack.c.b16 %v2156, %v2155
          %v2238 = vpack.c.b16 %v2158, %v2157
          %v2239 = vpack.c.b16 %v2160, %v2159
          %v2240 = vpack.c.b16 %v2162, %v2161
          %v2241 = vpack.c.b16 %v2164, %v2163
          %v2242 = vpack.c.b16 %v2166, %v2165
          %v2243 = vpack.c.b16 %v2168, %v2167
          %v2244 = vpack.c.b16 %v2170, %v2169
          %v2245 = vpack.c.b16 %v2172, %v2171
          %v2246 = vpack.c.b16 %v2174, %v2173
          %2319 = vmatprep.subr.bf16.mxu0 0
          %2320 = vmatpush1.bf16.msra.mxu0 %v2175
          %2321 = vmatprep.subr.bf16.mxu0 0
          %2322 = vmatpush1.bf16.msra.mxu0 %v2176
          %2323 = vmatprep.subr.bf16.mxu0 0
          %2324 = vmatpush1.bf16.msra.mxu0 %v2177
          %2325 = vmatprep.subr.bf16.mxu0 0
          %2326 = vmatpush1.bf16.msra.mxu0 %v2178
          %2327 = vmatprep.subr.bf16.mxu0 0
          %2328 = vmatpush1.bf16.msra.mxu0 %v2179
          %2329 = vmatprep.subr.bf16.mxu0 0
          %2330 = vmatpush1.bf16.msra.mxu0 %v2180
          %2331 = vmatprep.subr.bf16.mxu0 0
          %2332 = vmatpush1.bf16.msra.mxu0 %v2181
          %2333 = vmatprep.subr.bf16.mxu0 0
          %2334 = vmatpush1.bf16.msra.mxu0 %v2182
          %2335 = vmatprep.subr.bf16.mxu0 0
          %2336 = vmatpush1.bf16.msra.mxu0 %v2183
          %2337 = vmatprep.subr.bf16.mxu0 0
          %2338 = vmatpush1.bf16.msra.mxu0 %v2184
          %2339 = vmatprep.subr.bf16.mxu0 0
          %2340 = vmatpush1.bf16.msra.mxu0 %v2185
          %2341 = vmatprep.subr.bf16.mxu0 0
          %2342 = vmatpush1.bf16.msra.mxu0 %v2186
          %2343 = vmatprep.subr.bf16.mxu0 0
          %2344 = vmatpush1.bf16.msra.mxu0 %v2187
          %2345 = vmatprep.subr.bf16.mxu0 0
          %2346 = vmatpush1.bf16.msra.mxu0 %v2188
          %2347 = vmatprep.subr.bf16.mxu0 0
          %2348 = vmatpush1.bf16.msra.mxu0 %v2189
          %2349 = vmatprep.subr.bf16.mxu0 0
          %2350 = vmatpush1.bf16.msra.mxu0 %v2190
          %2351 = vmatprep.mubr.bf16.mxu0 %v1708
          %2352 = vmatmul.mubr.bf16.gmra.mrb[0].mxu0 %v1707
          %v2353 = vpop.f32.mrb[0].mxu0
          %v2354 = vadd.f32 0.0, %v2353
          %v2355 = vpop.f32.mrb[0].mxu0
          %v2356 = vpop.f32.mrb[0].mxu0
          %v2357 = vadd.f32 0.0, %v2356
          %v2358 = vpop.f32.mrb[0].mxu0
          %2359 = vmatprep.mubr.bf16.mxu0 %v1717
          %2360 = vmatmul.mubr.bf16.gmra.mrb[0].mxu0 %v1716
          %v2361 = vpop.f32.mrb[0].mxu0
          %v2362 = vadd.f32 0.0, %v2361
          %v2363 = vpop.f32.mrb[0].mxu0
          %v2364 = vpop.f32.mrb[0].mxu0
          %v2365 = vadd.f32 0.0, %v2364
          %v2366 = vpop.f32.mrb[0].mxu0
          %2367 = vmatprep.mubr.bf16.mxu0 %v1726
          %2368 = vmatmul.mubr.bf16.gmra.mrb[0].mxu0 %v1725
          %v2369 = vpop.f32.mrb[0].mxu0
          %v2370 = vadd.f32 0.0, %v2369
          %v2371 = vpop.f32.mrb[0].mxu0
          %v2372 = vpop.f32.mrb[0].mxu0
          %v2373 = vadd.f32 0.0, %v2372
          %v2374 = vpop.f32.mrb[0].mxu0
          %2375 = vmatprep.mubr.bf16.mxu0 %v1735
          %2376 = vmatmul.mubr.bf16.gmra.mrb[0].mxu0 %v1734
          %v2377 = vpop.f32.mrb[0].mxu0
          %v2378 = vadd.f32 0.0, %v2377
          %v2379 = vpop.f32.mrb[0].mxu0
          %v2380 = vpop.f32.mrb[0].mxu0
          %v2381 = vadd.f32 0.0, %v2380
          %v2382 = vpop.f32.mrb[0].mxu0
          %2383 = vdwg.mxu0
          %2384 = vmatprep.subr.bf16.mxu0 0
          %2385 = vmatpush1.bf16.msra.mxu0 %v2191
          %2386 = vmatprep.subr.bf16.mxu0 0
          %2387 = vmatpush1.bf16.msra.mxu0 %v2192
          %2388 = vmatprep.subr.bf16.mxu0 0
          %2389 = vmatpush1.bf16.msra.mxu0 %v2193
          %2390 = vmatprep.subr.bf16.mxu0 0
          %2391 = vmatpush1.bf16.msra.mxu0 %v2194
          %2392 = vmatprep.subr.bf16.mxu0 0
          %2393 = vmatpush1.bf16.msra.mxu0 %v2195
          %2394 = vmatprep.subr.bf16.mxu0 0
          %2395 = vmatpush1.bf16.msra.mxu0 %v2196
          %2396 = vmatprep.subr.bf16.mxu0 0
          %2397 = vmatpush1.bf16.msra.mxu0 %v2197
          %2398 = vmatprep.subr.bf16.mxu0 0
          %2399 = vmatpush1.bf16.msra.mxu0 %v2198
          %2400 = vmatprep.subr.bf16.mxu0 0
          %2401 = vmatpush1.bf16.msra.mxu0 %v2199
          %2402 = vmatprep.subr.bf16.mxu0 0
          %2403 = vmatpush1.bf16.msra.mxu0 %v2200
          %2404 = vmatprep.subr.bf16.mxu0 0
          %2405 = vmatpush1.bf16.msra.mxu0 %v2201
          %2406 = vmatprep.subr.bf16.mxu0 0
          %2407 = vmatpush1.bf16.msra.mxu0 %v2202
          %2408 = vmatprep.subr.bf16.mxu0 0
          %2409 = vmatpush1.bf16.msra.mxu0 %v2203
          %2410 = vmatprep.subr.bf16.mxu0 0
          %2411 = vmatpush1.bf16.msra.mxu0 %v2204
          %2412 = vmatprep.subr.bf16.mxu0 0
          %2413 = vmatpush1.bf16.msra.mxu0 %v2205
          %2414 = vmatprep.subr.bf16.mxu0 0
          %2415 = vmatpush1.bf16.msra.mxu0 %v2206
          %2416 = vmatprep.mubr.bf16.mxu0 %v1710
          %2417 = vmatmul.mubr.bf16.gmra.mrb[0].mxu0 %v1709
          %v2418 = vpop.f32.mrb[0].mxu0
          %v2419 = vadd.f32 %v2354, %v2418
          %v2420 = vpop.f32.mrb[0].mxu0
          %v2421 = vpop.f32.mrb[0].mxu0
          %v2422 = vadd.f32 %v2357, %v2421
          %v2423 = vpop.f32.mrb[0].mxu0
          %2424 = vmatprep.mubr.bf16.mxu0 %v1719
          %2425 = vmatmul.mubr.bf16.gmra.mrb[0].mxu0 %v1718
          %v2426 = vpop.f32.mrb[0].mxu0
          %v2427 = vadd.f32 %v2362, %v2426
          %v2428 = vpop.f32.mrb[0].mxu0
          %v2429 = vpop.f32.mrb[0].mxu0
          %v2430 = vadd.f32 %v2365, %v2429
          %v2431 = vpop.f32.mrb[0].mxu0
          %2432 = vmatprep.mubr.bf16.mxu0 %v1728
          %2433 = vmatmul.mubr.bf16.gmra.mrb[0].mxu0 %v1727
          %v2434 = vpop.f32.mrb[0].mxu0
          %v2435 = vadd.f32 %v2370, %v2434
          %v2436 = vpop.f32.mrb[0].mxu0
          %v2437 = vpop.f32.mrb[0].mxu0
          %v2438 = vadd.f32 %v2373, %v2437
          %v2439 = vpop.f32.mrb[0].mxu0
          %2440 = vmatprep.mubr.bf16.mxu0 %v1737
          %2441 = vmatmul.mubr.bf16.gmra.mrb[0].mxu0 %v1736
          %v2442 = vpop.f32.mrb[0].mxu0
          %v2443 = vadd.f32 %v2378, %v2442
          %v2444 = vpop.f32.mrb[0].mxu0
          %v2445 = vpop.f32.mrb[0].mxu0
          %v2446 = vadd.f32 %v2381, %v2445
          %v2447 = vpop.f32.mrb[0].mxu0
          %2448 = vdwg.mxu0
          %2449 = vmatprep.subr.bf16.mxu0 0
          %2450 = vmatpush1.bf16.msra.mxu0 %v2207
          %2451 = vmatprep.subr.bf16.mxu0 0
          %2452 = vmatpush1.bf16.msra.mxu0 %v2208
          %2453 = vmatprep.subr.bf16.mxu0 0
          %2454 = vmatpush1.bf16.msra.mxu0 %v2209
          %2455 = vmatprep.subr.bf16.mxu0 0
          %2456 = vmatpush1.bf16.msra.mxu0 %v2210
          %2457 = vmatprep.subr.bf16.mxu0 0
          %2458 = vmatpush1.bf16.msra.mxu0 %v2211
          %2459 = vmatprep.subr.bf16.mxu0 0
          %2460 = vmatpush1.bf16.msra.mxu0 %v2212
          %2461 = vmatprep.subr.bf16.mxu0 0
          %2462 = vmatpush1.bf16.msra.mxu0 %v2213
          %2463 = vmatprep.subr.bf16.mxu0 0
          %2464 = vmatpush1.bf16.msra.mxu0 %v2214
          %2465 = vmatprep.subr.bf16.mxu0 0
          %2466 = vmatpush1.bf16.msra.mxu0 %v2215
          %2467 = vmatprep.subr.bf16.mxu0 0
          %2468 = vmatpush1.bf16.msra.mxu0 %v2216
          %2469 = vmatprep.subr.bf16.mxu0 0
          %2470 = vmatpush1.bf16.msra.mxu0 %v2217
          %2471 = vmatprep.subr.bf16.mxu0 0
          %2472 = vmatpush1.bf16.msra.mxu0 %v2218
          %2473 = vmatprep.subr.bf16.mxu0 0
          %2474 = vmatpush1.bf16.msra.mxu0 %v2219
          %2475 = vmatprep.subr.bf16.mxu0 0
          %2476 = vmatpush1.bf16.msra.mxu0 %v2220
          %2477 = vmatprep.subr.bf16.mxu0 0
          %2478 = vmatpush1.bf16.msra.mxu0 %v2221
          %2479 = vmatprep.subr.bf16.mxu0 0
          %2480 = vmatpush1.bf16.msra.mxu0 %v2222
          %2481 = vmatprep.mubr.bf16.mxu0 %v1712
          %2482 = vmatmul.mubr.bf16.gmra.mrb[0].mxu0 %v1711
          %v2483 = vpop.f32.mrb[0].mxu0
          %v2484 = vadd.f32 %v2419, %v2483
          %v2485 = vpop.f32.mrb[0].mxu0
          %v2486 = vpop.f32.mrb[0].mxu0
          %v2487 = vadd.f32 %v2422, %v2486
          %v2488 = vpop.f32.mrb[0].mxu0
          %2489 = vmatprep.mubr.bf16.mxu0 %v1721
          %2490 = vmatmul.mubr.bf16.gmra.mrb[0].mxu0 %v1720
          %v2491 = vpop.f32.mrb[0].mxu0
          %v2492 = vadd.f32 %v2427, %v2491
          %v2493 = vpop.f32.mrb[0].mxu0
          %v2494 = vpop.f32.mrb[0].mxu0
          %v2495 = vadd.f32 %v2430, %v2494
          %v2496 = vpop.f32.mrb[0].mxu0
          %2497 = vmatprep.mubr.bf16.mxu0 %v1730
          %2498 = vmatmul.mubr.bf16.gmra.mrb[0].mxu0 %v1729
          %v2499 = vpop.f32.mrb[0].mxu0
          %v2500 = vadd.f32 %v2435, %v2499
          %v2501 = vpop.f32.mrb[0].mxu0
          %v2502 = vpop.f32.mrb[0].mxu0
          %v2503 = vadd.f32 %v2438, %v2502
          %v2504 = vpop.f32.mrb[0].mxu0
          %2505 = vmatprep.mubr.bf16.mxu0 %v1739
          %2506 = vmatmul.mubr.bf16.gmra.mrb[0].mxu0 %v1738
          %v2507 = vpop.f32.mrb[0].mxu0
          %v2508 = vadd.f32 %v2443, %v2507
          %v2509 = vpop.f32.mrb[0].mxu0
          %v2510 = vpop.f32.mrb[0].mxu0
          %v2511 = vadd.f32 %v2446, %v2510
          %v2512 = vpop.f32.mrb[0].mxu0
          %2513 = vdwg.mxu0
          %2514 = vmatprep.subr.bf16.mxu0 0
          %2515 = vmatpush1.bf16.msra.mxu0 %v2223
          %2516 = vmatprep.subr.bf16.mxu0 0
          %2517 = vmatpush1.bf16.msra.mxu0 %v2224
          %2518 = vmatprep.subr.bf16.mxu0 0
          %2519 = vmatpush1.bf16.msra.mxu0 %v2225
          %2520 = vmatprep.subr.bf16.mxu0 0
          %2521 = vmatpush1.bf16.msra.mxu0 %v2226
          %2522 = vmatprep.subr.bf16.mxu0 0
          %2523 = vmatpush1.bf16.msra.mxu0 %v2227
          %2524 = vmatprep.subr.bf16.mxu0 0
          %2525 = vmatpush1.bf16.msra.mxu0 %v2228
          %2526 = vmatprep.subr.bf16.mxu0 0
          %2527 = vmatpush1.bf16.msra.mxu0 %v2229
          %2528 = vmatprep.subr.bf16.mxu0 0
          %2529 = vmatpush1.bf16.msra.mxu0 %v2230
          %2530 = vmatprep.subr.bf16.mxu0 0
          %2531 = vmatpush1.bf16.msra.mxu0 %v2231
          %2532 = vmatprep.subr.bf16.mxu0 0
          %2533 = vmatpush1.bf16.msra.mxu0 %v2232
          %2534 = vmatprep.subr.bf16.mxu0 0
          %2535 = vmatpush1.bf16.msra.mxu0 %v2233
          %2536 = vmatprep.subr.bf16.mxu0 0
          %2537 = vmatpush1.bf16.msra.mxu0 %v2234
          %2538 = vmatprep.subr.bf16.mxu0 0
          %2539 = vmatpush1.bf16.msra.mxu0 %v2235
          %2540 = vmatprep.subr.bf16.mxu0 0
          %2541 = vmatpush1.bf16.msra.mxu0 %v2236
          %2542 = vmatprep.subr.bf16.mxu0 0
          %2543 = vmatpush1.bf16.msra.mxu0 %v2237
          %2544 = vmatprep.subr.bf16.mxu0 0
          %2545 = vmatpush1.bf16.msra.mxu0 %v2238
          %2546 = vmatprep.mubr.bf16.mxu0 %v1714
          %2547 = vmatmul.mubr.bf16.gmra.mrb[0].mxu0 %v1713
          %v2548 = vpop.f32.mrb[0].mxu0
          %v2549 = vadd.f32 %v2484, %v2548
          %v2550 = vpop.f32.mrb[0].mxu0
          %v2551 = vpop.f32.mrb[0].mxu0
          %v2552 = vadd.f32 %v2487, %v2551
          %v2553 = vpop.f32.mrb[0].mxu0
          %2554 = vmatprep.mubr.bf16.mxu0 %v1723
          %2555 = vmatmul.mubr.bf16.gmra.mrb[0].mxu0 %v1722
          %v2556 = vpop.f32.mrb[0].mxu0
          %v2557 = vadd.f32 %v2492, %v2556
          %v2558 = vpop.f32.mrb[0].mxu0
          %v2559 = vpop.f32.mrb[0].mxu0
          %v2560 = vadd.f32 %v2495, %v2559
          %v2561 = vpop.f32.mrb[0].mxu0
          %2562 = vmatprep.mubr.bf16.mxu0 %v1732
          %2563 = vmatmul.mubr.bf16.gmra.mrb[0].mxu0 %v1731
          %v2564 = vpop.f32.mrb[0].mxu0
          %v2565 = vadd.f32 %v2500, %v2564
          %v2566 = vpop.f32.mrb[0].mxu0
          %v2567 = vpop.f32.mrb[0].mxu0
          %v2568 = vadd.f32 %v2503, %v2567
          %v2569 = vpop.f32.mrb[0].mxu0
          %2570 = vmatprep.mubr.bf16.mxu0 %v1741
          %2571 = vmatmul.mubr.bf16.gmra.mrb[0].mxu0 %v1740
          %v2572 = vpop.f32.mrb[0].mxu0
          %v2573 = vadd.f32 %v2508, %v2572
          %v2574 = vpop.f32.mrb[0].mxu0
          %v2575 = vpop.f32.mrb[0].mxu0
          %v2576 = vadd.f32 %v2511, %v2575
          %v2577 = vpop.f32.mrb[0].mxu0
          %2578 = vdwg.mxu0
          %2579 = vmatprep.subr.bf16.mxu0 0
          %2580 = vmatpush1.bf16.msra.mxu0 %v2239
          %2581 = vmatprep.subr.bf16.mxu0 0
          %2582 = vmatpush1.bf16.msra.mxu0 %v2240
          %2583 = vmatprep.subr.bf16.mxu0 0
          %2584 = vmatpush1.bf16.msra.mxu0 %v2241
          %2585 = vmatprep.subr.bf16.mxu0 0
          %2586 = vmatpush1.bf16.msra.mxu0 %v2242
          %2587 = vmatprep.subr.bf16.mxu0 0
          %2588 = vmatpush1.bf16.msra.mxu0 %v2243
          %2589 = vmatprep.subr.bf16.mxu0 0
          %2590 = vmatpush1.bf16.msra.mxu0 %v2244
          %2591 = vmatprep.subr.bf16.mxu0 0
          %2592 = vmatpush1.bf16.msra.mxu0 %v2245
          %2593 = vmatprep.subr.bf16.mxu0 0
          %2594 = vmatpush1.bf16.msra.mxu0 %v2246
          %2595 = vmatprep.subr.bf16.mxu0 0
          %2596 = vmatpush1.bf16.msra.mxu0 0
          %2597 = vmatprep.subr.bf16.mxu0 0
          %2598 = vmatpush1.bf16.msra.mxu0 0
          %2599 = vmatprep.subr.bf16.mxu0 0
          %2600 = vmatpush1.bf16.msra.mxu0 0
          %2601 = vmatprep.subr.bf16.mxu0 0
          %2602 = vmatpush1.bf16.msra.mxu0 0
          %2603 = vmatprep.subr.bf16.mxu0 0
          %2604 = vmatpush1.bf16.msra.mxu0 0
          %2605 = vmatprep.subr.bf16.mxu0 0
          %2606 = vmatpush1.bf16.msra.mxu0 0
          %2607 = vmatprep.subr.bf16.mxu0 0
          %2608 = vmatpush1.bf16.msra.mxu0 0
          %2609 = vmatprep.subr.bf16.mxu0 0
          %2610 = vmatpush1.bf16.msra.mxu0 0
          %2611 = vmatprep.mubr.bf16.mxu0 0
          %2612 = vmatmul.mubr.bf16.gmra.mrb[0].mxu0 %v1715
          %v2613 = vpop.f32.mrb[0].mxu0
          %v2614 = vadd.f32 %v2549, %v2613
          %v2615 = vpop.f32.mrb[0].mxu0
          %v2616 = vpop.f32.mrb[0].mxu0
          %v2617 = vadd.f32 %v2552, %v2616
          %v2618 = vpop.f32.mrb[0].mxu0
          %2619 = vmatprep.mubr.bf16.mxu0 0
          %2620 = vmatmul.mubr.bf16.gmra.mrb[0].mxu0 %v1724
          %v2621 = vpop.f32.mrb[0].mxu0
          %v2622 = vadd.f32 %v2557, %v2621
          %v2623 = vpop.f32.mrb[0].mxu0
          %v2624 = vpop.f32.mrb[0].mxu0
          %v2625 = vadd.f32 %v2560, %v2624
          %v2626 = vpop.f32.mrb[0].mxu0
          %2627 = vmatprep.mubr.bf16.mxu0 0
          %2628 = vmatmul.mubr.bf16.gmra.mrb[0].mxu0 %v1733
          %v2629 = vpop.f32.mrb[0].mxu0
          %v2630 = vadd.f32 %v2565, %v2629
          %v2631 = vpop.f32.mrb[0].mxu0
          %v2632 = vpop.f32.mrb[0].mxu0
          %v2633 = vadd.f32 %v2568, %v2632
          %v2634 = vpop.f32.mrb[0].mxu0
          %2635 = vmatprep.mubr.bf16.mxu0 0
          %2636 = vmatmul.mubr.bf16.gmra.mrb[0].mxu0 %v1742
          %v2637 = vpop.f32.mrb[0].mxu0
          %v2638 = vadd.f32 %v2573, %v2637
          %v2639 = vpop.f32.mrb[0].mxu0
          %v2640 = vpop.f32.mrb[0].mxu0
          %v2641 = vadd.f32 %v2576, %v2640
          %v2642 = vpop.f32.mrb[0].mxu0
          %2643 = vdwg.mxu0
          %s2644 = scalar_lea.vmem [#allocation5], %s1579
          %2645 = vst [vmem:[%s2644] sm:$0xff] %v2614
          %2646 = vst [vmem:[%s2644 + $0x8] sm:$0xff] %v2617
          %2647 = vst [vmem:[%s2644 + $0x10] sm:$0xff] %v2622
          %2648 = vst [vmem:[%s2644 + $0x18] sm:$0xff] %v2625
          %2649 = vst [vmem:[%s2644 + $0x20] sm:$0xff] %v2630
          %2650 = vst [vmem:[%s2644 + $0x28] sm:$0xff] %v2633
          %2651 = vst [vmem:[%s2644 + $0x30] sm:$0xff] %v2638
          %2652 = vst [vmem:[%s2644 + $0x38] sm:$0xff] %v2641
          %v2653 = vld [vmem:[#allocation8] sm:$0x1]
          %v2654 = vadd.f32 %v2614, %v2617
          %v2655 = vadd.f32 %v2654, %v2622
          %v2656 = vadd.f32 %v2655, %v2625
          %v2657 = vadd.f32 %v2656, %v2630
          %v2658 = vadd.f32 %v2657, %v2633
          %v2659 = vadd.f32 %v2658, %v2638
          %v2660 = vadd.f32 %v2659, %v2641
          %v2661 = vrot.slane %v2660, 4
          %v2662 = vadd.f32 %v2660, %v2661
          %v2663 = vrot.slane %v2662, 2
          %v2664 = vadd.f32 %v2662, %v2663
          %v2665 = vrot.slane %v2664, 1
          %v2666 = vadd.f32 %v2664, %v2665
          %v2667 = vadd.f32 %v2653, %v2666
          %2668 = vst [vmem:[#allocation8] sm:$0x1] %v2667
          %v2669 = vld [vmem:[#allocation9] sm:$0x1]
          %v2670 = vmul.f32 %v2614, %v2614
          %v2671 = vmul.f32 %v2617, %v2617
          %v2672 = vmul.f32 %v2622, %v2622
          %v2673 = vmul.f32 %v2625, %v2625
          %v2674 = vmul.f32 %v2630, %v2630
          %v2675 = vmul.f32 %v2633, %v2633
          %v2676 = vmul.f32 %v2638, %v2638
          %v2677 = vmul.f32 %v2641, %v2641
          %v2678 = vadd.f32 %v2670, %v2671
          %v2679 = vadd.f32 %v2678, %v2672
          %v2680 = vadd.f32 %v2679, %v2673
          %v2681 = vadd.f32 %v2680, %v2674
          %v2682 = vadd.f32 %v2681, %v2675
          %v2683 = vadd.f32 %v2682, %v2676
          %v2684 = vadd.f32 %v2683, %v2677
          %v2685 = vrot.slane %v2684, 4
          %v2686 = vadd.f32 %v2684, %v2685
          %v2687 = vrot.slane %v2686, 2
          %v2688 = vadd.f32 %v2686, %v2687
          %v2689 = vrot.slane %v2688, 1
          %v2690 = vadd.f32 %v2688, %v2689
          %v2691 = vadd.f32 %v2669, %v2690
          %2692 = vst [vmem:[#allocation9] sm:$0x1] %v2691
        $region72: #{tpu_custom_call.1} parent=47 // pred_fallthru
          _
        %p2693 = scmp.eq.s32.totalorder %s29, 2
        // Predicated region
        $region73: #{tpu_custom_call.1} parent=47 // pred_check
          %p2694 = pneg %p2693
        $region74: #{tpu_custom_call.1} parent=47 // pred_check_branch
          %2696 = sbr.rel (%p2694) target = $region76
        $region75: #{tpu_custom_call.1} parent=47 // pred_region
          %v2697 = vld [vmem:[#allocation8] sm:$0x1]
          %v2698 = vmul.f32 %v2697, 0.0078125
          %v2699 = vld [vmem:[#allocation9] sm:$0x1]
          %v2700 = vmul.f32 %v2699, 0.0078125
          %v2701 = vmul.f32 %v2698, %v2698
          %v2702 = vsub.f32 %v2700, %v2701
          %v2703 = vld [vmem:[%s5] sm:$0x1]
          %v2704 = vadd.f32 %v2702, 1e-05
          %v2705 = vrsqrt.pop %v2704
          %v2706 = vmul.f32 %v2703, %v2705
          %v2707 = vld [vmem:[%s6] sm:$0x1]
          %v2708 = vmul.f32 %v2706, %v2698
          %v2709 = vsub.f32 %v2707, %v2708
          %s2710 = smul.u32 %s30, 64
          %s2711 = scalar_lea.vmem [#allocation5], %s2710
          %v2712 = vld [vmem:[%s2711] sm:$0xff]
          %v2713 = vld [vmem:[%s2711 + $0x8] sm:$0xff]
          %v2714 = vld [vmem:[%s2711 + $0x10] sm:$0xff]
          %v2715 = vld [vmem:[%s2711 + $0x18] sm:$0xff]
          %v2716 = vld [vmem:[%s2711 + $0x20] sm:$0xff]
          %v2717 = vld [vmem:[%s2711 + $0x28] sm:$0xff]
          %v2718 = vld [vmem:[%s2711 + $0x30] sm:$0xff]
          %v2719 = vld [vmem:[%s2711 + $0x38] sm:$0xff]
          %v2721 = vlaneseq
          %v2722 = vshrl.u32 %v2721, 7
          %v2723 = vsub.s32 0, %v2722
          %v2724 = vrot.slane %v2706, %v2723
          %v2726 = vmul.f32 %v2712, %v2724
          %v2727 = vmul.f32 %v2713, %v2724
          %v2728 = vmul.f32 %v2714, %v2724
          %v2729 = vmul.f32 %v2715, %v2724
          %v2730 = vmul.f32 %v2716, %v2724
          %v2731 = vmul.f32 %v2717, %v2724
          %v2732 = vmul.f32 %v2718, %v2724
          %v2733 = vmul.f32 %v2719, %v2724
          %v2735 = vlaneseq
          %v2736 = vshrl.u32 %v2735, 7
          %v2737 = vsub.s32 0, %v2736
          %v2738 = vrot.slane %v2709, %v2737
          %v2740 = vadd.f32 %v2726, %v2738
          %v2741 = vadd.f32 %v2727, %v2738
          %v2742 = vadd.f32 %v2728, %v2738
          %v2743 = vadd.f32 %v2729, %v2738
          %v2744 = vadd.f32 %v2730, %v2738
          %v2745 = vadd.f32 %v2731, %v2738
          %v2746 = vadd.f32 %v2732, %v2738
          %v2747 = vadd.f32 %v2733, %v2738
          %v2748 = vmax.f32 %v2740, 0.0
          %v2749 = vmax.f32 %v2741, 0.0
          %v2750 = vmax.f32 %v2742, 0.0
          %v2751 = vmax.f32 %v2743, 0.0
          %v2752 = vmax.f32 %v2744, 0.0
          %v2753 = vmax.f32 %v2745, 0.0
          %v2754 = vmax.f32 %v2746, 0.0
          %v2755 = vmax.f32 %v2747, 0.0
          %2756 = vst [vmem:[%s347] sm:$0xff] %v2748
          %2757 = vst [vmem:[%s347 + $0x8] sm:$0xff] %v2749
          %2758 = vst [vmem:[%s347 + $0x10] sm:$0xff] %v2750
          %2759 = vst [vmem:[%s347 + $0x18] sm:$0xff] %v2751
          %2760 = vst [vmem:[%s347 + $0x20] sm:$0xff] %v2752
          %2761 = vst [vmem:[%s347 + $0x28] sm:$0xff] %v2753
          %2762 = vst [vmem:[%s347 + $0x30] sm:$0xff] %v2754
          %2763 = vst [vmem:[%s347 + $0x38] sm:$0xff] %v2755
        $region76: #{tpu_custom_call.1} parent=47 // pred_fallthru
          _
        %s2764 = sand.u32 %s205, 1
        %s2765 = scalar_lea.sflag [#allocation12], %s2764
        %s2766 = sand.u32 %s205, 1
        %s2767 = smul.addr %s2766, 64
        %s2768 = scalar_lea.vmem [#allocation16], %s2767
        // Predicated region
        $region77: #{tpu_custom_call.1} parent=47 // pred_check
          %p2769 = pneg %p215
        $region78: #{tpu_custom_call.1} parent=47 // pred_check_branch
          %2771 = sbr.rel (%p2769) target = $region80
        $region79: #{tpu_custom_call.1} parent=47 // pred_region
          %p2772 = scmp.eq.s32.totalorder %s29, 2
          %s2773 = scalar_select %p2772, %s30, 0
          %s2775 = ssub.s32 1024, 1024
          %2776 = vsyncadd %s2765, %s2775
          %s2777 = smul.addr %s2773, 8
          %s2778 = smul.addr %s2777, 128
          %s2779 = scalar_lea.hbm %s7, %s2778
          %s2780 = sshll.u32 %s2768, 4
          %s2781 = int_to_ptr.vmem [resolvable:$true] %s2780
          %2786 = dma.vmem_to_hbm [thread:$0]  %s2781, 1024, %s2779, %s2765, 128, 128, 8
        $region80: #{tpu_custom_call.1} parent=47 // pred_fallthru
          _
      $region48: #{tpu_custom_call.1} parent=5 // pred_fallthru
        _
      %p2787 = scmp.le.s32.totalorder 2, %s20
      // Predicated region
      $region81: #{tpu_custom_call.1} parent=5 // pred_check
        %p2788 = pneg %p2787
      $region82: #{tpu_custom_call.1} parent=5 // pred_check_branch
        %2790 = sbr.rel (%p2788) target = $region84
      $region83: #{tpu_custom_call.1} parent=5 // pred_region
        %s2791 = ssub.s32 %s20, 2
        // Predicated region
        $region85: #{tpu_custom_call.1} parent=83 // pred_check
          %p2792 = pneg %p221
        $region86: #{tpu_custom_call.1} parent=83 // pred_check_branch
          %2794 = sbr.rel (%p2792) target = $region88
        $region87: #{tpu_custom_call.1} parent=83 // pred_region
          %s2795 = sand.u32 %s206, 1
          %s2796 = scalar_lea.sflag [#allocation12], %s2795
          %s2797 = sand.u32 %s206, 1
          %s2798 = smul.addr %s2797, 64
          %s2799 = scalar_lea.vmem [#allocation16], %s2798
          %2800 = dma.done %s2796, 1024
        $region88: #{tpu_custom_call.1} parent=83 // pred_fallthru
          _
      $region84: #{tpu_custom_call.1} parent=5 // pred_fallthru
        _
    $region6: #{tpu_custom_call.1} parent=1 // loop_footer
      %s24 = sadd.s32 1, %s20
    $region7: #{tpu_custom_call.1} parent=1 // loop_footer_branch
      %19 = sbr.rel target = $region3
    $region8: #{tpu_custom_call.1} parent=1 // loop_exit
      _
    %2801 = vsyncpa [#allocation11], 1
    %s2802 = scalar_lea.sflag [#allocation11], 1
    %2803 = vsyncpa %s2802, 1
    %2804 = vsyncpa [#allocation14], 1
    %2805 = vsyncpa [#allocation12], 1
    %s2806 = scalar_lea.sflag [#allocation12], 1
    %2807 = vsyncpa %s2806, 1

</llo_original>
